<compile_context>
chip_gen: v7x
topology: tpu7x:2x2x1
jax: 0.10.0
libtpu: 0.0.40
codegen_flags: <defaults>
</compile_context>

<pallas_src>
import numpy as np
import jax
import jax.numpy as jnp
from jax.experimental import pallas as pl
from jax.experimental.pallas import tpu as pltpu


# --------------------------------------------------------------------------
# Parameter init (PyTorch layouts / PyTorch-style uniform init)
# --------------------------------------------------------------------------

def _init_conv(key, cout, cin, k):
    kw, kb = jax.random.split(key)
    std = 1.0 / (cin * k) ** 0.5
    w = jax.random.uniform(kw, (cout, cin, k), jnp.float32, -std, std)
    b = jax.random.uniform(kb, (cout,), jnp.float32, -std, std)
    return {"w": w, "b": b}


def _init_convT(key, cin, cout, k):
    kw, kb = jax.random.split(key)
    std = 1.0 / (cin * k) ** 0.5
    w = jax.random.uniform(kw, (cin, cout, k), jnp.float32, -std, std)
    b = jax.random.uniform(kb, (cout,), jnp.float32, -std, std)
    return {"w": w, "b": b}


def init_decoder1d(key, out_channels, hidden_channels, num_res_blocks,
                   res_channels, embedding_dim, upsample_factor=2,
                   num_upsample_layers_top=2):
    assert upsample_factor == 2, "kernel implements ks=4, stride=2, padding=1"
    keys = iter(jax.random.split(key, 64))

    def init_res():
        return {
            "conv1": _init_conv(next(keys), res_channels, hidden_channels, 3),
            "conv2": _init_conv(next(keys), hidden_channels, res_channels, 1),
        }

    params = {}
    params["t_conv0"] = _init_conv(next(keys), hidden_channels, embedding_dim, 3)
    params["t_res"] = [init_res() for _ in range(num_res_blocks)]
    params["t_up"] = [
        _init_convT(next(keys), hidden_channels, hidden_channels, 2 * upsample_factor)
        for _ in range(num_upsample_layers_top)
    ]
    params["m_conv0"] = _init_conv(next(keys), hidden_channels, embedding_dim, 3)
    params["m_res"] = [init_res() for _ in range(num_res_blocks)]
    cin_b = embedding_dim + 2 * hidden_channels
    params["b_conv0"] = _init_conv(next(keys), hidden_channels, cin_b, 3)
    params["b_res"] = [init_res() for _ in range(num_res_blocks)]
    params["b_up1"] = _init_convT(next(keys), hidden_channels, hidden_channels // 2,
                                  2 * upsample_factor)
    params["b_up2"] = _init_convT(next(keys), hidden_channels // 2, out_channels,
                                  2 * upsample_factor)
    return params


# --------------------------------------------------------------------------
# One-time weight packing (hoisted out of the forward pass).
# Internal activation layout is (channels, positions); every conv becomes a
# single (Cout, K) @ (K, positions) MXU matmul.
# --------------------------------------------------------------------------

def pack_decoder_params(params):
    f32 = jnp.float32

    def conv3(p):        # torch (Cout, Cin, 3) -> (Cout, 3*Cin), taps [m-1, m, m+1]
        w, b = p["w"], p["b"]
        wp = jnp.concatenate([w[:, :, 0], w[:, :, 1], w[:, :, 2]], axis=1)
        return (wp.astype(f32), b.reshape(-1, 1).astype(f32))

    def conv1(p):        # torch (Cout, Cin, 1) -> (Cout, Cin)
        return (p["w"][:, :, 0].astype(f32), p["b"].reshape(-1, 1).astype(f32))

    def convT(p):
        # torch (Cin, Cout, 4); kernel=4, stride=2, padding=1
        #   y[2m]   = w3^T x[m-1] + w1^T x[m]
        #   y[2m+1] = w2^T x[m]   + w0^T x[m+1]
        # Fused into one matmul against the 3-tap window [x_prev; x; x_next]:
        #   W_fused = [[w3^T, w1^T, 0], [0, w2^T, w0^T]]  of shape (2*Cout, 3*Cin)
        w, b = p["w"], p["b"]
        cin, cout = w.shape[0], w.shape[1]
        z = jnp.zeros((cout, cin), f32)
        w_even = jnp.concatenate([w[:, :, 3].T, w[:, :, 1].T, z], axis=1)
        w_odd = jnp.concatenate([z, w[:, :, 2].T, w[:, :, 0].T], axis=1)
        wf = jnp.concatenate([w_even, w_odd], axis=0).astype(f32)       # (2Cout, 3Cin)
        bf = jnp.concatenate([b, b], axis=0).reshape(-1, 1).astype(f32)  # (2Cout, 1)
        return (wf, bf)

    def res(p):
        return conv3(p["conv1"]) + conv1(p["conv2"])

    return {
        "t_conv0": conv3(params["t_conv0"]),
        "t_res": [res(p) for p in params["t_res"]],
        "t_up": [convT(p) for p in params["t_up"]],
        "m_conv0": conv3(params["m_conv0"]),
        "m_res": [res(p) for p in params["m_res"]],
        "b_conv0": conv3(params["b_conv0"]),
        "b_res": [res(p) for p in params["b_res"]],
        "b_up1": convT(params["b_up1"]),
        "b_up2": convT(params["b_up2"]),
    }


# --------------------------------------------------------------------------
# Static trace-time constants (numpy -> device once per distinct shape).
# --------------------------------------------------------------------------

def _interleave_matrix(R):
    # s = [even | odd] (lane concat, width 2R); y = s @ Q interleaves columns:
    # y[:, 2i] = even[:, i], y[:, 2i+1] = odd[:, i]   (exact, rides the MXU).
    Q = np.zeros((2 * R, 2 * R), np.float32)
    i = np.arange(R)
    Q[i, 2 * i] = 1.0
    Q[R + i, 2 * i + 1] = 1.0
    return jnp.asarray(Q)


def _nearest_matrix(N, L, target):
    # F.interpolate(mode='nearest') on batch-folded columns as y = x @ S.
    if L == target:
        return None
    S = np.zeros((N * L, N * target), np.float32)
    j = np.arange(target)
    src = (j * L) // target
    for b in range(N):
        S[b * L + src, b * target + j] = 1.0
    return jnp.asarray(S)


def _boundary_masks(N, L):
    # keep_prev[j] = 0 at the first position of each example (zero "same" pad)
    # keep_next[j] = 0 at the last  position of each example
    pos = np.arange(N * L) % L
    keep_prev = (pos != 0).astype(np.float32).reshape(1, -1)
    keep_next = (pos != L - 1).astype(np.float32).reshape(1, -1)
    return (jnp.asarray(keep_prev), jnp.asarray(keep_next))


# --------------------------------------------------------------------------
# Fused forward
# --------------------------------------------------------------------------

def decoder1d_forward(packed, z_q_b, z_q_m, z_q_t):
    """Inputs / output in PyTorch NCL layout: (N, C, L)."""
    N = int(z_q_b.shape[0])
    L_b = int(z_q_b.shape[2])
    L_m = int(z_q_m.shape[2])
    L_t = int(z_q_t.shape[2])
    n_up_t = len(packed["t_up"])
    out_channels = int(packed["b_up2"][0].shape[0]) // 2
    L_out = 4 * L_b

    # ---- trace-time constants ------------------------------------------
    perm_t, lt = [], L_t
    for _ in range(n_up_t):
        perm_t.append(_interleave_matrix(N * lt))
        lt *= 2
    shift_lens = {L_m, L_b, 2 * L_b}
    ll = L_t
    for _ in range(max(n_up_t, 1)):
        shift_lens.add(ll)
        ll *= 2
    shift_lens.add(L_t)
    consts = {
        "perm_t": perm_t,
        "perm_b1": _interleave_matrix(N * L_b),
        "perm_b2": _interleave_matrix(N * 2 * L_b),
        "interp_t": _nearest_matrix(N, lt, L_b),
        "interp_m": _nearest_matrix(N, L_m, L_b),
        "masks": {l: _boundary_masks(N, l) for l in sorted(shift_lens)},
    }

    # ---- fold batch into lanes OUTSIDE the kernel (tiny XLA transposes) --
    def to_cr(z):                       # (N, C, L) -> (C, N*L)
        n, c, l = z.shape
        return jnp.transpose(z, (1, 0, 2)).reshape(c, n * l)

    zb, zm, zt = to_cr(z_q_b), to_cr(z_q_m), to_cr(z_q_t)

    operands = {"w": packed, "c": consts}
    flat, treedef = jax.tree_util.tree_flatten(operands)

    def kernel(*refs):
        zb_ref, zm_ref, zt_ref = refs[:3]
        o_ref = refs[-1]
        # Unflatten the tree of *Refs*; each weight/constant is read with
        # ref[...] at its point of use (keeps vreg live ranges short).
        ops = jax.tree_util.tree_unflatten(treedef, list(refs[3:-1]))
        W, C = ops["w"], ops["c"]
        masks = C["masks"]

        def mm(a, b):
            return jnp.dot(a, b, preferred_element_type=jnp.float32)

        def window3(x, L):
            # 3-tap window [x_prev; x; x_next] with zero "same" padding at the
            # per-example boundaries: XLU roll + precomputed lane masks.
            R = x.shape[1]
            kp_ref, kn_ref = masks[L]
            xp = pltpu.roll(x, 1, 1) * kp_ref[...]        # x[:, j-1], 0 at j%L==0
            xn = pltpu.roll(x, R - 1, 1) * kn_ref[...]    # x[:, j+1], 0 at j%L==L-1
            return jnp.concatenate([xp, x, xn], axis=0)

        def conv3(x, L, wb):
            w_ref, b_ref = wb
            return mm(w_ref[...], window3(x, L)) + b_ref[...]

        def resblock(x, L, blk):
            w1, b1, w2, b2 = blk       # identity skip (in==out inside Decoder1D)
            h = jnp.maximum(conv3(jnp.maximum(x, 0.0), L, (w1, b1)), 0.0)
            h = mm(w2[...], h) + b2[...]
            return x + h

        def conv_transpose(x, L, wt, perm_ref, relu_out):
            # One fused (2*Cout, 3*Cin) matmul produces even rows (top half)
            # and odd rows (bottom half); interleave columns via 0/1 matmul.
            wf_ref, bf_ref = wt
            cout = wf_ref.shape[0] // 2
            h = mm(wf_ref[...], window3(x, L)) + bf_ref[...]
            if relu_out:
                h = jnp.maximum(h, 0.0)
            eo = jnp.concatenate([h[:cout, :], h[cout:, :]], axis=1)   # (Cout, 2R)
            return mm(eo, perm_ref[...]), 2 * L

        def nearest(x, sel_ref):
            return x if sel_ref is None else mm(x, sel_ref[...])

        def stack(x, L, conv0, res_list):
            x = conv3(x, L, conv0)
            for blk in res_list:
                x = resblock(x, L, blk)
            return x

        # ---- decoder_t: conv + res blocks + upsamples (ReLU between, not last)
        xt = stack(zt_ref[...].astype(jnp.float32), L_t, W["t_conv0"], W["t_res"])
        lt_cur = L_t
        for i in range(n_up_t):
            xt, lt_cur = conv_transpose(xt, lt_cur, W["t_up"][i], C["perm_t"][i],
                                        relu_out=(i < n_up_t - 1))

        # ---- decoder_m: conv + res blocks ----
        xm = stack(zm_ref[...].astype(jnp.float32), L_m, W["m_conv0"], W["m_res"])

        # ---- nearest interp to L_b + channel concat (torch.cat dim=1) ----
        xt = nearest(xt, C["interp_t"])
        xm = nearest(xm, C["interp_m"])
        comb = jnp.concatenate(
            [zb_ref[...].astype(jnp.float32), xm, xt], axis=0)

        # ---- decoder_b: conv + res blocks + up(ReLU) + up ----
        y = stack(comb, L_b, W["b_conv0"], W["b_res"])
        y, lcur = conv_transpose(y, L_b, W["b_up1"], C["perm_b1"], relu_out=True)
        y, lcur = conv_transpose(y, lcur, W["b_up2"], C["perm_b2"], relu_out=False)

        # ---- lane-dense NCL store: one (out_channels, L_out=128) slab / example
        for b in range(N):
            o_ref[b] = y[:, b * L_out:(b + 1) * L_out].astype(o_ref.dtype)

    vmem = pl.BlockSpec(memory_space=pltpu.MemorySpace.VMEM)
    return pl.pallas_call(
        kernel,
        out_shape=jax.ShapeDtypeStruct((N, out_channels, L_out), z_q_b.dtype),
        in_specs=[vmem] * (3 + len(flat)),
        out_specs=vmem,
        compiler_params=pltpu.CompilerParams(vmem_limit_bytes=32 * 1024 * 1024),
    )(zb, zm, zt, *flat)


# --------------------------------------------------------------------------
# Main
# --------------------------------------------------------------------------

if __name__ == "__main__":
    out_channels = 4
    hidden_channels = 32
    num_res_blocks = 2
    res_channels = 16
    embedding_dim = 8
    N = 2
    L_t, L_m, L_b = 8, 16, 32   # top / medium / bottom latent lengths

    key = jax.random.PRNGKey(0)
    kp, kzb, kzm, kzt = jax.random.split(key, 4)
    params = init_decoder1d(kp, out_channels, hidden_channels, num_res_blocks,
                            res_channels, embedding_dim)
    packed = pack_decoder_params(params)   # one-time weight re-layout (hoisted)

    z_q_b = jax.random.normal(kzb, (N, embedding_dim, L_b), jnp.float32)
    z_q_m = jax.random.normal(kzm, (N, embedding_dim, L_m), jnp.float32)
    z_q_t = jax.random.normal(kzt, (N, embedding_dim, L_t), jnp.float32)

    out = decoder1d_forward(packed, z_q_b, z_q_m, z_q_t)
    jax.block_until_ready(out)
    assert out.shape == (N, out_channels, 4 * L_b), out.shape
    print("KERNEL_OK")
</pallas_src>

<mosaic_0001>
module attributes {stable_mosaic.version = 11 : i64} {
  func.func @kernel(%arg0: memref<8x64xf32, #tpu.memory_space<vmem>>, %arg1: memref<8x32xf32, #tpu.memory_space<vmem>>, %arg2: memref<8x16xf32, #tpu.memory_space<vmem>>, %arg3: memref<32x64xf32, #tpu.memory_space<vmem>>, %arg4: memref<1x16xf32, #tpu.memory_space<vmem>>, %arg5: memref<1x16xf32, #tpu.memory_space<vmem>>, %arg6: memref<1x32xf32, #tpu.memory_space<vmem>>, %arg7: memref<1x32xf32, #tpu.memory_space<vmem>>, %arg8: memref<1x64xf32, #tpu.memory_space<vmem>>, %arg9: memref<1x64xf32, #tpu.memory_space<vmem>>, %arg10: memref<1x128xf32, #tpu.memory_space<vmem>>, %arg11: memref<1x128xf32, #tpu.memory_space<vmem>>, %arg12: memref<128x128xf32, #tpu.memory_space<vmem>>, %arg13: memref<256x256xf32, #tpu.memory_space<vmem>>, %arg14: memref<32x32xf32, #tpu.memory_space<vmem>>, %arg15: memref<64x64xf32, #tpu.memory_space<vmem>>, %arg16: memref<32x216xf32, #tpu.memory_space<vmem>>, %arg17: memref<32x1xf32, #tpu.memory_space<vmem>>, %arg18: memref<16x96xf32, #tpu.memory_space<vmem>>, %arg19: memref<16x1xf32, #tpu.memory_space<vmem>>, %arg20: memref<32x16xf32, #tpu.memory_space<vmem>>, %arg21: memref<32x1xf32, #tpu.memory_space<vmem>>, %arg22: memref<16x96xf32, #tpu.memory_space<vmem>>, %arg23: memref<16x1xf32, #tpu.memory_space<vmem>>, %arg24: memref<32x16xf32, #tpu.memory_space<vmem>>, %arg25: memref<32x1xf32, #tpu.memory_space<vmem>>, %arg26: memref<32x96xf32, #tpu.memory_space<vmem>>, %arg27: memref<32x1xf32, #tpu.memory_space<vmem>>, %arg28: memref<8x48xf32, #tpu.memory_space<vmem>>, %arg29: memref<8x1xf32, #tpu.memory_space<vmem>>, %arg30: memref<32x24xf32, #tpu.memory_space<vmem>>, %arg31: memref<32x1xf32, #tpu.memory_space<vmem>>, %arg32: memref<16x96xf32, #tpu.memory_space<vmem>>, %arg33: memref<16x1xf32, #tpu.memory_space<vmem>>, %arg34: memref<32x16xf32, #tpu.memory_space<vmem>>, %arg35: memref<32x1xf32, #tpu.memory_space<vmem>>, %arg36: memref<16x96xf32, #tpu.memory_space<vmem>>, %arg37: memref<16x1xf32, #tpu.memory_space<vmem>>, %arg38: memref<32x16xf32, #tpu.memory_space<vmem>>, %arg39: memref<32x1xf32, #tpu.memory_space<vmem>>, %arg40: memref<32x24xf32, #tpu.memory_space<vmem>>, %arg41: memref<32x1xf32, #tpu.memory_space<vmem>>, %arg42: memref<16x96xf32, #tpu.memory_space<vmem>>, %arg43: memref<16x1xf32, #tpu.memory_space<vmem>>, %arg44: memref<32x16xf32, #tpu.memory_space<vmem>>, %arg45: memref<32x1xf32, #tpu.memory_space<vmem>>, %arg46: memref<16x96xf32, #tpu.memory_space<vmem>>, %arg47: memref<16x1xf32, #tpu.memory_space<vmem>>, %arg48: memref<32x16xf32, #tpu.memory_space<vmem>>, %arg49: memref<32x1xf32, #tpu.memory_space<vmem>>, %arg50: memref<64x96xf32, #tpu.memory_space<vmem>>, %arg51: memref<64x1xf32, #tpu.memory_space<vmem>>, %arg52: memref<64x96xf32, #tpu.memory_space<vmem>>, %arg53: memref<64x1xf32, #tpu.memory_space<vmem>>, %arg54: memref<2x4x128xf32, #tpu.memory_space<vmem>>) attributes {dimension_semantics = [], scalar_prefetch = 0 : i64, scratch_operands = 0 : i64, tpu.core_type = #tpu.core_type<tc>} {
    %c0 = arith.constant 0 : index
    %c0_0 = arith.constant 0 : index
    %0 = vector.load %arg2[%c0, %c0_0] : memref<8x16xf32, #tpu.memory_space<vmem>>, vector<8x16xf32>
    %c0_1 = arith.constant 0 : index
    %c0_2 = arith.constant 0 : index
    %1 = vector.load %arg40[%c0_1, %c0_2] : memref<32x24xf32, #tpu.memory_space<vmem>>, vector<32x24xf32>
    %c1_i32 = arith.constant 1 : i32
    %2 = tpu.dynamic_rotate %0 by %c1_i32 dim 1 : vector<8x16xf32>, i32 -> vector<8x16xf32>
    %c0_3 = arith.constant 0 : index
    %c0_4 = arith.constant 0 : index
    %3 = vector.load %arg4[%c0_3, %c0_4] : memref<1x16xf32, #tpu.memory_space<vmem>>, vector<1x16xf32>
    %4 = vector.broadcast %3 : vector<1x16xf32> to vector<8x16xf32>
    %5 = arith.mulf %2, %4 : vector<8x16xf32>
    %c15_i32 = arith.constant 15 : i32
    %6 = tpu.dynamic_rotate %0 by %c15_i32 dim 1 : vector<8x16xf32>, i32 -> vector<8x16xf32>
    %c0_5 = arith.constant 0 : index
    %c0_6 = arith.constant 0 : index
    %7 = vector.load %arg5[%c0_5, %c0_6] : memref<1x16xf32, #tpu.memory_space<vmem>>, vector<1x16xf32>
    %8 = vector.broadcast %7 : vector<1x16xf32> to vector<8x16xf32>
    %9 = arith.mulf %6, %8 : vector<8x16xf32>
    %10 = tpu.concatenate %5, %0, %9 in 0 : vector<8x16xf32>, vector<8x16xf32>, vector<8x16xf32> -> vector<24x16xf32>
    %cst = arith.constant dense<0.000000e+00> : vector<32x16xf32>
    %11 = tpu.matmul %1, %10, %cst {dimension_numbers = #tpu.dot_dimension_numbers<[1], [0], [0], [1], [0, 0, 1, 1], [], []>} : vector<32x24xf32>, vector<24x16xf32>, vector<32x16xf32> -> vector<32x16xf32>
    %c0_7 = arith.constant 0 : index
    %c0_8 = arith.constant 0 : index
    %12 = vector.load %arg41[%c0_7, %c0_8] : memref<32x1xf32, #tpu.memory_space<vmem>>, vector<32x1xf32>
    %13 = vector.broadcast %12 : vector<32x1xf32> to vector<32x16xf32>
    %14 = arith.addf %11, %13 : vector<32x16xf32>
    %cst_9 = arith.constant 0.000000e+00 : f32
    %15 = vector.broadcast %cst_9 : f32 to vector<32x16xf32>
    %16 = arith.maximumf %14, %15 : vector<32x16xf32>
    %c0_10 = arith.constant 0 : index
    %c0_11 = arith.constant 0 : index
    %17 = vector.load %arg42[%c0_10, %c0_11] : memref<16x96xf32, #tpu.memory_space<vmem>>, vector<16x96xf32>
    %c1_i32_12 = arith.constant 1 : i32
    %18 = tpu.dynamic_rotate %16 by %c1_i32_12 dim 1 : vector<32x16xf32>, i32 -> vector<32x16xf32>
    %c0_13 = arith.constant 0 : index
    %c0_14 = arith.constant 0 : index
    %19 = vector.load %arg4[%c0_13, %c0_14] : memref<1x16xf32, #tpu.memory_space<vmem>>, vector<1x16xf32>
    %20 = vector.broadcast %19 : vector<1x16xf32> to vector<32x16xf32>
    %21 = arith.mulf %18, %20 : vector<32x16xf32>
    %c15_i32_15 = arith.constant 15 : i32
    %22 = tpu.dynamic_rotate %16 by %c15_i32_15 dim 1 : vector<32x16xf32>, i32 -> vector<32x16xf32>
    %c0_16 = arith.constant 0 : index
    %c0_17 = arith.constant 0 : index
    %23 = vector.load %arg5[%c0_16, %c0_17] : memref<1x16xf32, #tpu.memory_space<vmem>>, vector<1x16xf32>
    %24 = vector.broadcast %23 : vector<1x16xf32> to vector<32x16xf32>
    %25 = arith.mulf %22, %24 : vector<32x16xf32>
    %26 = tpu.concatenate %21, %16, %25 in 0 : vector<32x16xf32>, vector<32x16xf32>, vector<32x16xf32> -> vector<96x16xf32>
    %cst_18 = arith.constant dense<0.000000e+00> : vector<16x16xf32>
    %27 = tpu.matmul %17, %26, %cst_18 {dimension_numbers = #tpu.dot_dimension_numbers<[1], [0], [0], [1], [0, 0, 1, 1], [], []>} : vector<16x96xf32>, vector<96x16xf32>, vector<16x16xf32> -> vector<16x16xf32>
    %c0_19 = arith.constant 0 : index
    %c0_20 = arith.constant 0 : index
    %28 = vector.load %arg43[%c0_19, %c0_20] : memref<16x1xf32, #tpu.memory_space<vmem>>, vector<16x1xf32>
    %29 = vector.broadcast %28 : vector<16x1xf32> to vector<16x16xf32>
    %30 = arith.addf %27, %29 : vector<16x16xf32>
    %cst_21 = arith.constant 0.000000e+00 : f32
    %31 = vector.broadcast %cst_21 : f32 to vector<16x16xf32>
    %32 = arith.maximumf %30, %31 : vector<16x16xf32>
    %c0_22 = arith.constant 0 : index
    %c0_23 = arith.constant 0 : index
    %33 = vector.load %arg44[%c0_22, %c0_23] : memref<32x16xf32, #tpu.memory_space<vmem>>, vector<32x16xf32>
    %cst_24 = arith.constant dense<0.000000e+00> : vector<32x16xf32>
    %34 = tpu.matmul %33, %32, %cst_24 {dimension_numbers = #tpu.dot_dimension_numbers<[1], [0], [0], [1], [0, 0, 1, 1], [], []>} : vector<32x16xf32>, vector<16x16xf32>, vector<32x16xf32> -> vector<32x16xf32>
    %c0_25 = arith.constant 0 : index
    %c0_26 = arith.constant 0 : index
    %35 = vector.load %arg45[%c0_25, %c0_26] : memref<32x1xf32, #tpu.memory_space<vmem>>, vector<32x1xf32>
    %36 = vector.broadcast %35 : vector<32x1xf32> to vector<32x16xf32>
    %37 = arith.addf %34, %36 : vector<32x16xf32>
    %38 = arith.addf %14, %37 : vector<32x16xf32>
    %cst_27 = arith.constant 0.000000e+00 : f32
    %39 = vector.broadcast %cst_27 : f32 to vector<32x16xf32>
    %40 = arith.maximumf %38, %39 : vector<32x16xf32>
    %c0_28 = arith.constant 0 : index
    %c0_29 = arith.constant 0 : index
    %41 = vector.load %arg46[%c0_28, %c0_29] : memref<16x96xf32, #tpu.memory_space<vmem>>, vector<16x96xf32>
    %c1_i32_30 = arith.constant 1 : i32
    %42 = tpu.dynamic_rotate %40 by %c1_i32_30 dim 1 : vector<32x16xf32>, i32 -> vector<32x16xf32>
    %c0_31 = arith.constant 0 : index
    %c0_32 = arith.constant 0 : index
    %43 = vector.load %arg4[%c0_31, %c0_32] : memref<1x16xf32, #tpu.memory_space<vmem>>, vector<1x16xf32>
    %44 = vector.broadcast %43 : vector<1x16xf32> to vector<32x16xf32>
    %45 = arith.mulf %42, %44 : vector<32x16xf32>
    %c15_i32_33 = arith.constant 15 : i32
    %46 = tpu.dynamic_rotate %40 by %c15_i32_33 dim 1 : vector<32x16xf32>, i32 -> vector<32x16xf32>
    %c0_34 = arith.constant 0 : index
    %c0_35 = arith.constant 0 : index
    %47 = vector.load %arg5[%c0_34, %c0_35] : memref<1x16xf32, #tpu.memory_space<vmem>>, vector<1x16xf32>
    %48 = vector.broadcast %47 : vector<1x16xf32> to vector<32x16xf32>
    %49 = arith.mulf %46, %48 : vector<32x16xf32>
    %50 = tpu.concatenate %45, %40, %49 in 0 : vector<32x16xf32>, vector<32x16xf32>, vector<32x16xf32> -> vector<96x16xf32>
    %cst_36 = arith.constant dense<0.000000e+00> : vector<16x16xf32>
    %51 = tpu.matmul %41, %50, %cst_36 {dimension_numbers = #tpu.dot_dimension_numbers<[1], [0], [0], [1], [0, 0, 1, 1], [], []>} : vector<16x96xf32>, vector<96x16xf32>, vector<16x16xf32> -> vector<16x16xf32>
    %c0_37 = arith.constant 0 : index
    %c0_38 = arith.constant 0 : index
    %52 = vector.load %arg47[%c0_37, %c0_38] : memref<16x1xf32, #tpu.memory_space<vmem>>, vector<16x1xf32>
    %53 = vector.broadcast %52 : vector<16x1xf32> to vector<16x16xf32>
    %54 = arith.addf %51, %53 : vector<16x16xf32>
    %cst_39 = arith.constant 0.000000e+00 : f32
    %55 = vector.broadcast %cst_39 : f32 to vector<16x16xf32>
    %56 = arith.maximumf %54, %55 : vector<16x16xf32>
    %c0_40 = arith.constant 0 : index
    %c0_41 = arith.constant 0 : index
    %57 = vector.load %arg48[%c0_40, %c0_41] : memref<32x16xf32, #tpu.memory_space<vmem>>, vector<32x16xf32>
    %cst_42 = arith.constant dense<0.000000e+00> : vector<32x16xf32>
    %58 = tpu.matmul %57, %56, %cst_42 {dimension_numbers = #tpu.dot_dimension_numbers<[1], [0], [0], [1], [0, 0, 1, 1], [], []>} : vector<32x16xf32>, vector<16x16xf32>, vector<32x16xf32> -> vector<32x16xf32>
    %c0_43 = arith.constant 0 : index
    %c0_44 = arith.constant 0 : index
    %59 = vector.load %arg49[%c0_43, %c0_44] : memref<32x1xf32, #tpu.memory_space<vmem>>, vector<32x1xf32>
    %60 = vector.broadcast %59 : vector<32x1xf32> to vector<32x16xf32>
    %61 = arith.addf %58, %60 : vector<32x16xf32>
    %62 = arith.addf %38, %61 : vector<32x16xf32>
    %c0_45 = arith.constant 0 : index
    %c0_46 = arith.constant 0 : index
    %63 = vector.load %arg50[%c0_45, %c0_46] : memref<64x96xf32, #tpu.memory_space<vmem>>, vector<64x96xf32>
    %c1_i32_47 = arith.constant 1 : i32
    %64 = tpu.dynamic_rotate %62 by %c1_i32_47 dim 1 : vector<32x16xf32>, i32 -> vector<32x16xf32>
    %c0_48 = arith.constant 0 : index
    %c0_49 = arith.constant 0 : index
    %65 = vector.load %arg4[%c0_48, %c0_49] : memref<1x16xf32, #tpu.memory_space<vmem>>, vector<1x16xf32>
    %66 = vector.broadcast %65 : vector<1x16xf32> to vector<32x16xf32>
    %67 = arith.mulf %64, %66 : vector<32x16xf32>
    %c15_i32_50 = arith.constant 15 : i32
    %68 = tpu.dynamic_rotate %62 by %c15_i32_50 dim 1 : vector<32x16xf32>, i32 -> vector<32x16xf32>
    %c0_51 = arith.constant 0 : index
    %c0_52 = arith.constant 0 : index
    %69 = vector.load %arg5[%c0_51, %c0_52] : memref<1x16xf32, #tpu.memory_space<vmem>>, vector<1x16xf32>
    %70 = vector.broadcast %69 : vector<1x16xf32> to vector<32x16xf32>
    %71 = arith.mulf %68, %70 : vector<32x16xf32>
    %72 = tpu.concatenate %67, %62, %71 in 0 : vector<32x16xf32>, vector<32x16xf32>, vector<32x16xf32> -> vector<96x16xf32>
    %cst_53 = arith.constant dense<0.000000e+00> : vector<64x16xf32>
    %73 = tpu.matmul %63, %72, %cst_53 {dimension_numbers = #tpu.dot_dimension_numbers<[1], [0], [0], [1], [0, 0, 1, 1], [], []>} : vector<64x96xf32>, vector<96x16xf32>, vector<64x16xf32> -> vector<64x16xf32>
    %c0_54 = arith.constant 0 : index
    %c0_55 = arith.constant 0 : index
    %74 = vector.load %arg51[%c0_54, %c0_55] : memref<64x1xf32, #tpu.memory_space<vmem>>, vector<64x1xf32>
    %75 = vector.broadcast %74 : vector<64x1xf32> to vector<64x16xf32>
    %76 = arith.addf %73, %75 : vector<64x16xf32>
    %cst_56 = arith.constant 0.000000e+00 : f32
    %77 = vector.broadcast %cst_56 : f32 to vector<64x16xf32>
    %78 = arith.maximumf %76, %77 : vector<64x16xf32>
    %79 = vector.extract_strided_slice %78 {offsets = [0, 0], sizes = [32, 16], strides = [1, 1]} : vector<64x16xf32> to vector<32x16xf32>
    %80 = vector.extract_strided_slice %78 {offsets = [32, 0], sizes = [32, 16], strides = [1, 1]} : vector<64x16xf32> to vector<32x16xf32>
    %81 = tpu.concatenate %79, %80 in 1 : vector<32x16xf32>, vector<32x16xf32> -> vector<32x32xf32>
    %c0_57 = arith.constant 0 : index
    %c0_58 = arith.constant 0 : index
    %82 = vector.load %arg14[%c0_57, %c0_58] : memref<32x32xf32, #tpu.memory_space<vmem>>, vector<32x32xf32>
    %cst_59 = arith.constant dense<0.000000e+00> : vector<32x32xf32>
    %83 = tpu.matmul %81, %82, %cst_59 {dimension_numbers = #tpu.dot_dimension_numbers<[1], [0], [0], [1], [0, 0, 1, 1], [], []>} : vector<32x32xf32>, vector<32x32xf32>, vector<32x32xf32> -> vector<32x32xf32>
    %c0_60 = arith.constant 0 : index
    %c0_61 = arith.constant 0 : index
    %84 = vector.load %arg52[%c0_60, %c0_61] : memref<64x96xf32, #tpu.memory_space<vmem>>, vector<64x96xf32>
    %c1_i32_62 = arith.constant 1 : i32
    %85 = tpu.dynamic_rotate %83 by %c1_i32_62 dim 1 : vector<32x32xf32>, i32 -> vector<32x32xf32>
    %c0_63 = arith.constant 0 : index
    %c0_64 = arith.constant 0 : index
    %86 = vector.load %arg6[%c0_63, %c0_64] : memref<1x32xf32, #tpu.memory_space<vmem>>, vector<1x32xf32>
    %87 = vector.broadcast %86 : vector<1x32xf32> to vector<32x32xf32>
    %88 = arith.mulf %85, %87 : vector<32x32xf32>
    %c31_i32 = arith.constant 31 : i32
    %89 = tpu.dynamic_rotate %83 by %c31_i32 dim 1 : vector<32x32xf32>, i32 -> vector<32x32xf32>
    %c0_65 = arith.constant 0 : index
    %c0_66 = arith.constant 0 : index
    %90 = vector.load %arg7[%c0_65, %c0_66] : memref<1x32xf32, #tpu.memory_space<vmem>>, vector<1x32xf32>
    %91 = vector.broadcast %90 : vector<1x32xf32> to vector<32x32xf32>
    %92 = arith.mulf %89, %91 : vector<32x32xf32>
    %93 = tpu.concatenate %88, %83, %92 in 0 : vector<32x32xf32>, vector<32x32xf32>, vector<32x32xf32> -> vector<96x32xf32>
    %cst_67 = arith.constant dense<0.000000e+00> : vector<64x32xf32>
    %94 = tpu.matmul %84, %93, %cst_67 {dimension_numbers = #tpu.dot_dimension_numbers<[1], [0], [0], [1], [0, 0, 1, 1], [], []>} : vector<64x96xf32>, vector<96x32xf32>, vector<64x32xf32> -> vector<64x32xf32>
    %c0_68 = arith.constant 0 : index
    %c0_69 = arith.constant 0 : index
    %95 = vector.load %arg53[%c0_68, %c0_69] : memref<64x1xf32, #tpu.memory_space<vmem>>, vector<64x1xf32>
    %96 = vector.broadcast %95 : vector<64x1xf32> to vector<64x32xf32>
    %97 = arith.addf %94, %96 : vector<64x32xf32>
    %98 = vector.extract_strided_slice %97 {offsets = [0, 0], sizes = [32, 32], strides = [1, 1]} : vector<64x32xf32> to vector<32x32xf32>
    %99 = vector.extract_strided_slice %97 {offsets = [32, 0], sizes = [32, 32], strides = [1, 1]} : vector<64x32xf32> to vector<32x32xf32>
    %100 = tpu.concatenate %98, %99 in 1 : vector<32x32xf32>, vector<32x32xf32> -> vector<32x64xf32>
    %c0_70 = arith.constant 0 : index
    %c0_71 = arith.constant 0 : index
    %101 = vector.load %arg15[%c0_70, %c0_71] : memref<64x64xf32, #tpu.memory_space<vmem>>, vector<64x64xf32>
    %cst_72 = arith.constant dense<0.000000e+00> : vector<32x64xf32>
    %102 = tpu.matmul %100, %101, %cst_72 {dimension_numbers = #tpu.dot_dimension_numbers<[1], [0], [0], [1], [0, 0, 1, 1], [], []>} : vector<32x64xf32>, vector<64x64xf32>, vector<32x64xf32> -> vector<32x64xf32>
    %c0_73 = arith.constant 0 : index
    %c0_74 = arith.constant 0 : index
    %103 = vector.load %arg1[%c0_73, %c0_74] : memref<8x32xf32, #tpu.memory_space<vmem>>, vector<8x32xf32>
    %c0_75 = arith.constant 0 : index
    %c0_76 = arith.constant 0 : index
    %104 = vector.load %arg30[%c0_75, %c0_76] : memref<32x24xf32, #tpu.memory_space<vmem>>, vector<32x24xf32>
    %c1_i32_77 = arith.constant 1 : i32
    %105 = tpu.dynamic_rotate %103 by %c1_i32_77 dim 1 : vector<8x32xf32>, i32 -> vector<8x32xf32>
    %c0_78 = arith.constant 0 : index
    %c0_79 = arith.constant 0 : index
    %106 = vector.load %arg6[%c0_78, %c0_79] : memref<1x32xf32, #tpu.memory_space<vmem>>, vector<1x32xf32>
    %107 = vector.broadcast %106 : vector<1x32xf32> to vector<8x32xf32>
    %108 = arith.mulf %105, %107 : vector<8x32xf32>
    %c31_i32_80 = arith.constant 31 : i32
    %109 = tpu.dynamic_rotate %103 by %c31_i32_80 dim 1 : vector<8x32xf32>, i32 -> vector<8x32xf32>
    %c0_81 = arith.constant 0 : index
    %c0_82 = arith.constant 0 : index
    %110 = vector.load %arg7[%c0_81, %c0_82] : memref<1x32xf32, #tpu.memory_space<vmem>>, vector<1x32xf32>
    %111 = vector.broadcast %110 : vector<1x32xf32> to vector<8x32xf32>
    %112 = arith.mulf %109, %111 : vector<8x32xf32>
    %113 = tpu.concatenate %108, %103, %112 in 0 : vector<8x32xf32>, vector<8x32xf32>, vector<8x32xf32> -> vector<24x32xf32>
    %cst_83 = arith.constant dense<0.000000e+00> : vector<32x32xf32>
    %114 = tpu.matmul %104, %113, %cst_83 {dimension_numbers = #tpu.dot_dimension_numbers<[1], [0], [0], [1], [0, 0, 1, 1], [], []>} : vector<32x24xf32>, vector<24x32xf32>, vector<32x32xf32> -> vector<32x32xf32>
    %c0_84 = arith.constant 0 : index
    %c0_85 = arith.constant 0 : index
    %115 = vector.load %arg31[%c0_84, %c0_85] : memref<32x1xf32, #tpu.memory_space<vmem>>, vector<32x1xf32>
    %116 = vector.broadcast %115 : vector<32x1xf32> to vector<32x32xf32>
    %117 = arith.addf %114, %116 : vector<32x32xf32>
    %cst_86 = arith.constant 0.000000e+00 : f32
    %118 = vector.broadcast %cst_86 : f32 to vector<32x32xf32>
    %119 = arith.maximumf %117, %118 : vector<32x32xf32>
    %c0_87 = arith.constant 0 : index
    %c0_88 = arith.constant 0 : index
    %120 = vector.load %arg32[%c0_87, %c0_88] : memref<16x96xf32, #tpu.memory_space<vmem>>, vector<16x96xf32>
    %c1_i32_89 = arith.constant 1 : i32
    %121 = tpu.dynamic_rotate %119 by %c1_i32_89 dim 1 : vector<32x32xf32>, i32 -> vector<32x32xf32>
    %c0_90 = arith.constant 0 : index
    %c0_91 = arith.constant 0 : index
    %122 = vector.load %arg6[%c0_90, %c0_91] : memref<1x32xf32, #tpu.memory_space<vmem>>, vector<1x32xf32>
    %123 = vector.broadcast %122 : vector<1x32xf32> to vector<32x32xf32>
    %124 = arith.mulf %121, %123 : vector<32x32xf32>
    %c31_i32_92 = arith.constant 31 : i32
    %125 = tpu.dynamic_rotate %119 by %c31_i32_92 dim 1 : vector<32x32xf32>, i32 -> vector<32x32xf32>
    %c0_93 = arith.constant 0 : index
    %c0_94 = arith.constant 0 : index
    %126 = vector.load %arg7[%c0_93, %c0_94] : memref<1x32xf32, #tpu.memory_space<vmem>>, vector<1x32xf32>
    %127 = vector.broadcast %126 : vector<1x32xf32> to vector<32x32xf32>
    %128 = arith.mulf %125, %127 : vector<32x32xf32>
    %129 = tpu.concatenate %124, %119, %128 in 0 : vector<32x32xf32>, vector<32x32xf32>, vector<32x32xf32> -> vector<96x32xf32>
    %cst_95 = arith.constant dense<0.000000e+00> : vector<16x32xf32>
    %130 = tpu.matmul %120, %129, %cst_95 {dimension_numbers = #tpu.dot_dimension_numbers<[1], [0], [0], [1], [0, 0, 1, 1], [], []>} : vector<16x96xf32>, vector<96x32xf32>, vector<16x32xf32> -> vector<16x32xf32>
    %c0_96 = arith.constant 0 : index
    %c0_97 = arith.constant 0 : index
    %131 = vector.load %arg33[%c0_96, %c0_97] : memref<16x1xf32, #tpu.memory_space<vmem>>, vector<16x1xf32>
    %132 = vector.broadcast %131 : vector<16x1xf32> to vector<16x32xf32>
    %133 = arith.addf %130, %132 : vector<16x32xf32>
    %cst_98 = arith.constant 0.000000e+00 : f32
    %134 = vector.broadcast %cst_98 : f32 to vector<16x32xf32>
    %135 = arith.maximumf %133, %134 : vector<16x32xf32>
    %c0_99 = arith.constant 0 : index
    %c0_100 = arith.constant 0 : index
    %136 = vector.load %arg34[%c0_99, %c0_100] : memref<32x16xf32, #tpu.memory_space<vmem>>, vector<32x16xf32>
    %cst_101 = arith.constant dense<0.000000e+00> : vector<32x32xf32>
    %137 = tpu.matmul %136, %135, %cst_101 {dimension_numbers = #tpu.dot_dimension_numbers<[1], [0], [0], [1], [0, 0, 1, 1], [], []>} : vector<32x16xf32>, vector<16x32xf32>, vector<32x32xf32> -> vector<32x32xf32>
    %c0_102 = arith.constant 0 : index
    %c0_103 = arith.constant 0 : index
    %138 = vector.load %arg35[%c0_102, %c0_103] : memref<32x1xf32, #tpu.memory_space<vmem>>, vector<32x1xf32>
    %139 = vector.broadcast %138 : vector<32x1xf32> to vector<32x32xf32>
    %140 = arith.addf %137, %139 : vector<32x32xf32>
    %141 = arith.addf %117, %140 : vector<32x32xf32>
    %cst_104 = arith.constant 0.000000e+00 : f32
    %142 = vector.broadcast %cst_104 : f32 to vector<32x32xf32>
    %143 = arith.maximumf %141, %142 : vector<32x32xf32>
    %c0_105 = arith.constant 0 : index
    %c0_106 = arith.constant 0 : index
    %144 = vector.load %arg36[%c0_105, %c0_106] : memref<16x96xf32, #tpu.memory_space<vmem>>, vector<16x96xf32>
    %c1_i32_107 = arith.constant 1 : i32
    %145 = tpu.dynamic_rotate %143 by %c1_i32_107 dim 1 : vector<32x32xf32>, i32 -> vector<32x32xf32>
    %c0_108 = arith.constant 0 : index
    %c0_109 = arith.constant 0 : index
    %146 = vector.load %arg6[%c0_108, %c0_109] : memref<1x32xf32, #tpu.memory_space<vmem>>, vector<1x32xf32>
    %147 = vector.broadcast %146 : vector<1x32xf32> to vector<32x32xf32>
    %148 = arith.mulf %145, %147 : vector<32x32xf32>
    %c31_i32_110 = arith.constant 31 : i32
    %149 = tpu.dynamic_rotate %143 by %c31_i32_110 dim 1 : vector<32x32xf32>, i32 -> vector<32x32xf32>
    %c0_111 = arith.constant 0 : index
    %c0_112 = arith.constant 0 : index
    %150 = vector.load %arg7[%c0_111, %c0_112] : memref<1x32xf32, #tpu.memory_space<vmem>>, vector<1x32xf32>
    %151 = vector.broadcast %150 : vector<1x32xf32> to vector<32x32xf32>
    %152 = arith.mulf %149, %151 : vector<32x32xf32>
    %153 = tpu.concatenate %148, %143, %152 in 0 : vector<32x32xf32>, vector<32x32xf32>, vector<32x32xf32> -> vector<96x32xf32>
    %cst_113 = arith.constant dense<0.000000e+00> : vector<16x32xf32>
    %154 = tpu.matmul %144, %153, %cst_113 {dimension_numbers = #tpu.dot_dimension_numbers<[1], [0], [0], [1], [0, 0, 1, 1], [], []>} : vector<16x96xf32>, vector<96x32xf32>, vector<16x32xf32> -> vector<16x32xf32>
    %c0_114 = arith.constant 0 : index
    %c0_115 = arith.constant 0 : index
    %155 = vector.load %arg37[%c0_114, %c0_115] : memref<16x1xf32, #tpu.memory_space<vmem>>, vector<16x1xf32>
    %156 = vector.broadcast %155 : vector<16x1xf32> to vector<16x32xf32>
    %157 = arith.addf %154, %156 : vector<16x32xf32>
    %cst_116 = arith.constant 0.000000e+00 : f32
    %158 = vector.broadcast %cst_116 : f32 to vector<16x32xf32>
    %159 = arith.maximumf %157, %158 : vector<16x32xf32>
    %c0_117 = arith.constant 0 : index
    %c0_118 = arith.constant 0 : index
    %160 = vector.load %arg38[%c0_117, %c0_118] : memref<32x16xf32, #tpu.memory_space<vmem>>, vector<32x16xf32>
    %cst_119 = arith.constant dense<0.000000e+00> : vector<32x32xf32>
    %161 = tpu.matmul %160, %159, %cst_119 {dimension_numbers = #tpu.dot_dimension_numbers<[1], [0], [0], [1], [0, 0, 1, 1], [], []>} : vector<32x16xf32>, vector<16x32xf32>, vector<32x32xf32> -> vector<32x32xf32>
    %c0_120 = arith.constant 0 : index
    %c0_121 = arith.constant 0 : index
    %162 = vector.load %arg39[%c0_120, %c0_121] : memref<32x1xf32, #tpu.memory_space<vmem>>, vector<32x1xf32>
    %163 = vector.broadcast %162 : vector<32x1xf32> to vector<32x32xf32>
    %164 = arith.addf %161, %163 : vector<32x32xf32>
    %165 = arith.addf %141, %164 : vector<32x32xf32>
    %c0_122 = arith.constant 0 : index
    %c0_123 = arith.constant 0 : index
    %166 = vector.load %arg3[%c0_122, %c0_123] : memref<32x64xf32, #tpu.memory_space<vmem>>, vector<32x64xf32>
    %cst_124 = arith.constant dense<0.000000e+00> : vector<32x64xf32>
    %167 = tpu.matmul %165, %166, %cst_124 {dimension_numbers = #tpu.dot_dimension_numbers<[1], [0], [0], [1], [0, 0, 1, 1], [], []>} : vector<32x32xf32>, vector<32x64xf32>, vector<32x64xf32> -> vector<32x64xf32>
    %c0_125 = arith.constant 0 : index
    %c0_126 = arith.constant 0 : index
    %168 = vector.load %arg0[%c0_125, %c0_126] : memref<8x64xf32, #tpu.memory_space<vmem>>, vector<8x64xf32>
    %169 = tpu.concatenate %168, %167, %102 in 0 : vector<8x64xf32>, vector<32x64xf32>, vector<32x64xf32> -> vector<72x64xf32>
    %c0_127 = arith.constant 0 : index
    %c0_128 = arith.constant 0 : index
    %170 = vector.load %arg16[%c0_127, %c0_128] : memref<32x216xf32, #tpu.memory_space<vmem>>, vector<32x216xf32>
    %c1_i32_129 = arith.constant 1 : i32
    %171 = tpu.dynamic_rotate %169 by %c1_i32_129 dim 1 : vector<72x64xf32>, i32 -> vector<72x64xf32>
    %c0_130 = arith.constant 0 : index
    %c0_131 = arith.constant 0 : index
    %172 = vector.load %arg8[%c0_130, %c0_131] : memref<1x64xf32, #tpu.memory_space<vmem>>, vector<1x64xf32>
    %173 = vector.broadcast %172 : vector<1x64xf32> to vector<72x64xf32>
    %174 = arith.mulf %171, %173 : vector<72x64xf32>
    %c63_i32 = arith.constant 63 : i32
    %175 = tpu.dynamic_rotate %169 by %c63_i32 dim 1 : vector<72x64xf32>, i32 -> vector<72x64xf32>
    %c0_132 = arith.constant 0 : index
    %c0_133 = arith.constant 0 : index
    %176 = vector.load %arg9[%c0_132, %c0_133] : memref<1x64xf32, #tpu.memory_space<vmem>>, vector<1x64xf32>
    %177 = vector.broadcast %176 : vector<1x64xf32> to vector<72x64xf32>
    %178 = arith.mulf %175, %177 : vector<72x64xf32>
    %179 = tpu.concatenate %174, %169, %178 in 0 : vector<72x64xf32>, vector<72x64xf32>, vector<72x64xf32> -> vector<216x64xf32>
    %cst_134 = arith.constant dense<0.000000e+00> : vector<32x64xf32>
    %180 = tpu.matmul %170, %179, %cst_134 {dimension_numbers = #tpu.dot_dimension_numbers<[1], [0], [0], [1], [0, 0, 1, 1], [], []>} : vector<32x216xf32>, vector<216x64xf32>, vector<32x64xf32> -> vector<32x64xf32>
    %c0_135 = arith.constant 0 : index
    %c0_136 = arith.constant 0 : index
    %181 = vector.load %arg17[%c0_135, %c0_136] : memref<32x1xf32, #tpu.memory_space<vmem>>, vector<32x1xf32>
    %182 = vector.broadcast %181 : vector<32x1xf32> to vector<32x64xf32>
    %183 = arith.addf %180, %182 : vector<32x64xf32>
    %cst_137 = arith.constant 0.000000e+00 : f32
    %184 = vector.broadcast %cst_137 : f32 to vector<32x64xf32>
    %185 = arith.maximumf %183, %184 : vector<32x64xf32>
    %c0_138 = arith.constant 0 : index
    %c0_139 = arith.constant 0 : index
    %186 = vector.load %arg18[%c0_138, %c0_139] : memref<16x96xf32, #tpu.memory_space<vmem>>, vector<16x96xf32>
    %c1_i32_140 = arith.constant 1 : i32
    %187 = tpu.dynamic_rotate %185 by %c1_i32_140 dim 1 : vector<32x64xf32>, i32 -> vector<32x64xf32>
    %c0_141 = arith.constant 0 : index
    %c0_142 = arith.constant 0 : index
    %188 = vector.load %arg8[%c0_141, %c0_142] : memref<1x64xf32, #tpu.memory_space<vmem>>, vector<1x64xf32>
    %189 = vector.broadcast %188 : vector<1x64xf32> to vector<32x64xf32>
    %190 = arith.mulf %187, %189 : vector<32x64xf32>
    %c63_i32_143 = arith.constant 63 : i32
    %191 = tpu.dynamic_rotate %185 by %c63_i32_143 dim 1 : vector<32x64xf32>, i32 -> vector<32x64xf32>
    %c0_144 = arith.constant 0 : index
    %c0_145 = arith.constant 0 : index
    %192 = vector.load %arg9[%c0_144, %c0_145] : memref<1x64xf32, #tpu.memory_space<vmem>>, vector<1x64xf32>
    %193 = vector.broadcast %192 : vector<1x64xf32> to vector<32x64xf32>
    %194 = arith.mulf %191, %193 : vector<32x64xf32>
    %195 = tpu.concatenate %190, %185, %194 in 0 : vector<32x64xf32>, vector<32x64xf32>, vector<32x64xf32> -> vector<96x64xf32>
    %cst_146 = arith.constant dense<0.000000e+00> : vector<16x64xf32>
    %196 = tpu.matmul %186, %195, %cst_146 {dimension_numbers = #tpu.dot_dimension_numbers<[1], [0], [0], [1], [0, 0, 1, 1], [], []>} : vector<16x96xf32>, vector<96x64xf32>, vector<16x64xf32> -> vector<16x64xf32>
    %c0_147 = arith.constant 0 : index
    %c0_148 = arith.constant 0 : index
    %197 = vector.load %arg19[%c0_147, %c0_148] : memref<16x1xf32, #tpu.memory_space<vmem>>, vector<16x1xf32>
    %198 = vector.broadcast %197 : vector<16x1xf32> to vector<16x64xf32>
    %199 = arith.addf %196, %198 : vector<16x64xf32>
    %cst_149 = arith.constant 0.000000e+00 : f32
    %200 = vector.broadcast %cst_149 : f32 to vector<16x64xf32>
    %201 = arith.maximumf %199, %200 : vector<16x64xf32>
    %c0_150 = arith.constant 0 : index
    %c0_151 = arith.constant 0 : index
    %202 = vector.load %arg20[%c0_150, %c0_151] : memref<32x16xf32, #tpu.memory_space<vmem>>, vector<32x16xf32>
    %cst_152 = arith.constant dense<0.000000e+00> : vector<32x64xf32>
    %203 = tpu.matmul %202, %201, %cst_152 {dimension_numbers = #tpu.dot_dimension_numbers<[1], [0], [0], [1], [0, 0, 1, 1], [], []>} : vector<32x16xf32>, vector<16x64xf32>, vector<32x64xf32> -> vector<32x64xf32>
    %c0_153 = arith.constant 0 : index
    %c0_154 = arith.constant 0 : index
    %204 = vector.load %arg21[%c0_153, %c0_154] : memref<32x1xf32, #tpu.memory_space<vmem>>, vector<32x1xf32>
    %205 = vector.broadcast %204 : vector<32x1xf32> to vector<32x64xf32>
    %206 = arith.addf %203, %205 : vector<32x64xf32>
    %207 = arith.addf %183, %206 : vector<32x64xf32>
    %cst_155 = arith.constant 0.000000e+00 : f32
    %208 = vector.broadcast %cst_155 : f32 to vector<32x64xf32>
    %209 = arith.maximumf %207, %208 : vector<32x64xf32>
    %c0_156 = arith.constant 0 : index
    %c0_157 = arith.constant 0 : index
    %210 = vector.load %arg22[%c0_156, %c0_157] : memref<16x96xf32, #tpu.memory_space<vmem>>, vector<16x96xf32>
    %c1_i32_158 = arith.constant 1 : i32
    %211 = tpu.dynamic_rotate %209 by %c1_i32_158 dim 1 : vector<32x64xf32>, i32 -> vector<32x64xf32>
    %c0_159 = arith.constant 0 : index
    %c0_160 = arith.constant 0 : index
    %212 = vector.load %arg8[%c0_159, %c0_160] : memref<1x64xf32, #tpu.memory_space<vmem>>, vector<1x64xf32>
    %213 = vector.broadcast %212 : vector<1x64xf32> to vector<32x64xf32>
    %214 = arith.mulf %211, %213 : vector<32x64xf32>
    %c63_i32_161 = arith.constant 63 : i32
    %215 = tpu.dynamic_rotate %209 by %c63_i32_161 dim 1 : vector<32x64xf32>, i32 -> vector<32x64xf32>
    %c0_162 = arith.constant 0 : index
    %c0_163 = arith.constant 0 : index
    %216 = vector.load %arg9[%c0_162, %c0_163] : memref<1x64xf32, #tpu.memory_space<vmem>>, vector<1x64xf32>
    %217 = vector.broadcast %216 : vector<1x64xf32> to vector<32x64xf32>
    %218 = arith.mulf %215, %217 : vector<32x64xf32>
    %219 = tpu.concatenate %214, %209, %218 in 0 : vector<32x64xf32>, vector<32x64xf32>, vector<32x64xf32> -> vector<96x64xf32>
    %cst_164 = arith.constant dense<0.000000e+00> : vector<16x64xf32>
    %220 = tpu.matmul %210, %219, %cst_164 {dimension_numbers = #tpu.dot_dimension_numbers<[1], [0], [0], [1], [0, 0, 1, 1], [], []>} : vector<16x96xf32>, vector<96x64xf32>, vector<16x64xf32> -> vector<16x64xf32>
    %c0_165 = arith.constant 0 : index
    %c0_166 = arith.constant 0 : index
    %221 = vector.load %arg23[%c0_165, %c0_166] : memref<16x1xf32, #tpu.memory_space<vmem>>, vector<16x1xf32>
    %222 = vector.broadcast %221 : vector<16x1xf32> to vector<16x64xf32>
    %223 = arith.addf %220, %222 : vector<16x64xf32>
    %cst_167 = arith.constant 0.000000e+00 : f32
    %224 = vector.broadcast %cst_167 : f32 to vector<16x64xf32>
    %225 = arith.maximumf %223, %224 : vector<16x64xf32>
    %c0_168 = arith.constant 0 : index
    %c0_169 = arith.constant 0 : index
    %226 = vector.load %arg24[%c0_168, %c0_169] : memref<32x16xf32, #tpu.memory_space<vmem>>, vector<32x16xf32>
    %cst_170 = arith.constant dense<0.000000e+00> : vector<32x64xf32>
    %227 = tpu.matmul %226, %225, %cst_170 {dimension_numbers = #tpu.dot_dimension_numbers<[1], [0], [0], [1], [0, 0, 1, 1], [], []>} : vector<32x16xf32>, vector<16x64xf32>, vector<32x64xf32> -> vector<32x64xf32>
    %c0_171 = arith.constant 0 : index
    %c0_172 = arith.constant 0 : index
    %228 = vector.load %arg25[%c0_171, %c0_172] : memref<32x1xf32, #tpu.memory_space<vmem>>, vector<32x1xf32>
    %229 = vector.broadcast %228 : vector<32x1xf32> to vector<32x64xf32>
    %230 = arith.addf %227, %229 : vector<32x64xf32>
    %231 = arith.addf %207, %230 : vector<32x64xf32>
    %c0_173 = arith.constant 0 : index
    %c0_174 = arith.constant 0 : index
    %232 = vector.load %arg26[%c0_173, %c0_174] : memref<32x96xf32, #tpu.memory_space<vmem>>, vector<32x96xf32>
    %c1_i32_175 = arith.constant 1 : i32
    %233 = tpu.dynamic_rotate %231 by %c1_i32_175 dim 1 : vector<32x64xf32>, i32 -> vector<32x64xf32>
    %c0_176 = arith.constant 0 : index
    %c0_177 = arith.constant 0 : index
    %234 = vector.load %arg8[%c0_176, %c0_177] : memref<1x64xf32, #tpu.memory_space<vmem>>, vector<1x64xf32>
    %235 = vector.broadcast %234 : vector<1x64xf32> to vector<32x64xf32>
    %236 = arith.mulf %233, %235 : vector<32x64xf32>
    %c63_i32_178 = arith.constant 63 : i32
    %237 = tpu.dynamic_rotate %231 by %c63_i32_178 dim 1 : vector<32x64xf32>, i32 -> vector<32x64xf32>
    %c0_179 = arith.constant 0 : index
    %c0_180 = arith.constant 0 : index
    %238 = vector.load %arg9[%c0_179, %c0_180] : memref<1x64xf32, #tpu.memory_space<vmem>>, vector<1x64xf32>
    %239 = vector.broadcast %238 : vector<1x64xf32> to vector<32x64xf32>
    %240 = arith.mulf %237, %239 : vector<32x64xf32>
    %241 = tpu.concatenate %236, %231, %240 in 0 : vector<32x64xf32>, vector<32x64xf32>, vector<32x64xf32> -> vector<96x64xf32>
    %cst_181 = arith.constant dense<0.000000e+00> : vector<32x64xf32>
    %242 = tpu.matmul %232, %241, %cst_181 {dimension_numbers = #tpu.dot_dimension_numbers<[1], [0], [0], [1], [0, 0, 1, 1], [], []>} : vector<32x96xf32>, vector<96x64xf32>, vector<32x64xf32> -> vector<32x64xf32>
    %c0_182 = arith.constant 0 : index
    %c0_183 = arith.constant 0 : index
    %243 = vector.load %arg27[%c0_182, %c0_183] : memref<32x1xf32, #tpu.memory_space<vmem>>, vector<32x1xf32>
    %244 = vector.broadcast %243 : vector<32x1xf32> to vector<32x64xf32>
    %245 = arith.addf %242, %244 : vector<32x64xf32>
    %cst_184 = arith.constant 0.000000e+00 : f32
    %246 = vector.broadcast %cst_184 : f32 to vector<32x64xf32>
    %247 = arith.maximumf %245, %246 : vector<32x64xf32>
    %248 = vector.extract_strided_slice %247 {offsets = [0, 0], sizes = [16, 64], strides = [1, 1]} : vector<32x64xf32> to vector<16x64xf32>
    %249 = vector.extract_strided_slice %247 {offsets = [16, 0], sizes = [16, 64], strides = [1, 1]} : vector<32x64xf32> to vector<16x64xf32>
    %250 = tpu.concatenate %248, %249 in 1 : vector<16x64xf32>, vector<16x64xf32> -> vector<16x128xf32>
    %c0_185 = arith.constant 0 : index
    %c0_186 = arith.constant 0 : index
    %251 = vector.load %arg12[%c0_185, %c0_186] : memref<128x128xf32, #tpu.memory_space<vmem>>, vector<128x128xf32>
    %cst_187 = arith.constant dense<0.000000e+00> : vector<16x128xf32>
    %252 = tpu.matmul %250, %251, %cst_187 {dimension_numbers = #tpu.dot_dimension_numbers<[1], [0], [0], [1], [0, 0, 1, 1], [], []>} : vector<16x128xf32>, vector<128x128xf32>, vector<16x128xf32> -> vector<16x128xf32>
    %c0_188 = arith.constant 0 : index
    %c0_189 = arith.constant 0 : index
    %253 = vector.load %arg28[%c0_188, %c0_189] : memref<8x48xf32, #tpu.memory_space<vmem>>, vector<8x48xf32>
    %c1_i32_190 = arith.constant 1 : i32
    %254 = tpu.dynamic_rotate %252 by %c1_i32_190 dim 1 : vector<16x128xf32>, i32 -> vector<16x128xf32>
    %c0_191 = arith.constant 0 : index
    %c0_192 = arith.constant 0 : index
    %255 = vector.load %arg10[%c0_191, %c0_192] : memref<1x128xf32, #tpu.memory_space<vmem>>, vector<1x128xf32>
    %256 = vector.broadcast %255 : vector<1x128xf32> to vector<16x128xf32>
    %257 = arith.mulf %254, %256 : vector<16x128xf32>
    %c127_i32 = arith.constant 127 : i32
    %258 = tpu.dynamic_rotate %252 by %c127_i32 dim 1 : vector<16x128xf32>, i32 -> vector<16x128xf32>
    %c0_193 = arith.constant 0 : index
    %c0_194 = arith.constant 0 : index
    %259 = vector.load %arg11[%c0_193, %c0_194] : memref<1x128xf32, #tpu.memory_space<vmem>>, vector<1x128xf32>
    %260 = vector.broadcast %259 : vector<1x128xf32> to vector<16x128xf32>
    %261 = arith.mulf %258, %260 : vector<16x128xf32>
    %262 = tpu.concatenate %257, %252, %261 in 0 : vector<16x128xf32>, vector<16x128xf32>, vector<16x128xf32> -> vector<48x128xf32>
    %cst_195 = arith.constant dense<0.000000e+00> : vector<8x128xf32>
    %263 = tpu.matmul %253, %262, %cst_195 {dimension_numbers = #tpu.dot_dimension_numbers<[1], [0], [0], [1], [0, 0, 1, 1], [], []>} : vector<8x48xf32>, vector<48x128xf32>, vector<8x128xf32> -> vector<8x128xf32>
    %c0_196 = arith.constant 0 : index
    %c0_197 = arith.constant 0 : index
    %264 = vector.load %arg29[%c0_196, %c0_197] : memref<8x1xf32, #tpu.memory_space<vmem>>, vector<8x1xf32>
    %265 = vector.broadcast %264 : vector<8x1xf32> to vector<8x128xf32>
    %266 = arith.addf %263, %265 : vector<8x128xf32>
    %267 = vector.extract_strided_slice %266 {offsets = [0, 0], sizes = [4, 128], strides = [1, 1]} : vector<8x128xf32> to vector<4x128xf32>
    %268 = vector.extract_strided_slice %266 {offsets = [4, 0], sizes = [4, 128], strides = [1, 1]} : vector<8x128xf32> to vector<4x128xf32>
    %269 = tpu.concatenate %267, %268 in 1 : vector<4x128xf32>, vector<4x128xf32> -> vector<4x256xf32>
    %c0_198 = arith.constant 0 : index
    %c0_199 = arith.constant 0 : index
    %270 = vector.load %arg13[%c0_198, %c0_199] : memref<256x256xf32, #tpu.memory_space<vmem>>, vector<256x256xf32>
    %cst_200 = arith.constant dense<0.000000e+00> : vector<4x256xf32>
    %271 = tpu.matmul %269, %270, %cst_200 {dimension_numbers = #tpu.dot_dimension_numbers<[1], [0], [0], [1], [0, 0, 1, 1], [], []>} : vector<4x256xf32>, vector<256x256xf32>, vector<4x256xf32> -> vector<4x256xf32>
    %272 = vector.extract_strided_slice %271 {offsets = [0, 0], sizes = [4, 128], strides = [1, 1]} : vector<4x256xf32> to vector<4x128xf32>
    %c0_201 = arith.constant 0 : index
    %c0_202 = arith.constant 0 : index
    %c0_203 = arith.constant 0 : index
    %273 = vector.load %arg54[%c0_201, %c0_202, %c0_203] : memref<2x4x128xf32, #tpu.memory_space<vmem>>, vector<1x4x128xf32>
    %274 = vector.shape_cast %273 : vector<1x4x128xf32> to vector<4x128xf32>
    %275 = vector.shape_cast %272 : vector<4x128xf32> to vector<1x4x128xf32>
    tpu.vector_store %arg54[%c0_201, %c0_202, %c0_203], %275 {strides = array<i32>} : memref<2x4x128xf32, #tpu.memory_space<vmem>>, vector<1x4x128xf32>,
    %276 = vector.extract_strided_slice %271 {offsets = [0, 128], sizes = [4, 128], strides = [1, 1]} : vector<4x256xf32> to vector<4x128xf32>
    %c1 = arith.constant 1 : index
    %c0_204 = arith.constant 0 : index
    %c0_205 = arith.constant 0 : index
    %277 = vector.load %arg54[%c1, %c0_204, %c0_205] : memref<2x4x128xf32, #tpu.memory_space<vmem>>, vector<1x4x128xf32>
    %278 = vector.shape_cast %277 : vector<1x4x128xf32> to vector<4x128xf32>
    %279 = vector.shape_cast %276 : vector<4x128xf32> to vector<1x4x128xf32>
    tpu.vector_store %arg54[%c1, %c0_204, %c0_205], %279 {strides = array<i32>} : memref<2x4x128xf32, #tpu.memory_space<vmem>>, vector<1x4x128xf32>,
    return
  }
}

</mosaic_0001>

<llo_original>
// kernel: tpu_custom_call.1
$region0: #{tpu_custom_call.1}
  #allocation0 [shape = 'u32[]', space=smem, size = 0x4, offset = 0x4, fixed_abs, tag = 'smem constant byte address 0x4 - core index']
  #allocation1 [shape = 'u32[144,128]{1,0:T(1,128)}', space=vmem, size = 0x12000, scoped, tag = 'internal scratch']
  %s0 = inlined_call_operand.smem [shape: u32[55], index: -1, kind: input, shape index: {}]
  %s1 = sld [smem:[%s0]]
  %s2 = scalar_lea.smem %s0, 1
  %s3 = sld [smem:[%s2]]
  %s4 = scalar_lea.smem %s0, 2
  %s5 = sld [smem:[%s4]]
  %s6 = scalar_lea.smem %s0, 3
  %s7 = sld [smem:[%s6]]
  %s8 = scalar_lea.smem %s0, 4
  %s9 = sld [smem:[%s8]]
  %s10 = scalar_lea.smem %s0, 5
  %s11 = sld [smem:[%s10]]
  %s12 = scalar_lea.smem %s0, 6
  %s13 = sld [smem:[%s12]]
  %s14 = scalar_lea.smem %s0, 7
  %s15 = sld [smem:[%s14]]
  %s16 = scalar_lea.smem %s0, 8
  %s17 = sld [smem:[%s16]]
  %s18 = scalar_lea.smem %s0, 9
  %s19 = sld [smem:[%s18]]
  %s20 = scalar_lea.smem %s0, 10
  %s21 = sld [smem:[%s20]]
  %s22 = scalar_lea.smem %s0, 11
  %s23 = sld [smem:[%s22]]
  %s24 = scalar_lea.smem %s0, 12
  %s25 = sld [smem:[%s24]]
  %s26 = scalar_lea.smem %s0, 13
  %s27 = sld [smem:[%s26]]
  %s28 = scalar_lea.smem %s0, 14
  %s29 = sld [smem:[%s28]]
  %s30 = scalar_lea.smem %s0, 15
  %s31 = sld [smem:[%s30]]
  %s32 = scalar_lea.smem %s0, 16
  %s33 = sld [smem:[%s32]]
  %s34 = scalar_lea.smem %s0, 17
  %s35 = sld [smem:[%s34]]
  %s36 = scalar_lea.smem %s0, 18
  %s37 = sld [smem:[%s36]]
  %s38 = scalar_lea.smem %s0, 19
  %s39 = sld [smem:[%s38]]
  %s40 = scalar_lea.smem %s0, 20
  %s41 = sld [smem:[%s40]]
  %s42 = scalar_lea.smem %s0, 21
  %s43 = sld [smem:[%s42]]
  %s44 = scalar_lea.smem %s0, 22
  %s45 = sld [smem:[%s44]]
  %s46 = scalar_lea.smem %s0, 23
  %s47 = sld [smem:[%s46]]
  %s48 = scalar_lea.smem %s0, 24
  %s49 = sld [smem:[%s48]]
  %s50 = scalar_lea.smem %s0, 25
  %s51 = sld [smem:[%s50]]
  %s52 = scalar_lea.smem %s0, 26
  %s53 = sld [smem:[%s52]]
  %s54 = scalar_lea.smem %s0, 27
  %s55 = sld [smem:[%s54]]
  %s56 = scalar_lea.smem %s0, 28
  %s57 = sld [smem:[%s56]]
  %s58 = scalar_lea.smem %s0, 29
  %s59 = sld [smem:[%s58]]
  %s60 = scalar_lea.smem %s0, 30
  %s61 = sld [smem:[%s60]]
  %s62 = scalar_lea.smem %s0, 31
  %s63 = sld [smem:[%s62]]
  %s64 = scalar_lea.smem %s0, 32
  %s65 = sld [smem:[%s64]]
  %s66 = scalar_lea.smem %s0, 33
  %s67 = sld [smem:[%s66]]
  %s68 = scalar_lea.smem %s0, 34
  %s69 = sld [smem:[%s68]]
  %s70 = scalar_lea.smem %s0, 35
  %s71 = sld [smem:[%s70]]
  %s72 = scalar_lea.smem %s0, 36
  %s73 = sld [smem:[%s72]]
  %s74 = scalar_lea.smem %s0, 37
  %s75 = sld [smem:[%s74]]
  %s76 = scalar_lea.smem %s0, 38
  %s77 = sld [smem:[%s76]]
  %s78 = scalar_lea.smem %s0, 39
  %s79 = sld [smem:[%s78]]
  %s80 = scalar_lea.smem %s0, 40
  %s81 = sld [smem:[%s80]]
  %s82 = scalar_lea.smem %s0, 41
  %s83 = sld [smem:[%s82]]
  %s84 = scalar_lea.smem %s0, 42
  %s85 = sld [smem:[%s84]]
  %s86 = scalar_lea.smem %s0, 43
  %s87 = sld [smem:[%s86]]
  %s88 = scalar_lea.smem %s0, 44
  %s89 = sld [smem:[%s88]]
  %s90 = scalar_lea.smem %s0, 45
  %s91 = sld [smem:[%s90]]
  %s92 = scalar_lea.smem %s0, 46
  %s93 = sld [smem:[%s92]]
  %s94 = scalar_lea.smem %s0, 47
  %s95 = sld [smem:[%s94]]
  %s96 = scalar_lea.smem %s0, 48
  %s97 = sld [smem:[%s96]]
  %s98 = scalar_lea.smem %s0, 49
  %s99 = sld [smem:[%s98]]
  %s100 = scalar_lea.smem %s0, 50
  %s101 = sld [smem:[%s100]]
  %s102 = scalar_lea.smem %s0, 51
  %s103 = sld [smem:[%s102]]
  %s104 = scalar_lea.smem %s0, 52
  %s105 = sld [smem:[%s104]]
  %s106 = scalar_lea.smem %s0, 53
  %s107 = sld [smem:[%s106]]
  %s108 = scalar_lea.smem %s0, 54
  %s109 = sld [smem:[%s108]]
  %s110 = sld [smem:[#allocation0]]
  $region282: #{tpu_custom_call.1} parent=0
    _
  %s112 = ssub.s32 1, %s110
  %s113 = scalar_select 0, %s112, %s110
  $region1: #{tpu_custom_call.1} parent=0
    #allocation2 [shape = 'u8[4096]{0}', space=vmem, size = 0x1000, scoped, tag = 'input window, operand 0, single buffered']
    #allocation3 [shape = 's32[1]{0}', space=sflag, size = 0x4, scoped, tag = 'scoped memory for tpu_custom_call.1']
    #allocation4 [shape = 's32[1]{0}', space=sflag, size = 0x4, scoped, tag = 'scoped memory for tpu_custom_call.1']
    #allocation5 [shape = 'u8[4096]{0}', space=vmem, size = 0x1000, scoped, tag = 'input window, operand 1, single buffered']
    #allocation6 [shape = 's32[1]{0}', space=sflag, size = 0x4, scoped, tag = 'scoped memory for tpu_custom_call.1']
    #allocation7 [shape = 'u8[4096]{0}', space=vmem, size = 0x1000, scoped, tag = 'input window, operand 2, single buffered']
    #allocation8 [shape = 'u8[512]{0}', space=vmem, size = 0x400, scoped, tag = 'input window, operand 4, single buffered']
    #allocation9 [shape = 's32[1]{0}', space=sflag, size = 0x4, scoped, tag = 'scoped memory for tpu_custom_call.1']
    #allocation10 [shape = 'u8[512]{0}', space=vmem, size = 0x400, scoped, tag = 'input window, operand 5, single buffered']
    #allocation11 [shape = 'u8[512]{0}', space=vmem, size = 0x400, scoped, tag = 'input window, operand 6, single buffered']
    #allocation12 [shape = 's32[1]{0}', space=sflag, size = 0x4, scoped, tag = 'scoped memory for tpu_custom_call.1']
    #allocation13 [shape = 'u8[512]{0}', space=vmem, size = 0x400, scoped, tag = 'input window, operand 7, single buffered']
    #allocation14 [shape = 'u8[512]{0}', space=vmem, size = 0x400, scoped, tag = 'input window, operand 8, single buffered']
    #allocation15 [shape = 's32[1]{0}', space=sflag, size = 0x4, scoped, tag = 'scoped memory for tpu_custom_call.1']
    #allocation16 [shape = 'u8[512]{0}', space=vmem, size = 0x400, scoped, tag = 'input window, operand 9, single buffered']
    #allocation17 [shape = 'u8[512]{0}', space=vmem, size = 0x400, scoped, tag = 'input window, operand 10, single buffered']
    #allocation18 [shape = 's32[1]{0}', space=sflag, size = 0x4, scoped, tag = 'scoped memory for tpu_custom_call.1']
    #allocation19 [shape = 'u8[512]{0}', space=vmem, size = 0x400, scoped, tag = 'input window, operand 11, single buffered']
    #allocation20 [shape = 'u8[8192]{0}', space=vmem, size = 0x2000, scoped, tag = 'input window, operand 18, single buffered']
    #allocation21 [shape = 's32[1]{0}', space=sflag, size = 0x4, scoped, tag = 'scoped memory for tpu_custom_call.1']
    #allocation22 [shape = 'u8[8192]{0}', space=vmem, size = 0x2000, scoped, tag = 'input window, operand 22, single buffered']
    #allocation23 [shape = 'u8[4096]{0}', space=vmem, size = 0x1000, scoped, tag = 'input window, operand 28, single buffered']
    #allocation24 [shape = 's32[1]{0}', space=sflag, size = 0x4, scoped, tag = 'scoped memory for tpu_custom_call.1']
    #allocation25 [shape = 'u8[4096]{0}', space=vmem, size = 0x1000, scoped, tag = 'output window, operand 0, single buffered']
    %114 = vsyncpa [#allocation3], 0
    %115 = vsyncpa [#allocation6], 0
    %116 = vsyncpa [#allocation9], 0
    %117 = vsyncpa [#allocation12], 0
    %118 = vsyncpa [#allocation15], 0
    %119 = vsyncpa [#allocation18], 0
    %120 = vsyncpa [#allocation21], 0
    %121 = vsyncpa [#allocation24], 0
    %122 = vsyncpa [#allocation4], 0
    // Predicated region
    $region2: #{tpu_custom_call.1} parent=1 // pred_check
      _
    $region3: #{tpu_custom_call.1} parent=1 // pred_check_branch
      %124 = sbr.rel (0) target = $region5
    $region4: #{tpu_custom_call.1} parent=1 // pred_region
      %s126 = ssub.s32 128, 128
      %127 = vsyncadd [#allocation3], %s126
      %s129 = sshll.u32 [#allocation2], 4
      %s130 = int_to_ptr.vmem [resolvable:$true] %s129
      %132 = dma.hbm_to_vmem [thread:$0]  %s1, 128, %s130, [#allocation3]
    $region5: #{tpu_custom_call.1} parent=1 // pred_fallthru
      _
    // Predicated region
    $region6: #{tpu_custom_call.1} parent=1 // pred_check
      _
    $region7: #{tpu_custom_call.1} parent=1 // pred_check_branch
      %134 = sbr.rel (0) target = $region9
    $region8: #{tpu_custom_call.1} parent=1 // pred_region
      %s136 = ssub.s32 128, 128
      %137 = vsyncadd [#allocation6], %s136
      %s139 = sshll.u32 [#allocation5], 4
      %s140 = int_to_ptr.vmem [resolvable:$true] %s139
      %142 = dma.hbm_to_vmem [thread:$0]  %s3, 128, %s140, [#allocation6]
    $region9: #{tpu_custom_call.1} parent=1 // pred_fallthru
      _
    // Predicated region
    $region10: #{tpu_custom_call.1} parent=1 // pred_check
      _
    $region11: #{tpu_custom_call.1} parent=1 // pred_check_branch
      %144 = sbr.rel (0) target = $region13
    $region12: #{tpu_custom_call.1} parent=1 // pred_region
      %s146 = ssub.s32 128, 128
      %147 = vsyncadd [#allocation6], %s146
      %s149 = sshll.u32 [#allocation7], 4
      %s150 = int_to_ptr.vmem [resolvable:$true] %s149
      %152 = dma.hbm_to_vmem [thread:$0]  %s5, 128, %s150, [#allocation6]
    $region13: #{tpu_custom_call.1} parent=1 // pred_fallthru
      _
    // Predicated region
    $region14: #{tpu_custom_call.1} parent=1 // pred_check
      _
    $region15: #{tpu_custom_call.1} parent=1 // pred_check_branch
      %154 = sbr.rel (0) target = $region17
    $region16: #{tpu_custom_call.1} parent=1 // pred_region
      _
    $region17: #{tpu_custom_call.1} parent=1 // pred_fallthru
      _
    // Predicated region
    $region18: #{tpu_custom_call.1} parent=1 // pred_check
      _
    $region19: #{tpu_custom_call.1} parent=1 // pred_check_branch
      %156 = sbr.rel (0) target = $region21
    $region20: #{tpu_custom_call.1} parent=1 // pred_region
      %s158 = ssub.s32 16, 16
      %159 = vsyncadd [#allocation9], %s158
      %s161 = sshll.u32 [#allocation8], 4
      %s162 = int_to_ptr.vmem [resolvable:$true] %s161
      %164 = dma.hbm_to_vmem [thread:$0]  %s9, 16, %s162, [#allocation9]
    $region21: #{tpu_custom_call.1} parent=1 // pred_fallthru
      _
    // Predicated region
    $region22: #{tpu_custom_call.1} parent=1 // pred_check
      _
    $region23: #{tpu_custom_call.1} parent=1 // pred_check_branch
      %166 = sbr.rel (0) target = $region25
    $region24: #{tpu_custom_call.1} parent=1 // pred_region
      %s168 = ssub.s32 16, 16
      %169 = vsyncadd [#allocation9], %s168
      %s171 = sshll.u32 [#allocation10], 4
      %s172 = int_to_ptr.vmem [resolvable:$true] %s171
      %174 = dma.hbm_to_vmem [thread:$0]  %s11, 16, %s172, [#allocation9]
    $region25: #{tpu_custom_call.1} parent=1 // pred_fallthru
      _
    // Predicated region
    $region26: #{tpu_custom_call.1} parent=1 // pred_check
      _
    $region27: #{tpu_custom_call.1} parent=1 // pred_check_branch
      %176 = sbr.rel (0) target = $region29
    $region28: #{tpu_custom_call.1} parent=1 // pred_region
      %s178 = ssub.s32 16, 16
      %179 = vsyncadd [#allocation12], %s178
      %s181 = sshll.u32 [#allocation11], 4
      %s182 = int_to_ptr.vmem [resolvable:$true] %s181
      %184 = dma.hbm_to_vmem [thread:$0]  %s13, 16, %s182, [#allocation12]
    $region29: #{tpu_custom_call.1} parent=1 // pred_fallthru
      _
    // Predicated region
    $region30: #{tpu_custom_call.1} parent=1 // pred_check
      _
    $region31: #{tpu_custom_call.1} parent=1 // pred_check_branch
      %186 = sbr.rel (0) target = $region33
    $region32: #{tpu_custom_call.1} parent=1 // pred_region
      %s188 = ssub.s32 16, 16
      %189 = vsyncadd [#allocation12], %s188
      %s191 = sshll.u32 [#allocation13], 4
      %s192 = int_to_ptr.vmem [resolvable:$true] %s191
      %194 = dma.hbm_to_vmem [thread:$0]  %s15, 16, %s192, [#allocation12]
    $region33: #{tpu_custom_call.1} parent=1 // pred_fallthru
      _
    // Predicated region
    $region34: #{tpu_custom_call.1} parent=1 // pred_check
      _
    $region35: #{tpu_custom_call.1} parent=1 // pred_check_branch
      %196 = sbr.rel (0) target = $region37
    $region36: #{tpu_custom_call.1} parent=1 // pred_region
      %s198 = ssub.s32 16, 16
      %199 = vsyncadd [#allocation15], %s198
      %s201 = sshll.u32 [#allocation14], 4
      %s202 = int_to_ptr.vmem [resolvable:$true] %s201
      %204 = dma.hbm_to_vmem [thread:$0]  %s17, 16, %s202, [#allocation15]
    $region37: #{tpu_custom_call.1} parent=1 // pred_fallthru
      _
    // Predicated region
    $region38: #{tpu_custom_call.1} parent=1 // pred_check
      _
    $region39: #{tpu_custom_call.1} parent=1 // pred_check_branch
      %206 = sbr.rel (0) target = $region41
    $region40: #{tpu_custom_call.1} parent=1 // pred_region
      %s208 = ssub.s32 16, 16
      %209 = vsyncadd [#allocation15], %s208
      %s211 = sshll.u32 [#allocation16], 4
      %s212 = int_to_ptr.vmem [resolvable:$true] %s211
      %214 = dma.hbm_to_vmem [thread:$0]  %s19, 16, %s212, [#allocation15]
    $region41: #{tpu_custom_call.1} parent=1 // pred_fallthru
      _
    // Predicated region
    $region42: #{tpu_custom_call.1} parent=1 // pred_check
      _
    $region43: #{tpu_custom_call.1} parent=1 // pred_check_branch
      %216 = sbr.rel (0) target = $region45
    $region44: #{tpu_custom_call.1} parent=1 // pred_region
      %s218 = ssub.s32 16, 16
      %219 = vsyncadd [#allocation18], %s218
      %s221 = sshll.u32 [#allocation17], 4
      %s222 = int_to_ptr.vmem [resolvable:$true] %s221
      %224 = dma.hbm_to_vmem [thread:$0]  %s21, 16, %s222, [#allocation18]
    $region45: #{tpu_custom_call.1} parent=1 // pred_fallthru
      _
    // Predicated region
    $region46: #{tpu_custom_call.1} parent=1 // pred_check
      _
    $region47: #{tpu_custom_call.1} parent=1 // pred_check_branch
      %226 = sbr.rel (0) target = $region49
    $region48: #{tpu_custom_call.1} parent=1 // pred_region
      %s228 = ssub.s32 16, 16
      %229 = vsyncadd [#allocation18], %s228
      %s231 = sshll.u32 [#allocation19], 4
      %s232 = int_to_ptr.vmem [resolvable:$true] %s231
      %234 = dma.hbm_to_vmem [thread:$0]  %s23, 16, %s232, [#allocation18]
    $region49: #{tpu_custom_call.1} parent=1 // pred_fallthru
      _
    // Predicated region
    $region50: #{tpu_custom_call.1} parent=1 // pred_check
      _
    $region51: #{tpu_custom_call.1} parent=1 // pred_check_branch
      %236 = sbr.rel (0) target = $region53
    $region52: #{tpu_custom_call.1} parent=1 // pred_region
      _
    $region53: #{tpu_custom_call.1} parent=1 // pred_fallthru
      _
    // Predicated region
    $region54: #{tpu_custom_call.1} parent=1 // pred_check
      _
    $region55: #{tpu_custom_call.1} parent=1 // pred_check_branch
      %238 = sbr.rel (0) target = $region57
    $region56: #{tpu_custom_call.1} parent=1 // pred_region
      _
    $region57: #{tpu_custom_call.1} parent=1 // pred_fallthru
      _
    // Predicated region
    $region58: #{tpu_custom_call.1} parent=1 // pred_check
      _
    $region59: #{tpu_custom_call.1} parent=1 // pred_check_branch
      %240 = sbr.rel (0) target = $region61
    $region60: #{tpu_custom_call.1} parent=1 // pred_region
      _
    $region61: #{tpu_custom_call.1} parent=1 // pred_fallthru
      _
    // Predicated region
    $region62: #{tpu_custom_call.1} parent=1 // pred_check
      _
    $region63: #{tpu_custom_call.1} parent=1 // pred_check_branch
      %242 = sbr.rel (0) target = $region65
    $region64: #{tpu_custom_call.1} parent=1 // pred_region
      _
    $region65: #{tpu_custom_call.1} parent=1 // pred_fallthru
      _
    // Predicated region
    $region66: #{tpu_custom_call.1} parent=1 // pred_check
      _
    $region67: #{tpu_custom_call.1} parent=1 // pred_check_branch
      %244 = sbr.rel (0) target = $region69
    $region68: #{tpu_custom_call.1} parent=1 // pred_region
      _
    $region69: #{tpu_custom_call.1} parent=1 // pred_fallthru
      _
    // Predicated region
    $region70: #{tpu_custom_call.1} parent=1 // pred_check
      _
    $region71: #{tpu_custom_call.1} parent=1 // pred_check_branch
      %246 = sbr.rel (0) target = $region73
    $region72: #{tpu_custom_call.1} parent=1 // pred_region
      _
    $region73: #{tpu_custom_call.1} parent=1 // pred_fallthru
      _
    // Predicated region
    $region74: #{tpu_custom_call.1} parent=1 // pred_check
      _
    $region75: #{tpu_custom_call.1} parent=1 // pred_check_branch
      %248 = sbr.rel (0) target = $region77
    $region76: #{tpu_custom_call.1} parent=1 // pred_region
      %s250 = ssub.s32 256, 256
      %251 = vsyncadd [#allocation21], %s250
      %s252 = sshll.u32 [#allocation20], 4
      %s253 = int_to_ptr.vmem [resolvable:$true] %s252
      %258 = dma.hbm_to_vmem [thread:$0]  %s37, 256, %s253, [#allocation21], 128, 128, 8
    $region77: #{tpu_custom_call.1} parent=1 // pred_fallthru
      _
    // Predicated region
    $region78: #{tpu_custom_call.1} parent=1 // pred_check
      _
    $region79: #{tpu_custom_call.1} parent=1 // pred_check_branch
      %260 = sbr.rel (0) target = $region81
    $region80: #{tpu_custom_call.1} parent=1 // pred_region
      _
    $region81: #{tpu_custom_call.1} parent=1 // pred_fallthru
      _
    // Predicated region
    $region82: #{tpu_custom_call.1} parent=1 // pred_check
      _
    $region83: #{tpu_custom_call.1} parent=1 // pred_check_branch
      %262 = sbr.rel (0) target = $region85
    $region84: #{tpu_custom_call.1} parent=1 // pred_region
      _
    $region85: #{tpu_custom_call.1} parent=1 // pred_fallthru
      _
    // Predicated region
    $region86: #{tpu_custom_call.1} parent=1 // pred_check
      _
    $region87: #{tpu_custom_call.1} parent=1 // pred_check_branch
      %264 = sbr.rel (0) target = $region89
    $region88: #{tpu_custom_call.1} parent=1 // pred_region
      _
    $region89: #{tpu_custom_call.1} parent=1 // pred_fallthru
      _
    // Predicated region
    $region90: #{tpu_custom_call.1} parent=1 // pred_check
      _
    $region91: #{tpu_custom_call.1} parent=1 // pred_check_branch
      %266 = sbr.rel (0) target = $region93
    $region92: #{tpu_custom_call.1} parent=1 // pred_region
      %s268 = ssub.s32 256, 256
      %269 = vsyncadd [#allocation21], %s268
      %s270 = sshll.u32 [#allocation22], 4
      %s271 = int_to_ptr.vmem [resolvable:$true] %s270
      %276 = dma.hbm_to_vmem [thread:$0]  %s45, 256, %s271, [#allocation21], 128, 128, 8
    $region93: #{tpu_custom_call.1} parent=1 // pred_fallthru
      _
    // Predicated region
    $region94: #{tpu_custom_call.1} parent=1 // pred_check
      _
    $region95: #{tpu_custom_call.1} parent=1 // pred_check_branch
      %278 = sbr.rel (0) target = $region97
    $region96: #{tpu_custom_call.1} parent=1 // pred_region
      _
    $region97: #{tpu_custom_call.1} parent=1 // pred_fallthru
      _
    // Predicated region
    $region98: #{tpu_custom_call.1} parent=1 // pred_check
      _
    $region99: #{tpu_custom_call.1} parent=1 // pred_check_branch
      %280 = sbr.rel (0) target = $region101
    $region100: #{tpu_custom_call.1} parent=1 // pred_region
      _
    $region101: #{tpu_custom_call.1} parent=1 // pred_fallthru
      _
    // Predicated region
    $region102: #{tpu_custom_call.1} parent=1 // pred_check
      _
    $region103: #{tpu_custom_call.1} parent=1 // pred_check_branch
      %282 = sbr.rel (0) target = $region105
    $region104: #{tpu_custom_call.1} parent=1 // pred_region
      _
    $region105: #{tpu_custom_call.1} parent=1 // pred_fallthru
      _
    // Predicated region
    $region106: #{tpu_custom_call.1} parent=1 // pred_check
      _
    $region107: #{tpu_custom_call.1} parent=1 // pred_check_branch
      %284 = sbr.rel (0) target = $region109
    $region108: #{tpu_custom_call.1} parent=1 // pred_region
      _
    $region109: #{tpu_custom_call.1} parent=1 // pred_fallthru
      _
    // Predicated region
    $region110: #{tpu_custom_call.1} parent=1 // pred_check
      _
    $region111: #{tpu_custom_call.1} parent=1 // pred_check_branch
      %286 = sbr.rel (0) target = $region113
    $region112: #{tpu_custom_call.1} parent=1 // pred_region
      _
    $region113: #{tpu_custom_call.1} parent=1 // pred_fallthru
      _
    // Predicated region
    $region114: #{tpu_custom_call.1} parent=1 // pred_check
      _
    $region115: #{tpu_custom_call.1} parent=1 // pred_check_branch
      %288 = sbr.rel (0) target = $region117
    $region116: #{tpu_custom_call.1} parent=1 // pred_region
      %s290 = ssub.s32 128, 128
      %291 = vsyncadd [#allocation24], %s290
      %s293 = sshll.u32 [#allocation23], 4
      %s294 = int_to_ptr.vmem [resolvable:$true] %s293
      %296 = dma.hbm_to_vmem [thread:$0]  %s57, 128, %s294, [#allocation24]
    $region117: #{tpu_custom_call.1} parent=1 // pred_fallthru
      _
    // Predicated region
    $region118: #{tpu_custom_call.1} parent=1 // pred_check
      _
    $region119: #{tpu_custom_call.1} parent=1 // pred_check_branch
      %298 = sbr.rel (0) target = $region121
    $region120: #{tpu_custom_call.1} parent=1 // pred_region
      _
    $region121: #{tpu_custom_call.1} parent=1 // pred_fallthru
      _
    // Predicated region
    $region122: #{tpu_custom_call.1} parent=1 // pred_check
      _
    $region123: #{tpu_custom_call.1} parent=1 // pred_check_branch
      %300 = sbr.rel (0) target = $region125
    $region124: #{tpu_custom_call.1} parent=1 // pred_region
      _
    $region125: #{tpu_custom_call.1} parent=1 // pred_fallthru
      _
    // Predicated region
    $region126: #{tpu_custom_call.1} parent=1 // pred_check
      _
    $region127: #{tpu_custom_call.1} parent=1 // pred_check_branch
      %302 = sbr.rel (0) target = $region129
    $region128: #{tpu_custom_call.1} parent=1 // pred_region
      _
    $region129: #{tpu_custom_call.1} parent=1 // pred_fallthru
      _
    // Predicated region
    $region130: #{tpu_custom_call.1} parent=1 // pred_check
      _
    $region131: #{tpu_custom_call.1} parent=1 // pred_check_branch
      %304 = sbr.rel (0) target = $region133
    $region132: #{tpu_custom_call.1} parent=1 // pred_region
      _
    $region133: #{tpu_custom_call.1} parent=1 // pred_fallthru
      _
    // Predicated region
    $region134: #{tpu_custom_call.1} parent=1 // pred_check
      _
    $region135: #{tpu_custom_call.1} parent=1 // pred_check_branch
      %306 = sbr.rel (0) target = $region137
    $region136: #{tpu_custom_call.1} parent=1 // pred_region
      _
    $region137: #{tpu_custom_call.1} parent=1 // pred_fallthru
      _
    // Predicated region
    $region138: #{tpu_custom_call.1} parent=1 // pred_check
      _
    $region139: #{tpu_custom_call.1} parent=1 // pred_check_branch
      %308 = sbr.rel (0) target = $region141
    $region140: #{tpu_custom_call.1} parent=1 // pred_region
      _
    $region141: #{tpu_custom_call.1} parent=1 // pred_fallthru
      _
    // Predicated region
    $region142: #{tpu_custom_call.1} parent=1 // pred_check
      _
    $region143: #{tpu_custom_call.1} parent=1 // pred_check_branch
      %310 = sbr.rel (0) target = $region145
    $region144: #{tpu_custom_call.1} parent=1 // pred_region
      _
    $region145: #{tpu_custom_call.1} parent=1 // pred_fallthru
      _
    // Predicated region
    $region146: #{tpu_custom_call.1} parent=1 // pred_check
      _
    $region147: #{tpu_custom_call.1} parent=1 // pred_check_branch
      %312 = sbr.rel (0) target = $region149
    $region148: #{tpu_custom_call.1} parent=1 // pred_region
      _
    $region149: #{tpu_custom_call.1} parent=1 // pred_fallthru
      _
    // Predicated region
    $region150: #{tpu_custom_call.1} parent=1 // pred_check
      _
    $region151: #{tpu_custom_call.1} parent=1 // pred_check_branch
      %314 = sbr.rel (0) target = $region153
    $region152: #{tpu_custom_call.1} parent=1 // pred_region
      _
    $region153: #{tpu_custom_call.1} parent=1 // pred_fallthru
      _
    // Predicated region
    $region154: #{tpu_custom_call.1} parent=1 // pred_check
      _
    $region155: #{tpu_custom_call.1} parent=1 // pred_check_branch
      %316 = sbr.rel (0) target = $region157
    $region156: #{tpu_custom_call.1} parent=1 // pred_region
      _
    $region157: #{tpu_custom_call.1} parent=1 // pred_fallthru
      _
    // Predicated region
    $region158: #{tpu_custom_call.1} parent=1 // pred_check
      _
    $region159: #{tpu_custom_call.1} parent=1 // pred_check_branch
      %318 = sbr.rel (0) target = $region161
    $region160: #{tpu_custom_call.1} parent=1 // pred_region
      _
    $region161: #{tpu_custom_call.1} parent=1 // pred_fallthru
      _
    // Predicated region
    $region162: #{tpu_custom_call.1} parent=1 // pred_check
      _
    $region163: #{tpu_custom_call.1} parent=1 // pred_check_branch
      %320 = sbr.rel (0) target = $region165
    $region164: #{tpu_custom_call.1} parent=1 // pred_region
      _
    $region165: #{tpu_custom_call.1} parent=1 // pred_fallthru
      _
    // Predicated region
    $region166: #{tpu_custom_call.1} parent=1 // pred_check
      _
    $region167: #{tpu_custom_call.1} parent=1 // pred_check_branch
      %322 = sbr.rel (0) target = $region169
    $region168: #{tpu_custom_call.1} parent=1 // pred_region
      _
    $region169: #{tpu_custom_call.1} parent=1 // pred_fallthru
      _
    // Predicated region
    $region170: #{tpu_custom_call.1} parent=1 // pred_check
      _
    $region171: #{tpu_custom_call.1} parent=1 // pred_check_branch
      %324 = sbr.rel (0) target = $region173
    $region172: #{tpu_custom_call.1} parent=1 // pred_region
      _
    $region173: #{tpu_custom_call.1} parent=1 // pred_fallthru
      _
    // Predicated region
    $region174: #{tpu_custom_call.1} parent=1 // pred_check
      _
    $region175: #{tpu_custom_call.1} parent=1 // pred_check_branch
      %326 = sbr.rel (0) target = $region177
    $region176: #{tpu_custom_call.1} parent=1 // pred_region
      _
    $region177: #{tpu_custom_call.1} parent=1 // pred_fallthru
      _
    // Predicated region
    $region178: #{tpu_custom_call.1} parent=1 // pred_check
      _
    $region179: #{tpu_custom_call.1} parent=1 // pred_check_branch
      %328 = sbr.rel (0) target = $region181
    $region180: #{tpu_custom_call.1} parent=1 // pred_region
      _
    $region181: #{tpu_custom_call.1} parent=1 // pred_fallthru
      _
    // Predicated region
    $region182: #{tpu_custom_call.1} parent=1 // pred_check
      _
    $region183: #{tpu_custom_call.1} parent=1 // pred_check_branch
      %330 = sbr.rel (0) target = $region185
    $region184: #{tpu_custom_call.1} parent=1 // pred_region
      _
    $region185: #{tpu_custom_call.1} parent=1 // pred_fallthru
      _
    // Predicated region
    $region186: #{tpu_custom_call.1} parent=1 // pred_check
      _
    $region187: #{tpu_custom_call.1} parent=1 // pred_check_branch
      %332 = sbr.rel (0) target = $region189
    $region188: #{tpu_custom_call.1} parent=1 // pred_region
      _
    $region189: #{tpu_custom_call.1} parent=1 // pred_fallthru
      _
    // Predicated region
    $region190: #{tpu_custom_call.1} parent=1 // pred_check
      _
    $region191: #{tpu_custom_call.1} parent=1 // pred_check_branch
      %334 = sbr.rel (0) target = $region193
    $region192: #{tpu_custom_call.1} parent=1 // pred_region
      _
    $region193: #{tpu_custom_call.1} parent=1 // pred_fallthru
      _
    // Predicated region
    $region194: #{tpu_custom_call.1} parent=1 // pred_check
      _
    $region195: #{tpu_custom_call.1} parent=1 // pred_check_branch
      %336 = sbr.rel (0) target = $region197
    $region196: #{tpu_custom_call.1} parent=1 // pred_region
      _
    $region197: #{tpu_custom_call.1} parent=1 // pred_fallthru
      _
    // Predicated region
    $region198: #{tpu_custom_call.1} parent=1 // pred_check
      _
    $region199: #{tpu_custom_call.1} parent=1 // pred_check_branch
      %338 = sbr.rel (0) target = $region201
    $region200: #{tpu_custom_call.1} parent=1 // pred_region
      _
    $region201: #{tpu_custom_call.1} parent=1 // pred_fallthru
      _
    // Predicated region
    $region202: #{tpu_custom_call.1} parent=1 // pred_check
      _
    $region203: #{tpu_custom_call.1} parent=1 // pred_check_branch
      %340 = sbr.rel (0) target = $region205
    $region204: #{tpu_custom_call.1} parent=1 // pred_region
      _
    $region205: #{tpu_custom_call.1} parent=1 // pred_fallthru
      _
    // Predicated region
    $region206: #{tpu_custom_call.1} parent=1 // pred_check
      _
    $region207: #{tpu_custom_call.1} parent=1 // pred_check_branch
      %342 = sbr.rel (0) target = $region209
    $region208: #{tpu_custom_call.1} parent=1 // pred_region
      _
    $region209: #{tpu_custom_call.1} parent=1 // pred_fallthru
      _
    // Predicated region
    $region210: #{tpu_custom_call.1} parent=1 // pred_check
      _
    $region211: #{tpu_custom_call.1} parent=1 // pred_check_branch
      %344 = sbr.rel (0) target = $region213
    $region212: #{tpu_custom_call.1} parent=1 // pred_region
      _
    $region213: #{tpu_custom_call.1} parent=1 // pred_fallthru
      _
    // Predicated region
    $region214: #{tpu_custom_call.1} parent=1 // pred_check
      _
    $region215: #{tpu_custom_call.1} parent=1 // pred_check_branch
      %346 = sbr.rel (0) target = $region217
    $region216: #{tpu_custom_call.1} parent=1 // pred_region
      _
    $region217: #{tpu_custom_call.1} parent=1 // pred_fallthru
      _
    // Predicated region
    $region218: #{tpu_custom_call.1} parent=1 // pred_check
      _
    $region219: #{tpu_custom_call.1} parent=1 // pred_check_branch
      %348 = sbr.rel (0) target = $region221
    $region220: #{tpu_custom_call.1} parent=1 // pred_region
      %349 = dma.done [#allocation3], 128
    $region221: #{tpu_custom_call.1} parent=1 // pred_fallthru
      _
    // Predicated region
    $region222: #{tpu_custom_call.1} parent=1 // pred_check
      _
    $region223: #{tpu_custom_call.1} parent=1 // pred_check_branch
      %351 = sbr.rel (0) target = $region225
    $region224: #{tpu_custom_call.1} parent=1 // pred_region
      %352 = dma.done [#allocation6], 128
    $region225: #{tpu_custom_call.1} parent=1 // pred_fallthru
      _
    // Predicated region
    $region226: #{tpu_custom_call.1} parent=1 // pred_check
      _
    $region227: #{tpu_custom_call.1} parent=1 // pred_check_branch
      %354 = sbr.rel (0) target = $region229
    $region228: #{tpu_custom_call.1} parent=1 // pred_region
      %355 = dma.done [#allocation6], 128
    $region229: #{tpu_custom_call.1} parent=1 // pred_fallthru
      _
    // Predicated region
    $region230: #{tpu_custom_call.1} parent=1 // pred_check
      _
    $region231: #{tpu_custom_call.1} parent=1 // pred_check_branch
      %357 = sbr.rel (0) target = $region233
    $region232: #{tpu_custom_call.1} parent=1 // pred_region
      %358 = dma.done [#allocation9], 16
    $region233: #{tpu_custom_call.1} parent=1 // pred_fallthru
      _
    // Predicated region
    $region234: #{tpu_custom_call.1} parent=1 // pred_check
      _
    $region235: #{tpu_custom_call.1} parent=1 // pred_check_branch
      %360 = sbr.rel (0) target = $region237
    $region236: #{tpu_custom_call.1} parent=1 // pred_region
      %361 = dma.done [#allocation9], 16
    $region237: #{tpu_custom_call.1} parent=1 // pred_fallthru
      _
    // Predicated region
    $region238: #{tpu_custom_call.1} parent=1 // pred_check
      _
    $region239: #{tpu_custom_call.1} parent=1 // pred_check_branch
      %363 = sbr.rel (0) target = $region241
    $region240: #{tpu_custom_call.1} parent=1 // pred_region
      %364 = dma.done [#allocation12], 16
    $region241: #{tpu_custom_call.1} parent=1 // pred_fallthru
      _
    // Predicated region
    $region242: #{tpu_custom_call.1} parent=1 // pred_check
      _
    $region243: #{tpu_custom_call.1} parent=1 // pred_check_branch
      %366 = sbr.rel (0) target = $region245
    $region244: #{tpu_custom_call.1} parent=1 // pred_region
      %367 = dma.done [#allocation12], 16
    $region245: #{tpu_custom_call.1} parent=1 // pred_fallthru
      _
    // Predicated region
    $region246: #{tpu_custom_call.1} parent=1 // pred_check
      _
    $region247: #{tpu_custom_call.1} parent=1 // pred_check_branch
      %369 = sbr.rel (0) target = $region249
    $region248: #{tpu_custom_call.1} parent=1 // pred_region
      %370 = dma.done [#allocation15], 16
    $region249: #{tpu_custom_call.1} parent=1 // pred_fallthru
      _
    // Predicated region
    $region250: #{tpu_custom_call.1} parent=1 // pred_check
      _
    $region251: #{tpu_custom_call.1} parent=1 // pred_check_branch
      %372 = sbr.rel (0) target = $region253
    $region252: #{tpu_custom_call.1} parent=1 // pred_region
      %373 = dma.done [#allocation15], 16
    $region253: #{tpu_custom_call.1} parent=1 // pred_fallthru
      _
    // Predicated region
    $region254: #{tpu_custom_call.1} parent=1 // pred_check
      _
    $region255: #{tpu_custom_call.1} parent=1 // pred_check_branch
      %375 = sbr.rel (0) target = $region257
    $region256: #{tpu_custom_call.1} parent=1 // pred_region
      %376 = dma.done [#allocation18], 16
    $region257: #{tpu_custom_call.1} parent=1 // pred_fallthru
      _
    // Predicated region
    $region258: #{tpu_custom_call.1} parent=1 // pred_check
      _
    $region259: #{tpu_custom_call.1} parent=1 // pred_check_branch
      %378 = sbr.rel (0) target = $region261
    $region260: #{tpu_custom_call.1} parent=1 // pred_region
      %379 = dma.done [#allocation18], 16
    $region261: #{tpu_custom_call.1} parent=1 // pred_fallthru
      _
    // Predicated region
    $region262: #{tpu_custom_call.1} parent=1 // pred_check
      _
    $region263: #{tpu_custom_call.1} parent=1 // pred_check_branch
      %381 = sbr.rel (0) target = $region265
    $region264: #{tpu_custom_call.1} parent=1 // pred_region
      %382 = dma.done [#allocation21], 256
    $region265: #{tpu_custom_call.1} parent=1 // pred_fallthru
      _
    // Predicated region
    $region266: #{tpu_custom_call.1} parent=1 // pred_check
      _
    $region267: #{tpu_custom_call.1} parent=1 // pred_check_branch
      %384 = sbr.rel (0) target = $region269
    $region268: #{tpu_custom_call.1} parent=1 // pred_region
      %385 = dma.done [#allocation21], 256
    $region269: #{tpu_custom_call.1} parent=1 // pred_fallthru
      _
    // Predicated region
    $region270: #{tpu_custom_call.1} parent=1 // pred_check
      _
    $region271: #{tpu_custom_call.1} parent=1 // pred_check_branch
      %387 = sbr.rel (0) target = $region273
    $region272: #{tpu_custom_call.1} parent=1 // pred_region
      %388 = dma.done [#allocation24], 128
    $region273: #{tpu_custom_call.1} parent=1 // pred_fallthru
      _
    %v389 = vld [vmem:[#allocation7] sm:$0xff]
    %v390 = vld [vmem:[%s81] sm:$0xff]
    %v391 = vld [vmem:[%s81 + $0x8] sm:$0xff]
    %v392 = vld [vmem:[%s81 + $0x10] sm:$0xff]
    %v393 = vld [vmem:[%s81 + $0x18] sm:$0xff]
    %vm394 = vcmask 1047680
    %395 = vrot.lane.b32.xlu0 %v389, 16
    %v396 = vpop.permute.xlu0 %395
    %v397 = vsel %vm394, %v396, %v389
    %398 = vrot.lane.b32.xlu0 %v397, 16
    %v399 = vpop.permute.xlu0 %398
    %v400 = vsel %vm394, %v399, %v389
    %v401 = vld [vmem:[#allocation8] sm:$0x1]
    %v403 = vlaneseq
    %v404 = vshrl.u32 %v403, 7
    %v405 = vsub.s32 0, %v404
    %v406 = vrot.slane %v401, %v405
    %407 = vrot.lane.b32.xlu0 %v406, 15
    %v408 = vpop.permute.xlu0 %407
    %v410 = vmul.f32 %v400, %v408
    %v411 = vld [vmem:[#allocation10] sm:$0x1]
    %v413 = vlaneseq
    %v414 = vshrl.u32 %v413, 7
    %v415 = vsub.s32 0, %v414
    %v416 = vrot.slane %v411, %v415
    %417 = vrot.lane.b32.xlu0 %v416, 1
    %v418 = vpop.permute.xlu0 %417
    %v420 = vmul.f32 %v400, %v418
    %422 = vrot.lane.b32.xlu0 %v389, 15
    %v423 = vpop.permute.xlu0 %422
    %425 = vrot.lane.b32.xlu0 %v420, 14
    %v426 = vpop.permute.xlu0 %425
    %v427 = vld [vmem:[%s83] sm:$0xff]
    %v428 = vld [vmem:[%s83 + $0x8] sm:$0xff]
    %v429 = vld [vmem:[%s83 + $0x10] sm:$0xff]
    %v430 = vld [vmem:[%s83 + $0x18] sm:$0xff]
    %432 = vset.pattern.permute.xlu0 0
    %433 = vperm.xlu0 %432, %v427
    %v434 = vpop.permute.xlu0 %433
    %437 = vset.pattern.permute.xlu0 0
    %438 = vperm.xlu0 %437, %v428
    %v439 = vpop.permute.xlu0 %438
    %442 = vset.pattern.permute.xlu0 0
    %443 = vperm.xlu0 %442, %v429
    %v444 = vpop.permute.xlu0 %443
    %447 = vset.pattern.permute.xlu0 0
    %448 = vperm.xlu0 %447, %v430
    %v449 = vpop.permute.xlu0 %448
    %452 = vrot.lane.b32.xlu0 %v410, 113
    %v453 = vpop.permute.xlu0 %452
    %454 = vrot.lane.b32.xlu0 %v423, 113
    %v455 = vpop.permute.xlu0 %454
    %456 = vrot.lane.b32.xlu0 %v426, 113
    %v457 = vpop.permute.xlu0 %456
    %vm461 = vcmask 195584
    %v463 = vsel %vm461, %v390, 0
    %v466 = vsel %vm461, %v391, 0
    %v469 = vsel %vm461, %v392, 0
    %v472 = vsel %vm461, %v393, 0
    %474 = vmatprep.subr.mxu0 0.0
    %475 = vmatpush1.msra.mxu0 %v453
    %476 = vmatprep.subr.mxu0 0.0
    %477 = vmatpush1.msra.mxu0 %v455
    %478 = vmatprep.subr.mxu0 0.0
    %479 = vmatpush1.msra.mxu0 %v457
    %480 = vmatprep.subr.mxu0 0.0
    %481 = vmatpush1.msra.mxu0 0.0
    %482 = vmatprep.subr.mxu0 0.0
    %483 = vmatpush1.msra.mxu0 0.0
    %484 = vmatprep.subr.mxu0 0.0
    %485 = vmatpush1.msra.mxu0 0.0
    %486 = vmatprep.subr.mxu0 0.0
    %487 = vmatpush1.msra.mxu0 0.0
    %488 = vmatprep.subr.mxu0 0.0
    %489 = vmatpush1.msra.mxu0 0.0
    %490 = vmatprep.subr.mxu0 0.0
    %491 = vmatpush1.msra.mxu0 0.0
    %492 = vmatprep.subr.mxu0 0.0
    %493 = vmatpush1.msra.mxu0 0.0
    %494 = vmatprep.subr.mxu0 0.0
    %495 = vmatpush1.msra.mxu0 0.0
    %496 = vmatprep.subr.mxu0 0.0
    %497 = vmatpush1.msra.mxu0 0.0
    %498 = vmatprep.subr.mxu0 0.0
    %499 = vmatpush1.msra.mxu0 0.0
    %500 = vmatprep.subr.mxu0 0.0
    %501 = vmatpush1.msra.mxu0 0.0
    %502 = vmatprep.subr.mxu0 0.0
    %503 = vmatpush1.msra.mxu0 0.0
    %504 = vmatprep.subr.mxu0 0.0
    %505 = vmatpush1.msra.mxu0 0.0
    %506 = vmatprep.subr.mxu0 0.0
    %507 = vmatpush1.msra.mxu0 0.0
    %508 = vmatprep.subr.mxu0 0.0
    %509 = vmatpush1.msra.mxu0 0.0
    %510 = vmatprep.subr.mxu0 0.0
    %511 = vmatpush1.msra.mxu0 0.0
    %512 = vmatprep.subr.mxu0 0.0
    %513 = vmatpush1.msra.mxu0 0.0
    %514 = vmatprep.subr.mxu0 0.0
    %515 = vmatpush1.msra.mxu0 0.0
    %516 = vmatprep.subr.mxu0 0.0
    %517 = vmatpush1.msra.mxu0 0.0
    %518 = vmatprep.subr.mxu0 0.0
    %519 = vmatpush1.msra.mxu0 0.0
    %520 = vmatprep.subr.mxu0 0.0
    %521 = vmatpush1.msra.mxu0 0.0
    %522 = vmatprep.subr.mxu0 0.0
    %523 = vmatpush1.msra.mxu0 0.0
    %524 = vmatprep.subr.mxu0 0.0
    %525 = vmatpush1.msra.mxu0 0.0
    %526 = vmatprep.subr.mxu0 0.0
    %527 = vmatpush1.msra.mxu0 0.0
    %528 = vmatprep.subr.mxu0 0.0
    %529 = vmatpush1.msra.mxu0 0.0
    %530 = vmatprep.subr.mxu0 0.0
    %531 = vmatpush1.msra.mxu0 0.0
    %532 = vmatprep.subr.mxu0 0.0
    %533 = vmatpush1.msra.mxu0 0.0
    %534 = vmatprep.subr.mxu0 0.0
    %535 = vmatpush1.msra.mxu0 0.0
    %536 = vmatprep.subr.mxu0 0.0
    %537 = vmatpush1.msra.mxu0 0.0
    %538 = vmatprep.mubr.f32.mxu0 0.0
    %539 = vmatmul.mubr.f32.gmra.mrb[0].mxu0 %v463
    %v540 = vpop.f32.mrb[0].mxu0
    %v541 = vadd.f32 %v434, %v540
    %v542 = vpop.f32.mrb[0].mxu0
    %543 = vmatprep.mubr.f32.mxu0 0.0
    %544 = vmatmul.mubr.f32.gmra.mrb[0].mxu0 %v466
    %v545 = vpop.f32.mrb[0].mxu0
    %v546 = vadd.f32 %v439, %v545
    %v547 = vpop.f32.mrb[0].mxu0
    %548 = vmatprep.mubr.f32.mxu0 0.0
    %549 = vmatmul.mubr.f32.gmra.mrb[0].mxu0 %v469
    %v550 = vpop.f32.mrb[0].mxu0
    %v551 = vadd.f32 %v444, %v550
    %v552 = vpop.f32.mrb[0].mxu0
    %553 = vmatprep.mubr.f32.mxu0 0.0
    %554 = vmatmul.mubr.f32.gmra.mrb[0].mxu0 %v472
    %v555 = vpop.f32.mrb[0].mxu0
    %v556 = vadd.f32 %v449, %v555
    %v557 = vpop.f32.mrb[0].mxu0
    %558 = vdwg.mxu0
    %v559 = vmax.f32 %v541, 0.0
    %v560 = vmax.f32 %v546, 0.0
    %v561 = vmax.f32 %v551, 0.0
    %v562 = vmax.f32 %v556, 0.0
    %v563 = vld [vmem:[%s85] sm:$0xff]
    %v564 = vld [vmem:[%s85 + $0x8] sm:$0xff]
    %565 = vrot.lane.b32.xlu0 %v559, 16
    %v566 = vpop.permute.xlu0 %565
    %v567 = vsel %vm394, %v566, %v559
    %568 = vrot.lane.b32.xlu0 %v560, 16
    %v569 = vpop.permute.xlu0 %568
    %v570 = vsel %vm394, %v569, %v560
    %571 = vrot.lane.b32.xlu0 %v561, 16
    %v572 = vpop.permute.xlu0 %571
    %v573 = vsel %vm394, %v572, %v561
    %574 = vrot.lane.b32.xlu0 %v562, 16
    %v575 = vpop.permute.xlu0 %574
    %v576 = vsel %vm394, %v575, %v562
    %577 = vrot.lane.b32.xlu0 %v567, 16
    %v578 = vpop.permute.xlu0 %577
    %579 = vrot.lane.b32.xlu0 %v570, 16
    %v580 = vpop.permute.xlu0 %579
    %581 = vrot.lane.b32.xlu0 %v573, 16
    %v582 = vpop.permute.xlu0 %581
    %583 = vrot.lane.b32.xlu0 %v576, 16
    %v584 = vpop.permute.xlu0 %583
    %v585 = vsel %vm394, %v578, %v559
    %v586 = vsel %vm394, %v580, %v560
    %v587 = vsel %vm394, %v582, %v561
    %v588 = vsel %vm394, %v584, %v562
    %v589 = vmul.f32 %v585, %v408
    %v590 = vmul.f32 %v586, %v408
    %v591 = vmul.f32 %v587, %v408
    %v592 = vmul.f32 %v588, %v408
    %v593 = vmul.f32 %v585, %v418
    %v594 = vmul.f32 %v586, %v418
    %v595 = vmul.f32 %v587, %v418
    %v596 = vmul.f32 %v588, %v418
    %601 = vrot.lane.b32.xlu0 %v559, 15
    %v602 = vpop.permute.xlu0 %601
    %603 = vrot.lane.b32.xlu0 %v560, 15
    %v604 = vpop.permute.xlu0 %603
    %605 = vrot.lane.b32.xlu0 %v561, 15
    %v606 = vpop.permute.xlu0 %605
    %607 = vrot.lane.b32.xlu0 %v562, 15
    %v608 = vpop.permute.xlu0 %607
    %613 = vrot.lane.b32.xlu0 %v593, 14
    %v614 = vpop.permute.xlu0 %613
    %615 = vrot.lane.b32.xlu0 %v594, 14
    %v616 = vpop.permute.xlu0 %615
    %617 = vrot.lane.b32.xlu0 %v595, 14
    %v618 = vpop.permute.xlu0 %617
    %619 = vrot.lane.b32.xlu0 %v596, 14
    %v620 = vpop.permute.xlu0 %619
    %v621 = vld [vmem:[%s87] sm:$0xff]
    %v622 = vld [vmem:[%s87 + $0x8] sm:$0xff]
    %624 = vset.pattern.permute.xlu0 0
    %625 = vperm.xlu0 %624, %v621
    %v626 = vpop.permute.xlu0 %625
    %629 = vset.pattern.permute.xlu0 0
    %630 = vperm.xlu0 %629, %v622
    %v631 = vpop.permute.xlu0 %630
    %637 = vrot.lane.b32.xlu0 %v589, 113
    %v638 = vpop.permute.xlu0 %637
    %639 = vrot.lane.b32.xlu0 %v590, 113
    %v640 = vpop.permute.xlu0 %639
    %641 = vrot.lane.b32.xlu0 %v591, 113
    %v642 = vpop.permute.xlu0 %641
    %643 = vrot.lane.b32.xlu0 %v592, 113
    %v644 = vpop.permute.xlu0 %643
    %645 = vrot.lane.b32.xlu0 %v602, 113
    %v646 = vpop.permute.xlu0 %645
    %647 = vrot.lane.b32.xlu0 %v604, 113
    %v648 = vpop.permute.xlu0 %647
    %649 = vrot.lane.b32.xlu0 %v606, 113
    %v650 = vpop.permute.xlu0 %649
    %651 = vrot.lane.b32.xlu0 %v608, 113
    %v652 = vpop.permute.xlu0 %651
    %653 = vrot.lane.b32.xlu0 %v614, 113
    %v654 = vpop.permute.xlu0 %653
    %655 = vrot.lane.b32.xlu0 %v616, 113
    %v656 = vpop.permute.xlu0 %655
    %657 = vrot.lane.b32.xlu0 %v618, 113
    %v658 = vpop.permute.xlu0 %657
    %659 = vrot.lane.b32.xlu0 %v620, 113
    %v660 = vpop.permute.xlu0 %659
    %vm673 = vcmask 785408
    %v675 = vsel %vm673, %v563, 0
    %v678 = vsel %vm673, %v564, 0
    %680 = vmatprep.subr.mxu0 0.0
    %681 = vmatpush1.msra.mxu0 %v638
    %682 = vmatprep.subr.mxu0 0.0
    %683 = vmatpush1.msra.mxu0 %v640
    %684 = vmatprep.subr.mxu0 0.0
    %685 = vmatpush1.msra.mxu0 %v642
    %686 = vmatprep.subr.mxu0 0.0
    %687 = vmatpush1.msra.mxu0 %v644
    %688 = vmatprep.subr.mxu0 0.0
    %689 = vmatpush1.msra.mxu0 %v646
    %690 = vmatprep.subr.mxu0 0.0
    %691 = vmatpush1.msra.mxu0 %v648
    %692 = vmatprep.subr.mxu0 0.0
    %693 = vmatpush1.msra.mxu0 %v650
    %694 = vmatprep.subr.mxu0 0.0
    %695 = vmatpush1.msra.mxu0 %v652
    %696 = vmatprep.subr.mxu0 0.0
    %697 = vmatpush1.msra.mxu0 %v654
    %698 = vmatprep.subr.mxu0 0.0
    %699 = vmatpush1.msra.mxu0 %v656
    %700 = vmatprep.subr.mxu0 0.0
    %701 = vmatpush1.msra.mxu0 %v658
    %702 = vmatprep.subr.mxu0 0.0
    %703 = vmatpush1.msra.mxu0 %v660
    %704 = vmatprep.subr.mxu0 0.0
    %705 = vmatpush1.msra.mxu0 0.0
    %706 = vmatprep.subr.mxu0 0.0
    %707 = vmatpush1.msra.mxu0 0.0
    %708 = vmatprep.subr.mxu0 0.0
    %709 = vmatpush1.msra.mxu0 0.0
    %710 = vmatprep.subr.mxu0 0.0
    %711 = vmatpush1.msra.mxu0 0.0
    %712 = vmatprep.subr.mxu0 0.0
    %713 = vmatpush1.msra.mxu0 0.0
    %714 = vmatprep.subr.mxu0 0.0
    %715 = vmatpush1.msra.mxu0 0.0
    %716 = vmatprep.subr.mxu0 0.0
    %717 = vmatpush1.msra.mxu0 0.0
    %718 = vmatprep.subr.mxu0 0.0
    %719 = vmatpush1.msra.mxu0 0.0
    %720 = vmatprep.subr.mxu0 0.0
    %721 = vmatpush1.msra.mxu0 0.0
    %722 = vmatprep.subr.mxu0 0.0
    %723 = vmatpush1.msra.mxu0 0.0
    %724 = vmatprep.subr.mxu0 0.0
    %725 = vmatpush1.msra.mxu0 0.0
    %726 = vmatprep.subr.mxu0 0.0
    %727 = vmatpush1.msra.mxu0 0.0
    %728 = vmatprep.subr.mxu0 0.0
    %729 = vmatpush1.msra.mxu0 0.0
    %730 = vmatprep.subr.mxu0 0.0
    %731 = vmatpush1.msra.mxu0 0.0
    %732 = vmatprep.subr.mxu0 0.0
    %733 = vmatpush1.msra.mxu0 0.0
    %734 = vmatprep.subr.mxu0 0.0
    %735 = vmatpush1.msra.mxu0 0.0
    %736 = vmatprep.subr.mxu0 0.0
    %737 = vmatpush1.msra.mxu0 0.0
    %738 = vmatprep.subr.mxu0 0.0
    %739 = vmatpush1.msra.mxu0 0.0
    %740 = vmatprep.subr.mxu0 0.0
    %741 = vmatpush1.msra.mxu0 0.0
    %742 = vmatprep.subr.mxu0 0.0
    %743 = vmatpush1.msra.mxu0 0.0
    %744 = vmatprep.mubr.f32.mxu0 0.0
    %745 = vmatmul.mubr.f32.gmra.mrb[0].mxu0 %v675
    %v746 = vpop.f32.mrb[0].mxu0
    %v747 = vadd.f32 %v626, %v746
    %v748 = vpop.f32.mrb[0].mxu0
    %749 = vmatprep.mubr.f32.mxu0 0.0
    %750 = vmatmul.mubr.f32.gmra.mrb[0].mxu0 %v678
    %v751 = vpop.f32.mrb[0].mxu0
    %v752 = vadd.f32 %v631, %v751
    %v753 = vpop.f32.mrb[0].mxu0
    %754 = vdwg.mxu0
    %v755 = vmax.f32 %v747, 0.0
    %v756 = vmax.f32 %v752, 0.0
    %v757 = vld [vmem:[%s89] sm:$0xff]
    %v758 = vld [vmem:[%s89 + $0x8] sm:$0xff]
    %v759 = vld [vmem:[%s89 + $0x10] sm:$0xff]
    %v760 = vld [vmem:[%s89 + $0x18] sm:$0xff]
    %v761 = vld [vmem:[%s91] sm:$0xff]
    %v762 = vld [vmem:[%s91 + $0x8] sm:$0xff]
    %v763 = vld [vmem:[%s91 + $0x10] sm:$0xff]
    %v764 = vld [vmem:[%s91 + $0x18] sm:$0xff]
    %766 = vset.pattern.permute.xlu0 0
    %767 = vperm.xlu0 %766, %v761
    %v768 = vpop.permute.xlu0 %767
    %771 = vset.pattern.permute.xlu0 0
    %772 = vperm.xlu0 %771, %v762
    %v773 = vpop.permute.xlu0 %772
    %776 = vset.pattern.permute.xlu0 0
    %777 = vperm.xlu0 %776, %v763
    %v778 = vpop.permute.xlu0 %777
    %781 = vset.pattern.permute.xlu0 0
    %782 = vperm.xlu0 %781, %v764
    %v783 = vpop.permute.xlu0 %782
    %vm785 = vcmask 130048
    %v787 = vsel %vm785, %v757, 0
    %v790 = vsel %vm785, %v758, 0
    %v793 = vsel %vm785, %v759, 0
    %v796 = vsel %vm785, %v760, 0
    %798 = vmatprep.subr.mxu0 0.0
    %799 = vmatpush1.msra.mxu0 %v755
    %800 = vmatprep.subr.mxu0 0.0
    %801 = vmatpush1.msra.mxu0 %v756
    %802 = vmatprep.subr.mxu0 0.0
    %803 = vmatpush1.msra.mxu0 0.0
    %804 = vmatprep.subr.mxu0 0.0
    %805 = vmatpush1.msra.mxu0 0.0
    %806 = vmatprep.subr.mxu0 0.0
    %807 = vmatpush1.msra.mxu0 0.0
    %808 = vmatprep.subr.mxu0 0.0
    %809 = vmatpush1.msra.mxu0 0.0
    %810 = vmatprep.subr.mxu0 0.0
    %811 = vmatpush1.msra.mxu0 0.0
    %812 = vmatprep.subr.mxu0 0.0
    %813 = vmatpush1.msra.mxu0 0.0
    %814 = vmatprep.subr.mxu0 0.0
    %815 = vmatpush1.msra.mxu0 0.0
    %816 = vmatprep.subr.mxu0 0.0
    %817 = vmatpush1.msra.mxu0 0.0
    %818 = vmatprep.subr.mxu0 0.0
    %819 = vmatpush1.msra.mxu0 0.0
    %820 = vmatprep.subr.mxu0 0.0
    %821 = vmatpush1.msra.mxu0 0.0
    %822 = vmatprep.subr.mxu0 0.0
    %823 = vmatpush1.msra.mxu0 0.0
    %824 = vmatprep.subr.mxu0 0.0
    %825 = vmatpush1.msra.mxu0 0.0
    %826 = vmatprep.subr.mxu0 0.0
    %827 = vmatpush1.msra.mxu0 0.0
    %828 = vmatprep.subr.mxu0 0.0
    %829 = vmatpush1.msra.mxu0 0.0
    %830 = vmatprep.subr.mxu0 0.0
    %831 = vmatpush1.msra.mxu0 0.0
    %832 = vmatprep.subr.mxu0 0.0
    %833 = vmatpush1.msra.mxu0 0.0
    %834 = vmatprep.subr.mxu0 0.0
    %835 = vmatpush1.msra.mxu0 0.0
    %836 = vmatprep.subr.mxu0 0.0
    %837 = vmatpush1.msra.mxu0 0.0
    %838 = vmatprep.subr.mxu0 0.0
    %839 = vmatpush1.msra.mxu0 0.0
    %840 = vmatprep.subr.mxu0 0.0
    %841 = vmatpush1.msra.mxu0 0.0
    %842 = vmatprep.subr.mxu0 0.0
    %843 = vmatpush1.msra.mxu0 0.0
    %844 = vmatprep.subr.mxu0 0.0
    %845 = vmatpush1.msra.mxu0 0.0
    %846 = vmatprep.subr.mxu0 0.0
    %847 = vmatpush1.msra.mxu0 0.0
    %848 = vmatprep.subr.mxu0 0.0
    %849 = vmatpush1.msra.mxu0 0.0
    %850 = vmatprep.subr.mxu0 0.0
    %851 = vmatpush1.msra.mxu0 0.0
    %852 = vmatprep.subr.mxu0 0.0
    %853 = vmatpush1.msra.mxu0 0.0
    %854 = vmatprep.subr.mxu0 0.0
    %855 = vmatpush1.msra.mxu0 0.0
    %856 = vmatprep.subr.mxu0 0.0
    %857 = vmatpush1.msra.mxu0 0.0
    %858 = vmatprep.subr.mxu0 0.0
    %859 = vmatpush1.msra.mxu0 0.0
    %860 = vmatprep.subr.mxu0 0.0
    %861 = vmatpush1.msra.mxu0 0.0
    %862 = vmatprep.mubr.f32.mxu0 0.0
    %863 = vmatmul.mubr.f32.gmra.mrb[0].mxu0 %v787
    %v864 = vpop.f32.mrb[0].mxu0
    %v865 = vadd.f32 %v768, %v864
    %v866 = vpop.f32.mrb[0].mxu0
    %867 = vmatprep.mubr.f32.mxu0 0.0
    %868 = vmatmul.mubr.f32.gmra.mrb[0].mxu0 %v790
    %v869 = vpop.f32.mrb[0].mxu0
    %v870 = vadd.f32 %v773, %v869
    %v871 = vpop.f32.mrb[0].mxu0
    %872 = vmatprep.mubr.f32.mxu0 0.0
    %873 = vmatmul.mubr.f32.gmra.mrb[0].mxu0 %v793
    %v874 = vpop.f32.mrb[0].mxu0
    %v875 = vadd.f32 %v778, %v874
    %v876 = vpop.f32.mrb[0].mxu0
    %877 = vmatprep.mubr.f32.mxu0 0.0
    %878 = vmatmul.mubr.f32.gmra.mrb[0].mxu0 %v796
    %v879 = vpop.f32.mrb[0].mxu0
    %v880 = vadd.f32 %v783, %v879
    %v881 = vpop.f32.mrb[0].mxu0
    %882 = vdwg.mxu0
    %v883 = vadd.f32 %v541, %v865
    %v884 = vadd.f32 %v546, %v870
    %v885 = vadd.f32 %v551, %v875
    %v886 = vadd.f32 %v556, %v880
    %v887 = vmax.f32 %v883, 0.0
    %v888 = vmax.f32 %v884, 0.0
    %v889 = vmax.f32 %v885, 0.0
    %v890 = vmax.f32 %v886, 0.0
    %v891 = vld [vmem:[%s93] sm:$0xff]
    %v892 = vld [vmem:[%s93 + $0x8] sm:$0xff]
    %893 = vrot.lane.b32.xlu0 %v887, 16
    %v894 = vpop.permute.xlu0 %893
    %v895 = vsel %vm394, %v894, %v887
    %896 = vrot.lane.b32.xlu0 %v888, 16
    %v897 = vpop.permute.xlu0 %896
    %v898 = vsel %vm394, %v897, %v888
    %899 = vrot.lane.b32.xlu0 %v889, 16
    %v900 = vpop.permute.xlu0 %899
    %v901 = vsel %vm394, %v900, %v889
    %902 = vrot.lane.b32.xlu0 %v890, 16
    %v903 = vpop.permute.xlu0 %902
    %v904 = vsel %vm394, %v903, %v890
    %905 = vrot.lane.b32.xlu0 %v895, 16
    %v906 = vpop.permute.xlu0 %905
    %907 = vrot.lane.b32.xlu0 %v898, 16
    %v908 = vpop.permute.xlu0 %907
    %909 = vrot.lane.b32.xlu0 %v901, 16
    %v910 = vpop.permute.xlu0 %909
    %911 = vrot.lane.b32.xlu0 %v904, 16
    %v912 = vpop.permute.xlu0 %911
    %v913 = vsel %vm394, %v906, %v887
    %v914 = vsel %vm394, %v908, %v888
    %v915 = vsel %vm394, %v910, %v889
    %v916 = vsel %vm394, %v912, %v890
    %v917 = vmul.f32 %v913, %v408
    %v918 = vmul.f32 %v914, %v408
    %v919 = vmul.f32 %v915, %v408
    %v920 = vmul.f32 %v916, %v408
    %v921 = vmul.f32 %v913, %v418
    %v922 = vmul.f32 %v914, %v418
    %v923 = vmul.f32 %v915, %v418
    %v924 = vmul.f32 %v916, %v418
    %929 = vrot.lane.b32.xlu0 %v887, 15
    %v930 = vpop.permute.xlu0 %929
    %931 = vrot.lane.b32.xlu0 %v888, 15
    %v932 = vpop.permute.xlu0 %931
    %933 = vrot.lane.b32.xlu0 %v889, 15
    %v934 = vpop.permute.xlu0 %933
    %935 = vrot.lane.b32.xlu0 %v890, 15
    %v936 = vpop.permute.xlu0 %935
    %941 = vrot.lane.b32.xlu0 %v921, 14
    %v942 = vpop.permute.xlu0 %941
    %943 = vrot.lane.b32.xlu0 %v922, 14
    %v944 = vpop.permute.xlu0 %943
    %945 = vrot.lane.b32.xlu0 %v923, 14
    %v946 = vpop.permute.xlu0 %945
    %947 = vrot.lane.b32.xlu0 %v924, 14
    %v948 = vpop.permute.xlu0 %947
    %v949 = vld [vmem:[%s95] sm:$0xff]
    %v950 = vld [vmem:[%s95 + $0x8] sm:$0xff]
    %952 = vset.pattern.permute.xlu0 0
    %953 = vperm.xlu0 %952, %v949
    %v954 = vpop.permute.xlu0 %953
    %957 = vset.pattern.permute.xlu0 0
    %958 = vperm.xlu0 %957, %v950
    %v959 = vpop.permute.xlu0 %958
    %965 = vrot.lane.b32.xlu0 %v917, 113
    %v966 = vpop.permute.xlu0 %965
    %967 = vrot.lane.b32.xlu0 %v918, 113
    %v968 = vpop.permute.xlu0 %967
    %969 = vrot.lane.b32.xlu0 %v919, 113
    %v970 = vpop.permute.xlu0 %969
    %971 = vrot.lane.b32.xlu0 %v920, 113
    %v972 = vpop.permute.xlu0 %971
    %973 = vrot.lane.b32.xlu0 %v930, 113
    %v974 = vpop.permute.xlu0 %973
    %975 = vrot.lane.b32.xlu0 %v932, 113
    %v976 = vpop.permute.xlu0 %975
    %977 = vrot.lane.b32.xlu0 %v934, 113
    %v978 = vpop.permute.xlu0 %977
    %979 = vrot.lane.b32.xlu0 %v936, 113
    %v980 = vpop.permute.xlu0 %979
    %981 = vrot.lane.b32.xlu0 %v942, 113
    %v982 = vpop.permute.xlu0 %981
    %983 = vrot.lane.b32.xlu0 %v944, 113
    %v984 = vpop.permute.xlu0 %983
    %985 = vrot.lane.b32.xlu0 %v946, 113
    %v986 = vpop.permute.xlu0 %985
    %987 = vrot.lane.b32.xlu0 %v948, 113
    %v988 = vpop.permute.xlu0 %987
    %v1002 = vsel %vm673, %v891, 0
    %v1005 = vsel %vm673, %v892, 0
    %1007 = vmatprep.subr.mxu0 0.0
    %1008 = vmatpush1.msra.mxu0 %v966
    %1009 = vmatprep.subr.mxu0 0.0
    %1010 = vmatpush1.msra.mxu0 %v968
    %1011 = vmatprep.subr.mxu0 0.0
    %1012 = vmatpush1.msra.mxu0 %v970
    %1013 = vmatprep.subr.mxu0 0.0
    %1014 = vmatpush1.msra.mxu0 %v972
    %1015 = vmatprep.subr.mxu0 0.0
    %1016 = vmatpush1.msra.mxu0 %v974
    %1017 = vmatprep.subr.mxu0 0.0
    %1018 = vmatpush1.msra.mxu0 %v976
    %1019 = vmatprep.subr.mxu0 0.0
    %1020 = vmatpush1.msra.mxu0 %v978
    %1021 = vmatprep.subr.mxu0 0.0
    %1022 = vmatpush1.msra.mxu0 %v980
    %1023 = vmatprep.subr.mxu0 0.0
    %1024 = vmatpush1.msra.mxu0 %v982
    %1025 = vmatprep.subr.mxu0 0.0
    %1026 = vmatpush1.msra.mxu0 %v984
    %1027 = vmatprep.subr.mxu0 0.0
    %1028 = vmatpush1.msra.mxu0 %v986
    %1029 = vmatprep.subr.mxu0 0.0
    %1030 = vmatpush1.msra.mxu0 %v988
    %1031 = vmatprep.subr.mxu0 0.0
    %1032 = vmatpush1.msra.mxu0 0.0
    %1033 = vmatprep.subr.mxu0 0.0
    %1034 = vmatpush1.msra.mxu0 0.0
    %1035 = vmatprep.subr.mxu0 0.0
    %1036 = vmatpush1.msra.mxu0 0.0
    %1037 = vmatprep.subr.mxu0 0.0
    %1038 = vmatpush1.msra.mxu0 0.0
    %1039 = vmatprep.subr.mxu0 0.0
    %1040 = vmatpush1.msra.mxu0 0.0
    %1041 = vmatprep.subr.mxu0 0.0
    %1042 = vmatpush1.msra.mxu0 0.0
    %1043 = vmatprep.subr.mxu0 0.0
    %1044 = vmatpush1.msra.mxu0 0.0
    %1045 = vmatprep.subr.mxu0 0.0
    %1046 = vmatpush1.msra.mxu0 0.0
    %1047 = vmatprep.subr.mxu0 0.0
    %1048 = vmatpush1.msra.mxu0 0.0
    %1049 = vmatprep.subr.mxu0 0.0
    %1050 = vmatpush1.msra.mxu0 0.0
    %1051 = vmatprep.subr.mxu0 0.0
    %1052 = vmatpush1.msra.mxu0 0.0
    %1053 = vmatprep.subr.mxu0 0.0
    %1054 = vmatpush1.msra.mxu0 0.0
    %1055 = vmatprep.subr.mxu0 0.0
    %1056 = vmatpush1.msra.mxu0 0.0
    %1057 = vmatprep.subr.mxu0 0.0
    %1058 = vmatpush1.msra.mxu0 0.0
    %1059 = vmatprep.subr.mxu0 0.0
    %1060 = vmatpush1.msra.mxu0 0.0
    %1061 = vmatprep.subr.mxu0 0.0
    %1062 = vmatpush1.msra.mxu0 0.0
    %1063 = vmatprep.subr.mxu0 0.0
    %1064 = vmatpush1.msra.mxu0 0.0
    %1065 = vmatprep.subr.mxu0 0.0
    %1066 = vmatpush1.msra.mxu0 0.0
    %1067 = vmatprep.subr.mxu0 0.0
    %1068 = vmatpush1.msra.mxu0 0.0
    %1069 = vmatprep.subr.mxu0 0.0
    %1070 = vmatpush1.msra.mxu0 0.0
    %1071 = vmatprep.mubr.f32.mxu0 0.0
    %1072 = vmatmul.mubr.f32.gmra.mrb[0].mxu0 %v1002
    %v1073 = vpop.f32.mrb[0].mxu0
    %v1074 = vadd.f32 %v954, %v1073
    %v1075 = vpop.f32.mrb[0].mxu0
    %1076 = vmatprep.mubr.f32.mxu0 0.0
    %1077 = vmatmul.mubr.f32.gmra.mrb[0].mxu0 %v1005
    %v1078 = vpop.f32.mrb[0].mxu0
    %v1079 = vadd.f32 %v959, %v1078
    %v1080 = vpop.f32.mrb[0].mxu0
    %1081 = vdwg.mxu0
    %v1082 = vmax.f32 %v1074, 0.0
    %v1083 = vmax.f32 %v1079, 0.0
    %v1084 = vld [vmem:[%s97] sm:$0xff]
    %v1085 = vld [vmem:[%s97 + $0x8] sm:$0xff]
    %v1086 = vld [vmem:[%s97 + $0x10] sm:$0xff]
    %v1087 = vld [vmem:[%s97 + $0x18] sm:$0xff]
    %v1088 = vld [vmem:[%s99] sm:$0xff]
    %v1089 = vld [vmem:[%s99 + $0x8] sm:$0xff]
    %v1090 = vld [vmem:[%s99 + $0x10] sm:$0xff]
    %v1091 = vld [vmem:[%s99 + $0x18] sm:$0xff]
    %1093 = vset.pattern.permute.xlu0 0
    %1094 = vperm.xlu0 %1093, %v1088
    %v1095 = vpop.permute.xlu0 %1094
    %1098 = vset.pattern.permute.xlu0 0
    %1099 = vperm.xlu0 %1098, %v1089
    %v1100 = vpop.permute.xlu0 %1099
    %1103 = vset.pattern.permute.xlu0 0
    %1104 = vperm.xlu0 %1103, %v1090
    %v1105 = vpop.permute.xlu0 %1104
    %1108 = vset.pattern.permute.xlu0 0
    %1109 = vperm.xlu0 %1108, %v1091
    %v1110 = vpop.permute.xlu0 %1109
    %v1113 = vsel %vm785, %v1084, 0
    %v1116 = vsel %vm785, %v1085, 0
    %v1119 = vsel %vm785, %v1086, 0
    %v1122 = vsel %vm785, %v1087, 0
    %1124 = vmatprep.subr.mxu0 0.0
    %1125 = vmatpush1.msra.mxu0 %v1082
    %1126 = vmatprep.subr.mxu0 0.0
    %1127 = vmatpush1.msra.mxu0 %v1083
    %1128 = vmatprep.subr.mxu0 0.0
    %1129 = vmatpush1.msra.mxu0 0.0
    %1130 = vmatprep.subr.mxu0 0.0
    %1131 = vmatpush1.msra.mxu0 0.0
    %1132 = vmatprep.subr.mxu0 0.0
    %1133 = vmatpush1.msra.mxu0 0.0
    %1134 = vmatprep.subr.mxu0 0.0
    %1135 = vmatpush1.msra.mxu0 0.0
    %1136 = vmatprep.subr.mxu0 0.0
    %1137 = vmatpush1.msra.mxu0 0.0
    %1138 = vmatprep.subr.mxu0 0.0
    %1139 = vmatpush1.msra.mxu0 0.0
    %1140 = vmatprep.subr.mxu0 0.0
    %1141 = vmatpush1.msra.mxu0 0.0
    %1142 = vmatprep.subr.mxu0 0.0
    %1143 = vmatpush1.msra.mxu0 0.0
    %1144 = vmatprep.subr.mxu0 0.0
    %1145 = vmatpush1.msra.mxu0 0.0
    %1146 = vmatprep.subr.mxu0 0.0
    %1147 = vmatpush1.msra.mxu0 0.0
    %1148 = vmatprep.subr.mxu0 0.0
    %1149 = vmatpush1.msra.mxu0 0.0
    %1150 = vmatprep.subr.mxu0 0.0
    %1151 = vmatpush1.msra.mxu0 0.0
    %1152 = vmatprep.subr.mxu0 0.0
    %1153 = vmatpush1.msra.mxu0 0.0
    %1154 = vmatprep.subr.mxu0 0.0
    %1155 = vmatpush1.msra.mxu0 0.0
    %1156 = vmatprep.subr.mxu0 0.0
    %1157 = vmatpush1.msra.mxu0 0.0
    %1158 = vmatprep.subr.mxu0 0.0
    %1159 = vmatpush1.msra.mxu0 0.0
    %1160 = vmatprep.subr.mxu0 0.0
    %1161 = vmatpush1.msra.mxu0 0.0
    %1162 = vmatprep.subr.mxu0 0.0
    %1163 = vmatpush1.msra.mxu0 0.0
    %1164 = vmatprep.subr.mxu0 0.0
    %1165 = vmatpush1.msra.mxu0 0.0
    %1166 = vmatprep.subr.mxu0 0.0
    %1167 = vmatpush1.msra.mxu0 0.0
    %1168 = vmatprep.subr.mxu0 0.0
    %1169 = vmatpush1.msra.mxu0 0.0
    %1170 = vmatprep.subr.mxu0 0.0
    %1171 = vmatpush1.msra.mxu0 0.0
    %1172 = vmatprep.subr.mxu0 0.0
    %1173 = vmatpush1.msra.mxu0 0.0
    %1174 = vmatprep.subr.mxu0 0.0
    %1175 = vmatpush1.msra.mxu0 0.0
    %1176 = vmatprep.subr.mxu0 0.0
    %1177 = vmatpush1.msra.mxu0 0.0
    %1178 = vmatprep.subr.mxu0 0.0
    %1179 = vmatpush1.msra.mxu0 0.0
    %1180 = vmatprep.subr.mxu0 0.0
    %1181 = vmatpush1.msra.mxu0 0.0
    %1182 = vmatprep.subr.mxu0 0.0
    %1183 = vmatpush1.msra.mxu0 0.0
    %1184 = vmatprep.subr.mxu0 0.0
    %1185 = vmatpush1.msra.mxu0 0.0
    %1186 = vmatprep.subr.mxu0 0.0
    %1187 = vmatpush1.msra.mxu0 0.0
    %1188 = vmatprep.mubr.f32.mxu0 0.0
    %1189 = vmatmul.mubr.f32.gmra.mrb[0].mxu0 %v1113
    %v1190 = vpop.f32.mrb[0].mxu0
    %v1191 = vadd.f32 %v1095, %v1190
    %v1192 = vpop.f32.mrb[0].mxu0
    %1193 = vmatprep.mubr.f32.mxu0 0.0
    %1194 = vmatmul.mubr.f32.gmra.mrb[0].mxu0 %v1116
    %v1195 = vpop.f32.mrb[0].mxu0
    %v1196 = vadd.f32 %v1100, %v1195
    %v1197 = vpop.f32.mrb[0].mxu0
    %1198 = vmatprep.mubr.f32.mxu0 0.0
    %1199 = vmatmul.mubr.f32.gmra.mrb[0].mxu0 %v1119
    %v1200 = vpop.f32.mrb[0].mxu0
    %v1201 = vadd.f32 %v1105, %v1200
    %v1202 = vpop.f32.mrb[0].mxu0
    %1203 = vmatprep.mubr.f32.mxu0 0.0
    %1204 = vmatmul.mubr.f32.gmra.mrb[0].mxu0 %v1122
    %v1205 = vpop.f32.mrb[0].mxu0
    %v1206 = vadd.f32 %v1110, %v1205
    %v1207 = vpop.f32.mrb[0].mxu0
    %1208 = vdwg.mxu0
    %v1209 = vadd.f32 %v883, %v1191
    %v1210 = vadd.f32 %v884, %v1196
    %v1211 = vadd.f32 %v885, %v1201
    %v1212 = vadd.f32 %v886, %v1206
    %v1213 = vld [vmem:[%s101] sm:$0xff]
    %v1214 = vld [vmem:[%s101 + $0x8] sm:$0xff]
    %v1215 = vld [vmem:[%s101 + $0x10] sm:$0xff]
    %v1216 = vld [vmem:[%s101 + $0x18] sm:$0xff]
    %v1217 = vld [vmem:[%s101 + $0x20] sm:$0xff]
    %v1218 = vld [vmem:[%s101 + $0x28] sm:$0xff]
    %v1219 = vld [vmem:[%s101 + $0x30] sm:$0xff]
    %v1220 = vld [vmem:[%s101 + $0x38] sm:$0xff]
    %1221 = vrot.lane.b32.xlu0 %v1209, 16
    %v1222 = vpop.permute.xlu0 %1221
    %v1223 = vsel %vm394, %v1222, %v1209
    %1224 = vrot.lane.b32.xlu0 %v1210, 16
    %v1225 = vpop.permute.xlu0 %1224
    %v1226 = vsel %vm394, %v1225, %v1210
    %1227 = vrot.lane.b32.xlu0 %v1211, 16
    %v1228 = vpop.permute.xlu0 %1227
    %v1229 = vsel %vm394, %v1228, %v1211
    %1230 = vrot.lane.b32.xlu0 %v1212, 16
    %v1231 = vpop.permute.xlu0 %1230
    %v1232 = vsel %vm394, %v1231, %v1212
    %1233 = vrot.lane.b32.xlu0 %v1223, 16
    %v1234 = vpop.permute.xlu0 %1233
    %1235 = vrot.lane.b32.xlu0 %v1226, 16
    %v1236 = vpop.permute.xlu0 %1235
    %1237 = vrot.lane.b32.xlu0 %v1229, 16
    %v1238 = vpop.permute.xlu0 %1237
    %1239 = vrot.lane.b32.xlu0 %v1232, 16
    %v1240 = vpop.permute.xlu0 %1239
    %v1241 = vsel %vm394, %v1234, %v1209
    %v1242 = vsel %vm394, %v1236, %v1210
    %v1243 = vsel %vm394, %v1238, %v1211
    %v1244 = vsel %vm394, %v1240, %v1212
    %v1245 = vmul.f32 %v1241, %v408
    %v1246 = vmul.f32 %v1242, %v408
    %v1247 = vmul.f32 %v1243, %v408
    %v1248 = vmul.f32 %v1244, %v408
    %v1249 = vmul.f32 %v1241, %v418
    %v1250 = vmul.f32 %v1242, %v418
    %v1251 = vmul.f32 %v1243, %v418
    %v1252 = vmul.f32 %v1244, %v418
    %1257 = vrot.lane.b32.xlu0 %v1209, 15
    %v1258 = vpop.permute.xlu0 %1257
    %1259 = vrot.lane.b32.xlu0 %v1210, 15
    %v1260 = vpop.permute.xlu0 %1259
    %1261 = vrot.lane.b32.xlu0 %v1211, 15
    %v1262 = vpop.permute.xlu0 %1261
    %1263 = vrot.lane.b32.xlu0 %v1212, 15
    %v1264 = vpop.permute.xlu0 %1263
    %1269 = vrot.lane.b32.xlu0 %v1249, 14
    %v1270 = vpop.permute.xlu0 %1269
    %1271 = vrot.lane.b32.xlu0 %v1250, 14
    %v1272 = vpop.permute.xlu0 %1271
    %1273 = vrot.lane.b32.xlu0 %v1251, 14
    %v1274 = vpop.permute.xlu0 %1273
    %1275 = vrot.lane.b32.xlu0 %v1252, 14
    %v1276 = vpop.permute.xlu0 %1275
    %v1277 = vld [vmem:[%s103] sm:$0xff]
    %v1278 = vld [vmem:[%s103 + $0x8] sm:$0xff]
    %v1279 = vld [vmem:[%s103 + $0x10] sm:$0xff]
    %v1280 = vld [vmem:[%s103 + $0x18] sm:$0xff]
    %v1281 = vld [vmem:[%s103 + $0x20] sm:$0xff]
    %v1282 = vld [vmem:[%s103 + $0x28] sm:$0xff]
    %v1283 = vld [vmem:[%s103 + $0x30] sm:$0xff]
    %v1284 = vld [vmem:[%s103 + $0x38] sm:$0xff]
    %1286 = vset.pattern.permute.xlu0 0
    %1287 = vperm.xlu0 %1286, %v1277
    %v1288 = vpop.permute.xlu0 %1287
    %1291 = vset.pattern.permute.xlu0 0
    %1292 = vperm.xlu0 %1291, %v1278
    %v1293 = vpop.permute.xlu0 %1292
    %1296 = vset.pattern.permute.xlu0 0
    %1297 = vperm.xlu0 %1296, %v1279
    %v1298 = vpop.permute.xlu0 %1297
    %1301 = vset.pattern.permute.xlu0 0
    %1302 = vperm.xlu0 %1301, %v1280
    %v1303 = vpop.permute.xlu0 %1302
    %1306 = vset.pattern.permute.xlu0 0
    %1307 = vperm.xlu0 %1306, %v1281
    %v1308 = vpop.permute.xlu0 %1307
    %1311 = vset.pattern.permute.xlu0 0
    %1312 = vperm.xlu0 %1311, %v1282
    %v1313 = vpop.permute.xlu0 %1312
    %1316 = vset.pattern.permute.xlu0 0
    %1317 = vperm.xlu0 %1316, %v1283
    %v1318 = vpop.permute.xlu0 %1317
    %1321 = vset.pattern.permute.xlu0 0
    %1322 = vperm.xlu0 %1321, %v1284
    %v1323 = vpop.permute.xlu0 %1322
    %1329 = vrot.lane.b32.xlu0 %v1245, 113
    %v1330 = vpop.permute.xlu0 %1329
    %1331 = vrot.lane.b32.xlu0 %v1246, 113
    %v1332 = vpop.permute.xlu0 %1331
    %1333 = vrot.lane.b32.xlu0 %v1247, 113
    %v1334 = vpop.permute.xlu0 %1333
    %1335 = vrot.lane.b32.xlu0 %v1248, 113
    %v1336 = vpop.permute.xlu0 %1335
    %1337 = vrot.lane.b32.xlu0 %v1258, 113
    %v1338 = vpop.permute.xlu0 %1337
    %1339 = vrot.lane.b32.xlu0 %v1260, 113
    %v1340 = vpop.permute.xlu0 %1339
    %1341 = vrot.lane.b32.xlu0 %v1262, 113
    %v1342 = vpop.permute.xlu0 %1341
    %1343 = vrot.lane.b32.xlu0 %v1264, 113
    %v1344 = vpop.permute.xlu0 %1343
    %1345 = vrot.lane.b32.xlu0 %v1270, 113
    %v1346 = vpop.permute.xlu0 %1345
    %1347 = vrot.lane.b32.xlu0 %v1272, 113
    %v1348 = vpop.permute.xlu0 %1347
    %1349 = vrot.lane.b32.xlu0 %v1274, 113
    %v1350 = vpop.permute.xlu0 %1349
    %1351 = vrot.lane.b32.xlu0 %v1276, 113
    %v1352 = vpop.permute.xlu0 %1351
    %v1366 = vsel %vm673, %v1213, 0
    %v1369 = vsel %vm673, %v1214, 0
    %v1372 = vsel %vm673, %v1215, 0
    %v1375 = vsel %vm673, %v1216, 0
    %v1378 = vsel %vm673, %v1217, 0
    %v1381 = vsel %vm673, %v1218, 0
    %v1384 = vsel %vm673, %v1219, 0
    %v1387 = vsel %vm673, %v1220, 0
    %1389 = vmatprep.subr.mxu0 0.0
    %1390 = vmatpush1.msra.mxu0 %v1330
    %1391 = vmatprep.subr.mxu0 0.0
    %1392 = vmatpush1.msra.mxu0 %v1332
    %1393 = vmatprep.subr.mxu0 0.0
    %1394 = vmatpush1.msra.mxu0 %v1334
    %1395 = vmatprep.subr.mxu0 0.0
    %1396 = vmatpush1.msra.mxu0 %v1336
    %1397 = vmatprep.subr.mxu0 0.0
    %1398 = vmatpush1.msra.mxu0 %v1338
    %1399 = vmatprep.subr.mxu0 0.0
    %1400 = vmatpush1.msra.mxu0 %v1340
    %1401 = vmatprep.subr.mxu0 0.0
    %1402 = vmatpush1.msra.mxu0 %v1342
    %1403 = vmatprep.subr.mxu0 0.0
    %1404 = vmatpush1.msra.mxu0 %v1344
    %1405 = vmatprep.subr.mxu0 0.0
    %1406 = vmatpush1.msra.mxu0 %v1346
    %1407 = vmatprep.subr.mxu0 0.0
    %1408 = vmatpush1.msra.mxu0 %v1348
    %1409 = vmatprep.subr.mxu0 0.0
    %1410 = vmatpush1.msra.mxu0 %v1350
    %1411 = vmatprep.subr.mxu0 0.0
    %1412 = vmatpush1.msra.mxu0 %v1352
    %1413 = vmatprep.subr.mxu0 0.0
    %1414 = vmatpush1.msra.mxu0 0.0
    %1415 = vmatprep.subr.mxu0 0.0
    %1416 = vmatpush1.msra.mxu0 0.0
    %1417 = vmatprep.subr.mxu0 0.0
    %1418 = vmatpush1.msra.mxu0 0.0
    %1419 = vmatprep.subr.mxu0 0.0
    %1420 = vmatpush1.msra.mxu0 0.0
    %1421 = vmatprep.subr.mxu0 0.0
    %1422 = vmatpush1.msra.mxu0 0.0
    %1423 = vmatprep.subr.mxu0 0.0
    %1424 = vmatpush1.msra.mxu0 0.0
    %1425 = vmatprep.subr.mxu0 0.0
    %1426 = vmatpush1.msra.mxu0 0.0
    %1427 = vmatprep.subr.mxu0 0.0
    %1428 = vmatpush1.msra.mxu0 0.0
    %1429 = vmatprep.subr.mxu0 0.0
    %1430 = vmatpush1.msra.mxu0 0.0
    %1431 = vmatprep.subr.mxu0 0.0
    %1432 = vmatpush1.msra.mxu0 0.0
    %1433 = vmatprep.subr.mxu0 0.0
    %1434 = vmatpush1.msra.mxu0 0.0
    %1435 = vmatprep.subr.mxu0 0.0
    %1436 = vmatpush1.msra.mxu0 0.0
    %1437 = vmatprep.subr.mxu0 0.0
    %1438 = vmatpush1.msra.mxu0 0.0
    %1439 = vmatprep.subr.mxu0 0.0
    %1440 = vmatpush1.msra.mxu0 0.0
    %1441 = vmatprep.subr.mxu0 0.0
    %1442 = vmatpush1.msra.mxu0 0.0
    %1443 = vmatprep.subr.mxu0 0.0
    %1444 = vmatpush1.msra.mxu0 0.0
    %1445 = vmatprep.subr.mxu0 0.0
    %1446 = vmatpush1.msra.mxu0 0.0
    %1447 = vmatprep.subr.mxu0 0.0
    %1448 = vmatpush1.msra.mxu0 0.0
    %1449 = vmatprep.subr.mxu0 0.0
    %1450 = vmatpush1.msra.mxu0 0.0
    %1451 = vmatprep.subr.mxu0 0.0
    %1452 = vmatpush1.msra.mxu0 0.0
    %1453 = vmatprep.mubr.f32.mxu0 0.0
    %1454 = vmatmul.mubr.f32.gmra.mrb[0].mxu0 %v1366
    %v1455 = vpop.f32.mrb[0].mxu0
    %v1456 = vadd.f32 %v1288, %v1455
    %v1457 = vpop.f32.mrb[0].mxu0
    %1458 = vmatprep.mubr.f32.mxu0 0.0
    %1459 = vmatmul.mubr.f32.gmra.mrb[0].mxu0 %v1369
    %v1460 = vpop.f32.mrb[0].mxu0
    %v1461 = vadd.f32 %v1293, %v1460
    %v1462 = vpop.f32.mrb[0].mxu0
    %1463 = vmatprep.mubr.f32.mxu0 0.0
    %1464 = vmatmul.mubr.f32.gmra.mrb[0].mxu0 %v1372
    %v1465 = vpop.f32.mrb[0].mxu0
    %v1466 = vadd.f32 %v1298, %v1465
    %v1467 = vpop.f32.mrb[0].mxu0
    %1468 = vmatprep.mubr.f32.mxu0 0.0
    %1469 = vmatmul.mubr.f32.gmra.mrb[0].mxu0 %v1375
    %v1470 = vpop.f32.mrb[0].mxu0
    %v1471 = vadd.f32 %v1303, %v1470
    %v1472 = vpop.f32.mrb[0].mxu0
    %1473 = vmatprep.mubr.f32.mxu0 0.0
    %1474 = vmatmul.mubr.f32.gmra.mrb[0].mxu0 %v1378
    %v1475 = vpop.f32.mrb[0].mxu0
    %v1476 = vadd.f32 %v1308, %v1475
    %v1477 = vpop.f32.mrb[0].mxu0
    %1478 = vmatprep.mubr.f32.mxu0 0.0
    %1479 = vmatmul.mubr.f32.gmra.mrb[0].mxu0 %v1381
    %v1480 = vpop.f32.mrb[0].mxu0
    %v1481 = vadd.f32 %v1313, %v1480
    %v1482 = vpop.f32.mrb[0].mxu0
    %1483 = vmatprep.mubr.f32.mxu0 0.0
    %1484 = vmatmul.mubr.f32.gmra.mrb[0].mxu0 %v1384
    %v1485 = vpop.f32.mrb[0].mxu0
    %v1486 = vadd.f32 %v1318, %v1485
    %v1487 = vpop.f32.mrb[0].mxu0
    %1488 = vmatprep.mubr.f32.mxu0 0.0
    %1489 = vmatmul.mubr.f32.gmra.mrb[0].mxu0 %v1387
    %v1490 = vpop.f32.mrb[0].mxu0
    %v1491 = vadd.f32 %v1323, %v1490
    %v1492 = vpop.f32.mrb[0].mxu0
    %1493 = vdwg.mxu0
    %v1494 = vmax.f32 %v1456, 0.0
    %v1495 = vmax.f32 %v1461, 0.0
    %v1496 = vmax.f32 %v1466, 0.0
    %v1497 = vmax.f32 %v1471, 0.0
    %v1498 = vmax.f32 %v1476, 0.0
    %v1499 = vmax.f32 %v1481, 0.0
    %v1500 = vmax.f32 %v1486, 0.0
    %v1501 = vmax.f32 %v1491, 0.0
    %1506 = vrot.lane.b32.xlu0 %v1498, 16
    %v1507 = vpop.permute.xlu0 %1506
    %1508 = vrot.lane.b32.xlu0 %v1499, 16
    %v1509 = vpop.permute.xlu0 %1508
    %1510 = vrot.lane.b32.xlu0 %v1500, 16
    %v1511 = vpop.permute.xlu0 %1510
    %1512 = vrot.lane.b32.xlu0 %v1501, 16
    %v1513 = vpop.permute.xlu0 %1512
    %v1518 = vsel %vm785, %v1494, %v1507
    %v1519 = vsel %vm785, %v1495, %v1509
    %v1520 = vsel %vm785, %v1496, %v1511
    %v1521 = vsel %vm785, %v1497, %v1513
    %v1522 = vld [vmem:[%s29] sm:$0xff]
    %v1523 = vld [vmem:[%s29 + $0x8] sm:$0xff]
    %v1524 = vld [vmem:[%s29 + $0x10] sm:$0xff]
    %v1525 = vld [vmem:[%s29 + $0x18] sm:$0xff]
    %vm1526 = vcmask 261120
    %v1528 = vsel %vm1526, %v1518, 0
    %v1531 = vsel %vm1526, %v1519, 0
    %v1534 = vsel %vm1526, %v1520, 0
    %v1537 = vsel %vm1526, %v1521, 0
    %1539 = vmatprep.subr.mxu0 0.0
    %1540 = vmatpush1.msra.mxu0 %v1522
    %1541 = vmatprep.subr.mxu0 0.0
    %1542 = vmatpush1.msra.mxu0 %v1523
    %1543 = vmatprep.subr.mxu0 0.0
    %1544 = vmatpush1.msra.mxu0 %v1524
    %1545 = vmatprep.subr.mxu0 0.0
    %1546 = vmatpush1.msra.mxu0 %v1525
    %1547 = vmatprep.subr.mxu0 0.0
    %1548 = vmatpush1.msra.mxu0 0.0
    %1549 = vmatprep.subr.mxu0 0.0
    %1550 = vmatpush1.msra.mxu0 0.0
    %1551 = vmatprep.subr.mxu0 0.0
    %1552 = vmatpush1.msra.mxu0 0.0
    %1553 = vmatprep.subr.mxu0 0.0
    %1554 = vmatpush1.msra.mxu0 0.0
    %1555 = vmatprep.subr.mxu0 0.0
    %1556 = vmatpush1.msra.mxu0 0.0
    %1557 = vmatprep.subr.mxu0 0.0
    %1558 = vmatpush1.msra.mxu0 0.0
    %1559 = vmatprep.subr.mxu0 0.0
    %1560 = vmatpush1.msra.mxu0 0.0
    %1561 = vmatprep.subr.mxu0 0.0
    %1562 = vmatpush1.msra.mxu0 0.0
    %1563 = vmatprep.subr.mxu0 0.0
    %1564 = vmatpush1.msra.mxu0 0.0
    %1565 = vmatprep.subr.mxu0 0.0
    %1566 = vmatpush1.msra.mxu0 0.0
    %1567 = vmatprep.subr.mxu0 0.0
    %1568 = vmatpush1.msra.mxu0 0.0
    %1569 = vmatprep.subr.mxu0 0.0
    %1570 = vmatpush1.msra.mxu0 0.0
    %1571 = vmatprep.subr.mxu0 0.0
    %1572 = vmatpush1.msra.mxu0 0.0
    %1573 = vmatprep.subr.mxu0 0.0
    %1574 = vmatpush1.msra.mxu0 0.0
    %1575 = vmatprep.subr.mxu0 0.0
    %1576 = vmatpush1.msra.mxu0 0.0
    %1577 = vmatprep.subr.mxu0 0.0
    %1578 = vmatpush1.msra.mxu0 0.0
    %1579 = vmatprep.subr.mxu0 0.0
    %1580 = vmatpush1.msra.mxu0 0.0
    %1581 = vmatprep.subr.mxu0 0.0
    %1582 = vmatpush1.msra.mxu0 0.0
    %1583 = vmatprep.subr.mxu0 0.0
    %1584 = vmatpush1.msra.mxu0 0.0
    %1585 = vmatprep.subr.mxu0 0.0
    %1586 = vmatpush1.msra.mxu0 0.0
    %1587 = vmatprep.subr.mxu0 0.0
    %1588 = vmatpush1.msra.mxu0 0.0
    %1589 = vmatprep.subr.mxu0 0.0
    %1590 = vmatpush1.msra.mxu0 0.0
    %1591 = vmatprep.subr.mxu0 0.0
    %1592 = vmatpush1.msra.mxu0 0.0
    %1593 = vmatprep.subr.mxu0 0.0
    %1594 = vmatpush1.msra.mxu0 0.0
    %1595 = vmatprep.subr.mxu0 0.0
    %1596 = vmatpush1.msra.mxu0 0.0
    %1597 = vmatprep.subr.mxu0 0.0
    %1598 = vmatpush1.msra.mxu0 0.0
    %1599 = vmatprep.subr.mxu0 0.0
    %1600 = vmatpush1.msra.mxu0 0.0
    %1601 = vmatprep.subr.mxu0 0.0
    %1602 = vmatpush1.msra.mxu0 0.0
    %1603 = vmatprep.mubr.f32.mxu0 0.0
    %1604 = vmatmul.mubr.f32.gmra.mrb[0].mxu0 %v1528
    %v1605 = vpop.f32.mrb[0].mxu0
    %v1606 = vadd.f32 0.0, %v1605
    %v1607 = vpop.f32.mrb[0].mxu0
    %1608 = vmatprep.mubr.f32.mxu0 0.0
    %1609 = vmatmul.mubr.f32.gmra.mrb[0].mxu0 %v1531
    %v1610 = vpop.f32.mrb[0].mxu0
    %v1611 = vadd.f32 0.0, %v1610
    %v1612 = vpop.f32.mrb[0].mxu0
    %1613 = vmatprep.mubr.f32.mxu0 0.0
    %1614 = vmatmul.mubr.f32.gmra.mrb[0].mxu0 %v1534
    %v1615 = vpop.f32.mrb[0].mxu0
    %v1616 = vadd.f32 0.0, %v1615
    %v1617 = vpop.f32.mrb[0].mxu0
    %1618 = vmatprep.mubr.f32.mxu0 0.0
    %1619 = vmatmul.mubr.f32.gmra.mrb[0].mxu0 %v1537
    %v1620 = vpop.f32.mrb[0].mxu0
    %v1621 = vadd.f32 0.0, %v1620
    %v1622 = vpop.f32.mrb[0].mxu0
    %1623 = vdwg.mxu0
    %v1624 = vld [vmem:[%s105] sm:$0xff]
    %v1625 = vld [vmem:[%s105 + $0x8] sm:$0xff]
    %v1626 = vld [vmem:[%s105 + $0x10] sm:$0xff]
    %v1627 = vld [vmem:[%s105 + $0x18] sm:$0xff]
    %v1628 = vld [vmem:[%s105 + $0x20] sm:$0xff]
    %v1629 = vld [vmem:[%s105 + $0x28] sm:$0xff]
    %v1630 = vld [vmem:[%s105 + $0x30] sm:$0xff]
    %v1631 = vld [vmem:[%s105 + $0x38] sm:$0xff]
    %vm1632 = vcmask 1047808
    %1633 = vrot.lane.b32.xlu0 %v1606, 32
    %v1634 = vpop.permute.xlu0 %1633
    %v1635 = vsel %vm1632, %v1634, %v1606
    %1636 = vrot.lane.b32.xlu0 %v1611, 32
    %v1637 = vpop.permute.xlu0 %1636
    %v1638 = vsel %vm1632, %v1637, %v1611
    %1639 = vrot.lane.b32.xlu0 %v1616, 32
    %v1640 = vpop.permute.xlu0 %1639
    %v1641 = vsel %vm1632, %v1640, %v1616
    %1642 = vrot.lane.b32.xlu0 %v1621, 32
    %v1643 = vpop.permute.xlu0 %1642
    %v1644 = vsel %vm1632, %v1643, %v1621
    %1645 = vrot.lane.b32.xlu0 %v1635, 32
    %v1646 = vpop.permute.xlu0 %1645
    %1647 = vrot.lane.b32.xlu0 %v1638, 32
    %v1648 = vpop.permute.xlu0 %1647
    %1649 = vrot.lane.b32.xlu0 %v1641, 32
    %v1650 = vpop.permute.xlu0 %1649
    %1651 = vrot.lane.b32.xlu0 %v1644, 32
    %v1652 = vpop.permute.xlu0 %1651
    %v1653 = vsel %vm1632, %v1646, %v1606
    %v1654 = vsel %vm1632, %v1648, %v1611
    %v1655 = vsel %vm1632, %v1650, %v1616
    %v1656 = vsel %vm1632, %v1652, %v1621
    %v1657 = vld [vmem:[#allocation11] sm:$0x1]
    %v1659 = vlaneseq
    %v1660 = vshrl.u32 %v1659, 7
    %v1661 = vsub.s32 0, %v1660
    %v1662 = vrot.slane %v1657, %v1661
    %1663 = vrot.lane.b32.xlu0 %v1662, 31
    %v1664 = vpop.permute.xlu0 %1663
    %v1666 = vmul.f32 %v1653, %v1664
    %v1667 = vmul.f32 %v1654, %v1664
    %v1668 = vmul.f32 %v1655, %v1664
    %v1669 = vmul.f32 %v1656, %v1664
    %v1670 = vld [vmem:[#allocation13] sm:$0x1]
    %v1672 = vlaneseq
    %v1673 = vshrl.u32 %v1672, 7
    %v1674 = vsub.s32 0, %v1673
    %v1675 = vrot.slane %v1670, %v1674
    %1676 = vrot.lane.b32.xlu0 %v1675, 1
    %v1677 = vpop.permute.xlu0 %1676
    %v1679 = vmul.f32 %v1653, %v1677
    %v1680 = vmul.f32 %v1654, %v1677
    %v1681 = vmul.f32 %v1655, %v1677
    %v1682 = vmul.f32 %v1656, %v1677
    %1687 = vrot.lane.b32.xlu0 %v1606, 31
    %v1688 = vpop.permute.xlu0 %1687
    %1689 = vrot.lane.b32.xlu0 %v1611, 31
    %v1690 = vpop.permute.xlu0 %1689
    %1691 = vrot.lane.b32.xlu0 %v1616, 31
    %v1692 = vpop.permute.xlu0 %1691
    %1693 = vrot.lane.b32.xlu0 %v1621, 31
    %v1694 = vpop.permute.xlu0 %1693
    %1699 = vrot.lane.b32.xlu0 %v1679, 30
    %v1700 = vpop.permute.xlu0 %1699
    %1701 = vrot.lane.b32.xlu0 %v1680, 30
    %v1702 = vpop.permute.xlu0 %1701
    %1703 = vrot.lane.b32.xlu0 %v1681, 30
    %v1704 = vpop.permute.xlu0 %1703
    %1705 = vrot.lane.b32.xlu0 %v1682, 30
    %v1706 = vpop.permute.xlu0 %1705
    %v1707 = vld [vmem:[%s107] sm:$0xff]
    %v1708 = vld [vmem:[%s107 + $0x8] sm:$0xff]
    %v1709 = vld [vmem:[%s107 + $0x10] sm:$0xff]
    %v1710 = vld [vmem:[%s107 + $0x18] sm:$0xff]
    %v1711 = vld [vmem:[%s107 + $0x20] sm:$0xff]
    %v1712 = vld [vmem:[%s107 + $0x28] sm:$0xff]
    %v1713 = vld [vmem:[%s107 + $0x30] sm:$0xff]
    %v1714 = vld [vmem:[%s107 + $0x38] sm:$0xff]
    %1716 = vset.pattern.permute.xlu0 0
    %1717 = vperm.xlu0 %1716, %v1707
    %v1718 = vpop.permute.xlu0 %1717
    %1721 = vset.pattern.permute.xlu0 0
    %1722 = vperm.xlu0 %1721, %v1708
    %v1723 = vpop.permute.xlu0 %1722
    %1726 = vset.pattern.permute.xlu0 0
    %1727 = vperm.xlu0 %1726, %v1709
    %v1728 = vpop.permute.xlu0 %1727
    %1731 = vset.pattern.permute.xlu0 0
    %1732 = vperm.xlu0 %1731, %v1710
    %v1733 = vpop.permute.xlu0 %1732
    %1736 = vset.pattern.permute.xlu0 0
    %1737 = vperm.xlu0 %1736, %v1711
    %v1738 = vpop.permute.xlu0 %1737
    %1741 = vset.pattern.permute.xlu0 0
    %1742 = vperm.xlu0 %1741, %v1712
    %v1743 = vpop.permute.xlu0 %1742
    %1746 = vset.pattern.permute.xlu0 0
    %1747 = vperm.xlu0 %1746, %v1713
    %v1748 = vpop.permute.xlu0 %1747
    %1751 = vset.pattern.permute.xlu0 0
    %1752 = vperm.xlu0 %1751, %v1714
    %v1753 = vpop.permute.xlu0 %1752
    %1759 = vrot.lane.b32.xlu0 %v1666, 97
    %v1760 = vpop.permute.xlu0 %1759
    %1761 = vrot.lane.b32.xlu0 %v1667, 97
    %v1762 = vpop.permute.xlu0 %1761
    %1763 = vrot.lane.b32.xlu0 %v1668, 97
    %v1764 = vpop.permute.xlu0 %1763
    %1765 = vrot.lane.b32.xlu0 %v1669, 97
    %v1766 = vpop.permute.xlu0 %1765
    %1767 = vrot.lane.b32.xlu0 %v1688, 97
    %v1768 = vpop.permute.xlu0 %1767
    %1769 = vrot.lane.b32.xlu0 %v1690, 97
    %v1770 = vpop.permute.xlu0 %1769
    %1771 = vrot.lane.b32.xlu0 %v1692, 97
    %v1772 = vpop.permute.xlu0 %1771
    %1773 = vrot.lane.b32.xlu0 %v1694, 97
    %v1774 = vpop.permute.xlu0 %1773
    %1775 = vrot.lane.b32.xlu0 %v1700, 97
    %v1776 = vpop.permute.xlu0 %1775
    %1777 = vrot.lane.b32.xlu0 %v1702, 97
    %v1778 = vpop.permute.xlu0 %1777
    %1779 = vrot.lane.b32.xlu0 %v1704, 97
    %v1780 = vpop.permute.xlu0 %1779
    %1781 = vrot.lane.b32.xlu0 %v1706, 97
    %v1782 = vpop.permute.xlu0 %1781
    %v1796 = vsel %vm673, %v1624, 0
    %v1799 = vsel %vm673, %v1625, 0
    %v1802 = vsel %vm673, %v1626, 0
    %v1805 = vsel %vm673, %v1627, 0
    %v1808 = vsel %vm673, %v1628, 0
    %v1811 = vsel %vm673, %v1629, 0
    %v1814 = vsel %vm673, %v1630, 0
    %v1817 = vsel %vm673, %v1631, 0
    %1819 = vmatprep.subr.mxu0 0.0
    %1820 = vmatpush1.msra.mxu0 %v1760
    %1821 = vmatprep.subr.mxu0 0.0
    %1822 = vmatpush1.msra.mxu0 %v1762
    %1823 = vmatprep.subr.mxu0 0.0
    %1824 = vmatpush1.msra.mxu0 %v1764
    %1825 = vmatprep.subr.mxu0 0.0
    %1826 = vmatpush1.msra.mxu0 %v1766
    %1827 = vmatprep.subr.mxu0 0.0
    %1828 = vmatpush1.msra.mxu0 %v1768
    %1829 = vmatprep.subr.mxu0 0.0
    %1830 = vmatpush1.msra.mxu0 %v1770
    %1831 = vmatprep.subr.mxu0 0.0
    %1832 = vmatpush1.msra.mxu0 %v1772
    %1833 = vmatprep.subr.mxu0 0.0
    %1834 = vmatpush1.msra.mxu0 %v1774
    %1835 = vmatprep.subr.mxu0 0.0
    %1836 = vmatpush1.msra.mxu0 %v1776
    %1837 = vmatprep.subr.mxu0 0.0
    %1838 = vmatpush1.msra.mxu0 %v1778
    %1839 = vmatprep.subr.mxu0 0.0
    %1840 = vmatpush1.msra.mxu0 %v1780
    %1841 = vmatprep.subr.mxu0 0.0
    %1842 = vmatpush1.msra.mxu0 %v1782
    %1843 = vmatprep.subr.mxu0 0.0
    %1844 = vmatpush1.msra.mxu0 0.0
    %1845 = vmatprep.subr.mxu0 0.0
    %1846 = vmatpush1.msra.mxu0 0.0
    %1847 = vmatprep.subr.mxu0 0.0
    %1848 = vmatpush1.msra.mxu0 0.0
    %1849 = vmatprep.subr.mxu0 0.0
    %1850 = vmatpush1.msra.mxu0 0.0
    %1851 = vmatprep.subr.mxu0 0.0
    %1852 = vmatpush1.msra.mxu0 0.0
    %1853 = vmatprep.subr.mxu0 0.0
    %1854 = vmatpush1.msra.mxu0 0.0
    %1855 = vmatprep.subr.mxu0 0.0
    %1856 = vmatpush1.msra.mxu0 0.0
    %1857 = vmatprep.subr.mxu0 0.0
    %1858 = vmatpush1.msra.mxu0 0.0
    %1859 = vmatprep.subr.mxu0 0.0
    %1860 = vmatpush1.msra.mxu0 0.0
    %1861 = vmatprep.subr.mxu0 0.0
    %1862 = vmatpush1.msra.mxu0 0.0
    %1863 = vmatprep.subr.mxu0 0.0
    %1864 = vmatpush1.msra.mxu0 0.0
    %1865 = vmatprep.subr.mxu0 0.0
    %1866 = vmatpush1.msra.mxu0 0.0
    %1867 = vmatprep.subr.mxu0 0.0
    %1868 = vmatpush1.msra.mxu0 0.0
    %1869 = vmatprep.subr.mxu0 0.0
    %1870 = vmatpush1.msra.mxu0 0.0
    %1871 = vmatprep.subr.mxu0 0.0
    %1872 = vmatpush1.msra.mxu0 0.0
    %1873 = vmatprep.subr.mxu0 0.0
    %1874 = vmatpush1.msra.mxu0 0.0
    %1875 = vmatprep.subr.mxu0 0.0
    %1876 = vmatpush1.msra.mxu0 0.0
    %1877 = vmatprep.subr.mxu0 0.0
    %1878 = vmatpush1.msra.mxu0 0.0
    %1879 = vmatprep.subr.mxu0 0.0
    %1880 = vmatpush1.msra.mxu0 0.0
    %1881 = vmatprep.subr.mxu0 0.0
    %1882 = vmatpush1.msra.mxu0 0.0
    %1883 = vmatprep.mubr.f32.mxu0 0.0
    %1884 = vmatmul.mubr.f32.gmra.mrb[0].mxu0 %v1796
    %v1885 = vpop.f32.mrb[0].mxu0
    %v1886 = vadd.f32 %v1718, %v1885
    %v1887 = vpop.f32.mrb[0].mxu0
    %1888 = vmatprep.mubr.f32.mxu0 0.0
    %1889 = vmatmul.mubr.f32.gmra.mrb[0].mxu0 %v1799
    %v1890 = vpop.f32.mrb[0].mxu0
    %v1891 = vadd.f32 %v1723, %v1890
    %v1892 = vpop.f32.mrb[0].mxu0
    %1893 = vmatprep.mubr.f32.mxu0 0.0
    %1894 = vmatmul.mubr.f32.gmra.mrb[0].mxu0 %v1802
    %v1895 = vpop.f32.mrb[0].mxu0
    %v1896 = vadd.f32 %v1728, %v1895
    %v1897 = vpop.f32.mrb[0].mxu0
    %1898 = vmatprep.mubr.f32.mxu0 0.0
    %1899 = vmatmul.mubr.f32.gmra.mrb[0].mxu0 %v1805
    %v1900 = vpop.f32.mrb[0].mxu0
    %v1901 = vadd.f32 %v1733, %v1900
    %v1902 = vpop.f32.mrb[0].mxu0
    %1903 = vmatprep.mubr.f32.mxu0 0.0
    %1904 = vmatmul.mubr.f32.gmra.mrb[0].mxu0 %v1808
    %v1905 = vpop.f32.mrb[0].mxu0
    %v1906 = vadd.f32 %v1738, %v1905
    %v1907 = vpop.f32.mrb[0].mxu0
    %1908 = vmatprep.mubr.f32.mxu0 0.0
    %1909 = vmatmul.mubr.f32.gmra.mrb[0].mxu0 %v1811
    %v1910 = vpop.f32.mrb[0].mxu0
    %v1911 = vadd.f32 %v1743, %v1910
    %v1912 = vpop.f32.mrb[0].mxu0
    %1913 = vmatprep.mubr.f32.mxu0 0.0
    %1914 = vmatmul.mubr.f32.gmra.mrb[0].mxu0 %v1814
    %v1915 = vpop.f32.mrb[0].mxu0
    %v1916 = vadd.f32 %v1748, %v1915
    %v1917 = vpop.f32.mrb[0].mxu0
    %1918 = vmatprep.mubr.f32.mxu0 0.0
    %1919 = vmatmul.mubr.f32.gmra.mrb[0].mxu0 %v1817
    %v1920 = vpop.f32.mrb[0].mxu0
    %v1921 = vadd.f32 %v1753, %v1920
    %v1922 = vpop.f32.mrb[0].mxu0
    %1923 = vdwg.mxu0
    %1928 = vrot.lane.b32.xlu0 %v1906, 32
    %v1929 = vpop.permute.xlu0 %1928
    %1930 = vrot.lane.b32.xlu0 %v1911, 32
    %v1931 = vpop.permute.xlu0 %1930
    %1932 = vrot.lane.b32.xlu0 %v1916, 32
    %v1933 = vpop.permute.xlu0 %1932
    %1934 = vrot.lane.b32.xlu0 %v1921, 32
    %v1935 = vpop.permute.xlu0 %1934
    %v1940 = vsel %vm1526, %v1886, %v1929
    %v1941 = vsel %vm1526, %v1891, %v1931
    %v1942 = vsel %vm1526, %v1896, %v1933
    %v1943 = vsel %vm1526, %v1901, %v1935
    %v1944 = vld [vmem:[%s31] sm:$0xff]
    %v1945 = vld [vmem:[%s31 + $0x8] sm:$0xff]
    %v1946 = vld [vmem:[%s31 + $0x10] sm:$0xff]
    %v1947 = vld [vmem:[%s31 + $0x18] sm:$0xff]
    %v1948 = vld [vmem:[%s31 + $0x20] sm:$0xff]
    %v1949 = vld [vmem:[%s31 + $0x28] sm:$0xff]
    %v1950 = vld [vmem:[%s31 + $0x30] sm:$0xff]
    %v1951 = vld [vmem:[%s31 + $0x38] sm:$0xff]
    %vm1952 = vcmask 523264
    %v1954 = vsel %vm1952, %v1940, 0
    %v1957 = vsel %vm1952, %v1941, 0
    %v1960 = vsel %vm1952, %v1942, 0
    %v1963 = vsel %vm1952, %v1943, 0
    %1965 = vmatprep.subr.mxu0 0.0
    %1966 = vmatpush1.msra.mxu0 %v1944
    %1967 = vmatprep.subr.mxu0 0.0
    %1968 = vmatpush1.msra.mxu0 %v1945
    %1969 = vmatprep.subr.mxu0 0.0
    %1970 = vmatpush1.msra.mxu0 %v1946
    %1971 = vmatprep.subr.mxu0 0.0
    %1972 = vmatpush1.msra.mxu0 %v1947
    %1973 = vmatprep.subr.mxu0 0.0
    %1974 = vmatpush1.msra.mxu0 %v1948
    %1975 = vmatprep.subr.mxu0 0.0
    %1976 = vmatpush1.msra.mxu0 %v1949
    %1977 = vmatprep.subr.mxu0 0.0
    %1978 = vmatpush1.msra.mxu0 %v1950
    %1979 = vmatprep.subr.mxu0 0.0
    %1980 = vmatpush1.msra.mxu0 %v1951
    %1981 = vmatprep.subr.mxu0 0.0
    %1982 = vmatpush1.msra.mxu0 0.0
    %1983 = vmatprep.subr.mxu0 0.0
    %1984 = vmatpush1.msra.mxu0 0.0
    %1985 = vmatprep.subr.mxu0 0.0
    %1986 = vmatpush1.msra.mxu0 0.0
    %1987 = vmatprep.subr.mxu0 0.0
    %1988 = vmatpush1.msra.mxu0 0.0
    %1989 = vmatprep.subr.mxu0 0.0
    %1990 = vmatpush1.msra.mxu0 0.0
    %1991 = vmatprep.subr.mxu0 0.0
    %1992 = vmatpush1.msra.mxu0 0.0
    %1993 = vmatprep.subr.mxu0 0.0
    %1994 = vmatpush1.msra.mxu0 0.0
    %1995 = vmatprep.subr.mxu0 0.0
    %1996 = vmatpush1.msra.mxu0 0.0
    %1997 = vmatprep.subr.mxu0 0.0
    %1998 = vmatpush1.msra.mxu0 0.0
    %1999 = vmatprep.subr.mxu0 0.0
    %2000 = vmatpush1.msra.mxu0 0.0
    %2001 = vmatprep.subr.mxu0 0.0
    %2002 = vmatpush1.msra.mxu0 0.0
    %2003 = vmatprep.subr.mxu0 0.0
    %2004 = vmatpush1.msra.mxu0 0.0
    %2005 = vmatprep.subr.mxu0 0.0
    %2006 = vmatpush1.msra.mxu0 0.0
    %2007 = vmatprep.subr.mxu0 0.0
    %2008 = vmatpush1.msra.mxu0 0.0
    %2009 = vmatprep.subr.mxu0 0.0
    %2010 = vmatpush1.msra.mxu0 0.0
    %2011 = vmatprep.subr.mxu0 0.0
    %2012 = vmatpush1.msra.mxu0 0.0
    %2013 = vmatprep.subr.mxu0 0.0
    %2014 = vmatpush1.msra.mxu0 0.0
    %2015 = vmatprep.subr.mxu0 0.0
    %2016 = vmatpush1.msra.mxu0 0.0
    %2017 = vmatprep.subr.mxu0 0.0
    %2018 = vmatpush1.msra.mxu0 0.0
    %2019 = vmatprep.subr.mxu0 0.0
    %2020 = vmatpush1.msra.mxu0 0.0
    %2021 = vmatprep.subr.mxu0 0.0
    %2022 = vmatpush1.msra.mxu0 0.0
    %2023 = vmatprep.subr.mxu0 0.0
    %2024 = vmatpush1.msra.mxu0 0.0
    %2025 = vmatprep.subr.mxu0 0.0
    %2026 = vmatpush1.msra.mxu0 0.0
    %2027 = vmatprep.subr.mxu0 0.0
    %2028 = vmatpush1.msra.mxu0 0.0
    %2029 = vmatprep.mubr.f32.mxu0 0.0
    %2030 = vmatmul.mubr.f32.gmra.mrb[0].mxu0 %v1954
    %v2031 = vpop.f32.mrb[0].mxu0
    %v2032 = vadd.f32 0.0, %v2031
    %v2033 = vpop.f32.mrb[0].mxu0
    %2034 = vmatprep.mubr.f32.mxu0 0.0
    %2035 = vmatmul.mubr.f32.gmra.mrb[0].mxu0 %v1957
    %v2036 = vpop.f32.mrb[0].mxu0
    %v2037 = vadd.f32 0.0, %v2036
    %v2038 = vpop.f32.mrb[0].mxu0
    %2039 = vmatprep.mubr.f32.mxu0 0.0
    %2040 = vmatmul.mubr.f32.gmra.mrb[0].mxu0 %v1960
    %v2041 = vpop.f32.mrb[0].mxu0
    %v2042 = vadd.f32 0.0, %v2041
    %v2043 = vpop.f32.mrb[0].mxu0
    %2044 = vmatprep.mubr.f32.mxu0 0.0
    %2045 = vmatmul.mubr.f32.gmra.mrb[0].mxu0 %v1963
    %v2046 = vpop.f32.mrb[0].mxu0
    %v2047 = vadd.f32 0.0, %v2046
    %v2048 = vpop.f32.mrb[0].mxu0
    %2049 = vdwg.mxu0
    %v2050 = vld [vmem:[#allocation5] sm:$0xff]
    %v2051 = vld [vmem:[%s61] sm:$0xff]
    %v2052 = vld [vmem:[%s61 + $0x8] sm:$0xff]
    %v2053 = vld [vmem:[%s61 + $0x10] sm:$0xff]
    %v2054 = vld [vmem:[%s61 + $0x18] sm:$0xff]
    %2055 = vrot.lane.b32.xlu0 %v2050, 32
    %v2056 = vpop.permute.xlu0 %2055
    %v2057 = vsel %vm1632, %v2056, %v2050
    %2058 = vrot.lane.b32.xlu0 %v2057, 32
    %v2059 = vpop.permute.xlu0 %2058
    %v2060 = vsel %vm1632, %v2059, %v2050
    %v2061 = vmul.f32 %v2060, %v1664
    %v2062 = vmul.f32 %v2060, %v1677
    %2064 = vrot.lane.b32.xlu0 %v2050, 31
    %v2065 = vpop.permute.xlu0 %2064
    %2067 = vrot.lane.b32.xlu0 %v2062, 30
    %v2068 = vpop.permute.xlu0 %2067
    %v2069 = vld [vmem:[%s63] sm:$0xff]
    %v2070 = vld [vmem:[%s63 + $0x8] sm:$0xff]
    %v2071 = vld [vmem:[%s63 + $0x10] sm:$0xff]
    %v2072 = vld [vmem:[%s63 + $0x18] sm:$0xff]
    %2074 = vset.pattern.permute.xlu0 0
    %2075 = vperm.xlu0 %2074, %v2069
    %v2076 = vpop.permute.xlu0 %2075
    %2079 = vset.pattern.permute.xlu0 0
    %2080 = vperm.xlu0 %2079, %v2070
    %v2081 = vpop.permute.xlu0 %2080
    %2084 = vset.pattern.permute.xlu0 0
    %2085 = vperm.xlu0 %2084, %v2071
    %v2086 = vpop.permute.xlu0 %2085
    %2089 = vset.pattern.permute.xlu0 0
    %2090 = vperm.xlu0 %2089, %v2072
    %v2091 = vpop.permute.xlu0 %2090
    %2094 = vrot.lane.b32.xlu0 %v2061, 97
    %v2095 = vpop.permute.xlu0 %2094
    %2096 = vrot.lane.b32.xlu0 %v2065, 97
    %v2097 = vpop.permute.xlu0 %2096
    %2098 = vrot.lane.b32.xlu0 %v2068, 97
    %v2099 = vpop.permute.xlu0 %2098
    %v2104 = vsel %vm461, %v2051, 0
    %v2107 = vsel %vm461, %v2052, 0
    %v2110 = vsel %vm461, %v2053, 0
    %v2113 = vsel %vm461, %v2054, 0
    %2115 = vmatprep.subr.mxu0 0.0
    %2116 = vmatpush1.msra.mxu0 %v2095
    %2117 = vmatprep.subr.mxu0 0.0
    %2118 = vmatpush1.msra.mxu0 %v2097
    %2119 = vmatprep.subr.mxu0 0.0
    %2120 = vmatpush1.msra.mxu0 %v2099
    %2121 = vmatprep.subr.mxu0 0.0
    %2122 = vmatpush1.msra.mxu0 0.0
    %2123 = vmatprep.subr.mxu0 0.0
    %2124 = vmatpush1.msra.mxu0 0.0
    %2125 = vmatprep.subr.mxu0 0.0
    %2126 = vmatpush1.msra.mxu0 0.0
    %2127 = vmatprep.subr.mxu0 0.0
    %2128 = vmatpush1.msra.mxu0 0.0
    %2129 = vmatprep.subr.mxu0 0.0
    %2130 = vmatpush1.msra.mxu0 0.0
    %2131 = vmatprep.subr.mxu0 0.0
    %2132 = vmatpush1.msra.mxu0 0.0
    %2133 = vmatprep.subr.mxu0 0.0
    %2134 = vmatpush1.msra.mxu0 0.0
    %2135 = vmatprep.subr.mxu0 0.0
    %2136 = vmatpush1.msra.mxu0 0.0
    %2137 = vmatprep.subr.mxu0 0.0
    %2138 = vmatpush1.msra.mxu0 0.0
    %2139 = vmatprep.subr.mxu0 0.0
    %2140 = vmatpush1.msra.mxu0 0.0
    %2141 = vmatprep.subr.mxu0 0.0
    %2142 = vmatpush1.msra.mxu0 0.0
    %2143 = vmatprep.subr.mxu0 0.0
    %2144 = vmatpush1.msra.mxu0 0.0
    %2145 = vmatprep.subr.mxu0 0.0
    %2146 = vmatpush1.msra.mxu0 0.0
    %2147 = vmatprep.subr.mxu0 0.0
    %2148 = vmatpush1.msra.mxu0 0.0
    %2149 = vmatprep.subr.mxu0 0.0
    %2150 = vmatpush1.msra.mxu0 0.0
    %2151 = vmatprep.subr.mxu0 0.0
    %2152 = vmatpush1.msra.mxu0 0.0
    %2153 = vmatprep.subr.mxu0 0.0
    %2154 = vmatpush1.msra.mxu0 0.0
    %2155 = vmatprep.subr.mxu0 0.0
    %2156 = vmatpush1.msra.mxu0 0.0
    %2157 = vmatprep.subr.mxu0 0.0
    %2158 = vmatpush1.msra.mxu0 0.0
    %2159 = vmatprep.subr.mxu0 0.0
    %2160 = vmatpush1.msra.mxu0 0.0
    %2161 = vmatprep.subr.mxu0 0.0
    %2162 = vmatpush1.msra.mxu0 0.0
    %2163 = vmatprep.subr.mxu0 0.0
    %2164 = vmatpush1.msra.mxu0 0.0
    %2165 = vmatprep.subr.mxu0 0.0
    %2166 = vmatpush1.msra.mxu0 0.0
    %2167 = vmatprep.subr.mxu0 0.0
    %2168 = vmatpush1.msra.mxu0 0.0
    %2169 = vmatprep.subr.mxu0 0.0
    %2170 = vmatpush1.msra.mxu0 0.0
    %2171 = vmatprep.subr.mxu0 0.0
    %2172 = vmatpush1.msra.mxu0 0.0
    %2173 = vmatprep.subr.mxu0 0.0
    %2174 = vmatpush1.msra.mxu0 0.0
    %2175 = vmatprep.subr.mxu0 0.0
    %2176 = vmatpush1.msra.mxu0 0.0
    %2177 = vmatprep.subr.mxu0 0.0
    %2178 = vmatpush1.msra.mxu0 0.0
    %2179 = vmatprep.mubr.f32.mxu0 0.0
    %2180 = vmatmul.mubr.f32.gmra.mrb[0].mxu0 %v2104
    %v2181 = vpop.f32.mrb[0].mxu0
    %v2182 = vadd.f32 %v2076, %v2181
    %v2183 = vpop.f32.mrb[0].mxu0
    %2184 = vmatprep.mubr.f32.mxu0 0.0
    %2185 = vmatmul.mubr.f32.gmra.mrb[0].mxu0 %v2107
    %v2186 = vpop.f32.mrb[0].mxu0
    %v2187 = vadd.f32 %v2081, %v2186
    %v2188 = vpop.f32.mrb[0].mxu0
    %2189 = vmatprep.mubr.f32.mxu0 0.0
    %2190 = vmatmul.mubr.f32.gmra.mrb[0].mxu0 %v2110
    %v2191 = vpop.f32.mrb[0].mxu0
    %v2192 = vadd.f32 %v2086, %v2191
    %v2193 = vpop.f32.mrb[0].mxu0
    %2194 = vmatprep.mubr.f32.mxu0 0.0
    %2195 = vmatmul.mubr.f32.gmra.mrb[0].mxu0 %v2113
    %v2196 = vpop.f32.mrb[0].mxu0
    %v2197 = vadd.f32 %v2091, %v2196
    %v2198 = vpop.f32.mrb[0].mxu0
    %2199 = vdwg.mxu0
    %v2200 = vmax.f32 %v2182, 0.0
    %v2201 = vmax.f32 %v2187, 0.0
    %v2202 = vmax.f32 %v2192, 0.0
    %v2203 = vmax.f32 %v2197, 0.0
    %v2204 = vld [vmem:[%s65] sm:$0xff]
    %v2205 = vld [vmem:[%s65 + $0x8] sm:$0xff]
    %2206 = vrot.lane.b32.xlu0 %v2200, 32
    %v2207 = vpop.permute.xlu0 %2206
    %v2208 = vsel %vm1632, %v2207, %v2200
    %2209 = vrot.lane.b32.xlu0 %v2201, 32
    %v2210 = vpop.permute.xlu0 %2209
    %v2211 = vsel %vm1632, %v2210, %v2201
    %2212 = vrot.lane.b32.xlu0 %v2202, 32
    %v2213 = vpop.permute.xlu0 %2212
    %v2214 = vsel %vm1632, %v2213, %v2202
    %2215 = vrot.lane.b32.xlu0 %v2203, 32
    %v2216 = vpop.permute.xlu0 %2215
    %v2217 = vsel %vm1632, %v2216, %v2203
    %2218 = vrot.lane.b32.xlu0 %v2208, 32
    %v2219 = vpop.permute.xlu0 %2218
    %2220 = vrot.lane.b32.xlu0 %v2211, 32
    %v2221 = vpop.permute.xlu0 %2220
    %2222 = vrot.lane.b32.xlu0 %v2214, 32
    %v2223 = vpop.permute.xlu0 %2222
    %2224 = vrot.lane.b32.xlu0 %v2217, 32
    %v2225 = vpop.permute.xlu0 %2224
    %v2226 = vsel %vm1632, %v2219, %v2200
    %v2227 = vsel %vm1632, %v2221, %v2201
    %v2228 = vsel %vm1632, %v2223, %v2202
    %v2229 = vsel %vm1632, %v2225, %v2203
    %v2230 = vmul.f32 %v2226, %v1664
    %v2231 = vmul.f32 %v2227, %v1664
    %v2232 = vmul.f32 %v2228, %v1664
    %v2233 = vmul.f32 %v2229, %v1664
    %v2234 = vmul.f32 %v2226, %v1677
    %v2235 = vmul.f32 %v2227, %v1677
    %v2236 = vmul.f32 %v2228, %v1677
    %v2237 = vmul.f32 %v2229, %v1677
    %2242 = vrot.lane.b32.xlu0 %v2200, 31
    %v2243 = vpop.permute.xlu0 %2242
    %2244 = vrot.lane.b32.xlu0 %v2201, 31
    %v2245 = vpop.permute.xlu0 %2244
    %2246 = vrot.lane.b32.xlu0 %v2202, 31
    %v2247 = vpop.permute.xlu0 %2246
    %2248 = vrot.lane.b32.xlu0 %v2203, 31
    %v2249 = vpop.permute.xlu0 %2248
    %2254 = vrot.lane.b32.xlu0 %v2234, 30
    %v2255 = vpop.permute.xlu0 %2254
    %2256 = vrot.lane.b32.xlu0 %v2235, 30
    %v2257 = vpop.permute.xlu0 %2256
    %2258 = vrot.lane.b32.xlu0 %v2236, 30
    %v2259 = vpop.permute.xlu0 %2258
    %2260 = vrot.lane.b32.xlu0 %v2237, 30
    %v2261 = vpop.permute.xlu0 %2260
    %v2262 = vld [vmem:[%s67] sm:$0xff]
    %v2263 = vld [vmem:[%s67 + $0x8] sm:$0xff]
    %2265 = vset.pattern.permute.xlu0 0
    %2266 = vperm.xlu0 %2265, %v2262
    %v2267 = vpop.permute.xlu0 %2266
    %2270 = vset.pattern.permute.xlu0 0
    %2271 = vperm.xlu0 %2270, %v2263
    %v2272 = vpop.permute.xlu0 %2271
    %2278 = vrot.lane.b32.xlu0 %v2230, 97
    %v2279 = vpop.permute.xlu0 %2278
    %2280 = vrot.lane.b32.xlu0 %v2231, 97
    %v2281 = vpop.permute.xlu0 %2280
    %2282 = vrot.lane.b32.xlu0 %v2232, 97
    %v2283 = vpop.permute.xlu0 %2282
    %2284 = vrot.lane.b32.xlu0 %v2233, 97
    %v2285 = vpop.permute.xlu0 %2284
    %2286 = vrot.lane.b32.xlu0 %v2243, 97
    %v2287 = vpop.permute.xlu0 %2286
    %2288 = vrot.lane.b32.xlu0 %v2245, 97
    %v2289 = vpop.permute.xlu0 %2288
    %2290 = vrot.lane.b32.xlu0 %v2247, 97
    %v2291 = vpop.permute.xlu0 %2290
    %2292 = vrot.lane.b32.xlu0 %v2249, 97
    %v2293 = vpop.permute.xlu0 %2292
    %2294 = vrot.lane.b32.xlu0 %v2255, 97
    %v2295 = vpop.permute.xlu0 %2294
    %2296 = vrot.lane.b32.xlu0 %v2257, 97
    %v2297 = vpop.permute.xlu0 %2296
    %2298 = vrot.lane.b32.xlu0 %v2259, 97
    %v2299 = vpop.permute.xlu0 %2298
    %2300 = vrot.lane.b32.xlu0 %v2261, 97
    %v2301 = vpop.permute.xlu0 %2300
    %v2315 = vsel %vm673, %v2204, 0
    %v2318 = vsel %vm673, %v2205, 0
    %2320 = vmatprep.subr.mxu0 0.0
    %2321 = vmatpush1.msra.mxu0 %v2279
    %2322 = vmatprep.subr.mxu0 0.0
    %2323 = vmatpush1.msra.mxu0 %v2281
    %2324 = vmatprep.subr.mxu0 0.0
    %2325 = vmatpush1.msra.mxu0 %v2283
    %2326 = vmatprep.subr.mxu0 0.0
    %2327 = vmatpush1.msra.mxu0 %v2285
    %2328 = vmatprep.subr.mxu0 0.0
    %2329 = vmatpush1.msra.mxu0 %v2287
    %2330 = vmatprep.subr.mxu0 0.0
    %2331 = vmatpush1.msra.mxu0 %v2289
    %2332 = vmatprep.subr.mxu0 0.0
    %2333 = vmatpush1.msra.mxu0 %v2291
    %2334 = vmatprep.subr.mxu0 0.0
    %2335 = vmatpush1.msra.mxu0 %v2293
    %2336 = vmatprep.subr.mxu0 0.0
    %2337 = vmatpush1.msra.mxu0 %v2295
    %2338 = vmatprep.subr.mxu0 0.0
    %2339 = vmatpush1.msra.mxu0 %v2297
    %2340 = vmatprep.subr.mxu0 0.0
    %2341 = vmatpush1.msra.mxu0 %v2299
    %2342 = vmatprep.subr.mxu0 0.0
    %2343 = vmatpush1.msra.mxu0 %v2301
    %2344 = vmatprep.subr.mxu0 0.0
    %2345 = vmatpush1.msra.mxu0 0.0
    %2346 = vmatprep.subr.mxu0 0.0
    %2347 = vmatpush1.msra.mxu0 0.0
    %2348 = vmatprep.subr.mxu0 0.0
    %2349 = vmatpush1.msra.mxu0 0.0
    %2350 = vmatprep.subr.mxu0 0.0
    %2351 = vmatpush1.msra.mxu0 0.0
    %2352 = vmatprep.subr.mxu0 0.0
    %2353 = vmatpush1.msra.mxu0 0.0
    %2354 = vmatprep.subr.mxu0 0.0
    %2355 = vmatpush1.msra.mxu0 0.0
    %2356 = vmatprep.subr.mxu0 0.0
    %2357 = vmatpush1.msra.mxu0 0.0
    %2358 = vmatprep.subr.mxu0 0.0
    %2359 = vmatpush1.msra.mxu0 0.0
    %2360 = vmatprep.subr.mxu0 0.0
    %2361 = vmatpush1.msra.mxu0 0.0
    %2362 = vmatprep.subr.mxu0 0.0
    %2363 = vmatpush1.msra.mxu0 0.0
    %2364 = vmatprep.subr.mxu0 0.0
    %2365 = vmatpush1.msra.mxu0 0.0
    %2366 = vmatprep.subr.mxu0 0.0
    %2367 = vmatpush1.msra.mxu0 0.0
    %2368 = vmatprep.subr.mxu0 0.0
    %2369 = vmatpush1.msra.mxu0 0.0
    %2370 = vmatprep.subr.mxu0 0.0
    %2371 = vmatpush1.msra.mxu0 0.0
    %2372 = vmatprep.subr.mxu0 0.0
    %2373 = vmatpush1.msra.mxu0 0.0
    %2374 = vmatprep.subr.mxu0 0.0
    %2375 = vmatpush1.msra.mxu0 0.0
    %2376 = vmatprep.subr.mxu0 0.0
    %2377 = vmatpush1.msra.mxu0 0.0
    %2378 = vmatprep.subr.mxu0 0.0
    %2379 = vmatpush1.msra.mxu0 0.0
    %2380 = vmatprep.subr.mxu0 0.0
    %2381 = vmatpush1.msra.mxu0 0.0
    %2382 = vmatprep.subr.mxu0 0.0
    %2383 = vmatpush1.msra.mxu0 0.0
    %2384 = vmatprep.mubr.f32.mxu0 0.0
    %2385 = vmatmul.mubr.f32.gmra.mrb[0].mxu0 %v2315
    %v2386 = vpop.f32.mrb[0].mxu0
    %v2387 = vadd.f32 %v2267, %v2386
    %v2388 = vpop.f32.mrb[0].mxu0
    %2389 = vmatprep.mubr.f32.mxu0 0.0
    %2390 = vmatmul.mubr.f32.gmra.mrb[0].mxu0 %v2318
    %v2391 = vpop.f32.mrb[0].mxu0
    %v2392 = vadd.f32 %v2272, %v2391
    %v2393 = vpop.f32.mrb[0].mxu0
    %2394 = vdwg.mxu0
    %v2395 = vmax.f32 %v2387, 0.0
    %v2396 = vmax.f32 %v2392, 0.0
    %v2397 = vld [vmem:[%s69] sm:$0xff]
    %v2398 = vld [vmem:[%s69 + $0x8] sm:$0xff]
    %v2399 = vld [vmem:[%s69 + $0x10] sm:$0xff]
    %v2400 = vld [vmem:[%s69 + $0x18] sm:$0xff]
    %v2401 = vld [vmem:[%s71] sm:$0xff]
    %v2402 = vld [vmem:[%s71 + $0x8] sm:$0xff]
    %v2403 = vld [vmem:[%s71 + $0x10] sm:$0xff]
    %v2404 = vld [vmem:[%s71 + $0x18] sm:$0xff]
    %2406 = vset.pattern.permute.xlu0 0
    %2407 = vperm.xlu0 %2406, %v2401
    %v2408 = vpop.permute.xlu0 %2407
    %2411 = vset.pattern.permute.xlu0 0
    %2412 = vperm.xlu0 %2411, %v2402
    %v2413 = vpop.permute.xlu0 %2412
    %2416 = vset.pattern.permute.xlu0 0
    %2417 = vperm.xlu0 %2416, %v2403
    %v2418 = vpop.permute.xlu0 %2417
    %2421 = vset.pattern.permute.xlu0 0
    %2422 = vperm.xlu0 %2421, %v2404
    %v2423 = vpop.permute.xlu0 %2422
    %v2426 = vsel %vm785, %v2397, 0
    %v2429 = vsel %vm785, %v2398, 0
    %v2432 = vsel %vm785, %v2399, 0
    %v2435 = vsel %vm785, %v2400, 0
    %2437 = vmatprep.subr.mxu0 0.0
    %2438 = vmatpush1.msra.mxu0 %v2395
    %2439 = vmatprep.subr.mxu0 0.0
    %2440 = vmatpush1.msra.mxu0 %v2396
    %2441 = vmatprep.subr.mxu0 0.0
    %2442 = vmatpush1.msra.mxu0 0.0
    %2443 = vmatprep.subr.mxu0 0.0
    %2444 = vmatpush1.msra.mxu0 0.0
    %2445 = vmatprep.subr.mxu0 0.0
    %2446 = vmatpush1.msra.mxu0 0.0
    %2447 = vmatprep.subr.mxu0 0.0
    %2448 = vmatpush1.msra.mxu0 0.0
    %2449 = vmatprep.subr.mxu0 0.0
    %2450 = vmatpush1.msra.mxu0 0.0
    %2451 = vmatprep.subr.mxu0 0.0
    %2452 = vmatpush1.msra.mxu0 0.0
    %2453 = vmatprep.subr.mxu0 0.0
    %2454 = vmatpush1.msra.mxu0 0.0
    %2455 = vmatprep.subr.mxu0 0.0
    %2456 = vmatpush1.msra.mxu0 0.0
    %2457 = vmatprep.subr.mxu0 0.0
    %2458 = vmatpush1.msra.mxu0 0.0
    %2459 = vmatprep.subr.mxu0 0.0
    %2460 = vmatpush1.msra.mxu0 0.0
    %2461 = vmatprep.subr.mxu0 0.0
    %2462 = vmatpush1.msra.mxu0 0.0
    %2463 = vmatprep.subr.mxu0 0.0
    %2464 = vmatpush1.msra.mxu0 0.0
    %2465 = vmatprep.subr.mxu0 0.0
    %2466 = vmatpush1.msra.mxu0 0.0
    %2467 = vmatprep.subr.mxu0 0.0
    %2468 = vmatpush1.msra.mxu0 0.0
    %2469 = vmatprep.subr.mxu0 0.0
    %2470 = vmatpush1.msra.mxu0 0.0
    %2471 = vmatprep.subr.mxu0 0.0
    %2472 = vmatpush1.msra.mxu0 0.0
    %2473 = vmatprep.subr.mxu0 0.0
    %2474 = vmatpush1.msra.mxu0 0.0
    %2475 = vmatprep.subr.mxu0 0.0
    %2476 = vmatpush1.msra.mxu0 0.0
    %2477 = vmatprep.subr.mxu0 0.0
    %2478 = vmatpush1.msra.mxu0 0.0
    %2479 = vmatprep.subr.mxu0 0.0
    %2480 = vmatpush1.msra.mxu0 0.0
    %2481 = vmatprep.subr.mxu0 0.0
    %2482 = vmatpush1.msra.mxu0 0.0
    %2483 = vmatprep.subr.mxu0 0.0
    %2484 = vmatpush1.msra.mxu0 0.0
    %2485 = vmatprep.subr.mxu0 0.0
    %2486 = vmatpush1.msra.mxu0 0.0
    %2487 = vmatprep.subr.mxu0 0.0
    %2488 = vmatpush1.msra.mxu0 0.0
    %2489 = vmatprep.subr.mxu0 0.0
    %2490 = vmatpush1.msra.mxu0 0.0
    %2491 = vmatprep.subr.mxu0 0.0
    %2492 = vmatpush1.msra.mxu0 0.0
    %2493 = vmatprep.subr.mxu0 0.0
    %2494 = vmatpush1.msra.mxu0 0.0
    %2495 = vmatprep.subr.mxu0 0.0
    %2496 = vmatpush1.msra.mxu0 0.0
    %2497 = vmatprep.subr.mxu0 0.0
    %2498 = vmatpush1.msra.mxu0 0.0
    %2499 = vmatprep.subr.mxu0 0.0
    %2500 = vmatpush1.msra.mxu0 0.0
    %2501 = vmatprep.mubr.f32.mxu0 0.0
    %2502 = vmatmul.mubr.f32.gmra.mrb[0].mxu0 %v2426
    %v2503 = vpop.f32.mrb[0].mxu0
    %v2504 = vadd.f32 %v2408, %v2503
    %v2505 = vpop.f32.mrb[0].mxu0
    %2506 = vmatprep.mubr.f32.mxu0 0.0
    %2507 = vmatmul.mubr.f32.gmra.mrb[0].mxu0 %v2429
    %v2508 = vpop.f32.mrb[0].mxu0
    %v2509 = vadd.f32 %v2413, %v2508
    %v2510 = vpop.f32.mrb[0].mxu0
    %2511 = vmatprep.mubr.f32.mxu0 0.0
    %2512 = vmatmul.mubr.f32.gmra.mrb[0].mxu0 %v2432
    %v2513 = vpop.f32.mrb[0].mxu0
    %v2514 = vadd.f32 %v2418, %v2513
    %v2515 = vpop.f32.mrb[0].mxu0
    %2516 = vmatprep.mubr.f32.mxu0 0.0
    %2517 = vmatmul.mubr.f32.gmra.mrb[0].mxu0 %v2435
    %v2518 = vpop.f32.mrb[0].mxu0
    %v2519 = vadd.f32 %v2423, %v2518
    %v2520 = vpop.f32.mrb[0].mxu0
    %2521 = vdwg.mxu0
    %v2522 = vadd.f32 %v2182, %v2504
    %v2523 = vadd.f32 %v2187, %v2509
    %v2524 = vadd.f32 %v2192, %v2514
    %v2525 = vadd.f32 %v2197, %v2519
    %v2526 = vmax.f32 %v2522, 0.0
    %v2527 = vmax.f32 %v2523, 0.0
    %v2528 = vmax.f32 %v2524, 0.0
    %v2529 = vmax.f32 %v2525, 0.0
    %v2530 = vld [vmem:[%s73] sm:$0xff]
    %v2531 = vld [vmem:[%s73 + $0x8] sm:$0xff]
    %2532 = vrot.lane.b32.xlu0 %v2526, 32
    %v2533 = vpop.permute.xlu0 %2532
    %v2534 = vsel %vm1632, %v2533, %v2526
    %2535 = vrot.lane.b32.xlu0 %v2527, 32
    %v2536 = vpop.permute.xlu0 %2535
    %v2537 = vsel %vm1632, %v2536, %v2527
    %2538 = vrot.lane.b32.xlu0 %v2528, 32
    %v2539 = vpop.permute.xlu0 %2538
    %v2540 = vsel %vm1632, %v2539, %v2528
    %2541 = vrot.lane.b32.xlu0 %v2529, 32
    %v2542 = vpop.permute.xlu0 %2541
    %v2543 = vsel %vm1632, %v2542, %v2529
    %2544 = vrot.lane.b32.xlu0 %v2534, 32
    %v2545 = vpop.permute.xlu0 %2544
    %2546 = vrot.lane.b32.xlu0 %v2537, 32
    %v2547 = vpop.permute.xlu0 %2546
    %2548 = vrot.lane.b32.xlu0 %v2540, 32
    %v2549 = vpop.permute.xlu0 %2548
    %2550 = vrot.lane.b32.xlu0 %v2543, 32
    %v2551 = vpop.permute.xlu0 %2550
    %v2552 = vsel %vm1632, %v2545, %v2526
    %v2553 = vsel %vm1632, %v2547, %v2527
    %v2554 = vsel %vm1632, %v2549, %v2528
    %v2555 = vsel %vm1632, %v2551, %v2529
    %v2556 = vmul.f32 %v2552, %v1664
    %v2557 = vmul.f32 %v2553, %v1664
    %v2558 = vmul.f32 %v2554, %v1664
    %v2559 = vmul.f32 %v2555, %v1664
    %v2560 = vmul.f32 %v2552, %v1677
    %v2561 = vmul.f32 %v2553, %v1677
    %v2562 = vmul.f32 %v2554, %v1677
    %v2563 = vmul.f32 %v2555, %v1677
    %2568 = vrot.lane.b32.xlu0 %v2526, 31
    %v2569 = vpop.permute.xlu0 %2568
    %2570 = vrot.lane.b32.xlu0 %v2527, 31
    %v2571 = vpop.permute.xlu0 %2570
    %2572 = vrot.lane.b32.xlu0 %v2528, 31
    %v2573 = vpop.permute.xlu0 %2572
    %2574 = vrot.lane.b32.xlu0 %v2529, 31
    %v2575 = vpop.permute.xlu0 %2574
    %2580 = vrot.lane.b32.xlu0 %v2560, 30
    %v2581 = vpop.permute.xlu0 %2580
    %2582 = vrot.lane.b32.xlu0 %v2561, 30
    %v2583 = vpop.permute.xlu0 %2582
    %2584 = vrot.lane.b32.xlu0 %v2562, 30
    %v2585 = vpop.permute.xlu0 %2584
    %2586 = vrot.lane.b32.xlu0 %v2563, 30
    %v2587 = vpop.permute.xlu0 %2586
    %v2588 = vld [vmem:[%s75] sm:$0xff]
    %v2589 = vld [vmem:[%s75 + $0x8] sm:$0xff]
    %2591 = vset.pattern.permute.xlu0 0
    %2592 = vperm.xlu0 %2591, %v2588
    %v2593 = vpop.permute.xlu0 %2592
    %2596 = vset.pattern.permute.xlu0 0
    %2597 = vperm.xlu0 %2596, %v2589
    %v2598 = vpop.permute.xlu0 %2597
    %2604 = vrot.lane.b32.xlu0 %v2556, 97
    %v2605 = vpop.permute.xlu0 %2604
    %2606 = vrot.lane.b32.xlu0 %v2557, 97
    %v2607 = vpop.permute.xlu0 %2606
    %2608 = vrot.lane.b32.xlu0 %v2558, 97
    %v2609 = vpop.permute.xlu0 %2608
    %2610 = vrot.lane.b32.xlu0 %v2559, 97
    %v2611 = vpop.permute.xlu0 %2610
    %2612 = vrot.lane.b32.xlu0 %v2569, 97
    %v2613 = vpop.permute.xlu0 %2612
    %2614 = vrot.lane.b32.xlu0 %v2571, 97
    %v2615 = vpop.permute.xlu0 %2614
    %2616 = vrot.lane.b32.xlu0 %v2573, 97
    %v2617 = vpop.permute.xlu0 %2616
    %2618 = vrot.lane.b32.xlu0 %v2575, 97
    %v2619 = vpop.permute.xlu0 %2618
    %2620 = vrot.lane.b32.xlu0 %v2581, 97
    %v2621 = vpop.permute.xlu0 %2620
    %2622 = vrot.lane.b32.xlu0 %v2583, 97
    %v2623 = vpop.permute.xlu0 %2622
    %2624 = vrot.lane.b32.xlu0 %v2585, 97
    %v2625 = vpop.permute.xlu0 %2624
    %2626 = vrot.lane.b32.xlu0 %v2587, 97
    %v2627 = vpop.permute.xlu0 %2626
    %v2641 = vsel %vm673, %v2530, 0
    %v2644 = vsel %vm673, %v2531, 0
    %2646 = vmatprep.subr.mxu0 0.0
    %2647 = vmatpush1.msra.mxu0 %v2605
    %2648 = vmatprep.subr.mxu0 0.0
    %2649 = vmatpush1.msra.mxu0 %v2607
    %2650 = vmatprep.subr.mxu0 0.0
    %2651 = vmatpush1.msra.mxu0 %v2609
    %2652 = vmatprep.subr.mxu0 0.0
    %2653 = vmatpush1.msra.mxu0 %v2611
    %2654 = vmatprep.subr.mxu0 0.0
    %2655 = vmatpush1.msra.mxu0 %v2613
    %2656 = vmatprep.subr.mxu0 0.0
    %2657 = vmatpush1.msra.mxu0 %v2615
    %2658 = vmatprep.subr.mxu0 0.0
    %2659 = vmatpush1.msra.mxu0 %v2617
    %2660 = vmatprep.subr.mxu0 0.0
    %2661 = vmatpush1.msra.mxu0 %v2619
    %2662 = vmatprep.subr.mxu0 0.0
    %2663 = vmatpush1.msra.mxu0 %v2621
    %2664 = vmatprep.subr.mxu0 0.0
    %2665 = vmatpush1.msra.mxu0 %v2623
    %2666 = vmatprep.subr.mxu0 0.0
    %2667 = vmatpush1.msra.mxu0 %v2625
    %2668 = vmatprep.subr.mxu0 0.0
    %2669 = vmatpush1.msra.mxu0 %v2627
    %2670 = vmatprep.subr.mxu0 0.0
    %2671 = vmatpush1.msra.mxu0 0.0
    %2672 = vmatprep.subr.mxu0 0.0
    %2673 = vmatpush1.msra.mxu0 0.0
    %2674 = vmatprep.subr.mxu0 0.0
    %2675 = vmatpush1.msra.mxu0 0.0
    %2676 = vmatprep.subr.mxu0 0.0
    %2677 = vmatpush1.msra.mxu0 0.0
    %2678 = vmatprep.subr.mxu0 0.0
    %2679 = vmatpush1.msra.mxu0 0.0
    %2680 = vmatprep.subr.mxu0 0.0
    %2681 = vmatpush1.msra.mxu0 0.0
    %2682 = vmatprep.subr.mxu0 0.0
    %2683 = vmatpush1.msra.mxu0 0.0
    %2684 = vmatprep.subr.mxu0 0.0
    %2685 = vmatpush1.msra.mxu0 0.0
    %2686 = vmatprep.subr.mxu0 0.0
    %2687 = vmatpush1.msra.mxu0 0.0
    %2688 = vmatprep.subr.mxu0 0.0
    %2689 = vmatpush1.msra.mxu0 0.0
    %2690 = vmatprep.subr.mxu0 0.0
    %2691 = vmatpush1.msra.mxu0 0.0
    %2692 = vmatprep.subr.mxu0 0.0
    %2693 = vmatpush1.msra.mxu0 0.0
    %2694 = vmatprep.subr.mxu0 0.0
    %2695 = vmatpush1.msra.mxu0 0.0
    %2696 = vmatprep.subr.mxu0 0.0
    %2697 = vmatpush1.msra.mxu0 0.0
    %2698 = vmatprep.subr.mxu0 0.0
    %2699 = vmatpush1.msra.mxu0 0.0
    %2700 = vmatprep.subr.mxu0 0.0
    %2701 = vmatpush1.msra.mxu0 0.0
    %2702 = vmatprep.subr.mxu0 0.0
    %2703 = vmatpush1.msra.mxu0 0.0
    %2704 = vmatprep.subr.mxu0 0.0
    %2705 = vmatpush1.msra.mxu0 0.0
    %2706 = vmatprep.subr.mxu0 0.0
    %2707 = vmatpush1.msra.mxu0 0.0
    %2708 = vmatprep.subr.mxu0 0.0
    %2709 = vmatpush1.msra.mxu0 0.0
    %2710 = vmatprep.mubr.f32.mxu0 0.0
    %2711 = vmatmul.mubr.f32.gmra.mrb[0].mxu0 %v2641
    %v2712 = vpop.f32.mrb[0].mxu0
    %v2713 = vadd.f32 %v2593, %v2712
    %v2714 = vpop.f32.mrb[0].mxu0
    %2715 = vmatprep.mubr.f32.mxu0 0.0
    %2716 = vmatmul.mubr.f32.gmra.mrb[0].mxu0 %v2644
    %v2717 = vpop.f32.mrb[0].mxu0
    %v2718 = vadd.f32 %v2598, %v2717
    %v2719 = vpop.f32.mrb[0].mxu0
    %2720 = vdwg.mxu0
    %v2721 = vmax.f32 %v2713, 0.0
    %v2722 = vmax.f32 %v2718, 0.0
    %v2723 = vld [vmem:[%s77] sm:$0xff]
    %v2724 = vld [vmem:[%s77 + $0x8] sm:$0xff]
    %v2725 = vld [vmem:[%s77 + $0x10] sm:$0xff]
    %v2726 = vld [vmem:[%s77 + $0x18] sm:$0xff]
    %v2727 = vld [vmem:[%s79] sm:$0xff]
    %v2728 = vld [vmem:[%s79 + $0x8] sm:$0xff]
    %v2729 = vld [vmem:[%s79 + $0x10] sm:$0xff]
    %v2730 = vld [vmem:[%s79 + $0x18] sm:$0xff]
    %2732 = vset.pattern.permute.xlu0 0
    %2733 = vperm.xlu0 %2732, %v2727
    %v2734 = vpop.permute.xlu0 %2733
    %2737 = vset.pattern.permute.xlu0 0
    %2738 = vperm.xlu0 %2737, %v2728
    %v2739 = vpop.permute.xlu0 %2738
    %2742 = vset.pattern.permute.xlu0 0
    %2743 = vperm.xlu0 %2742, %v2729
    %v2744 = vpop.permute.xlu0 %2743
    %2747 = vset.pattern.permute.xlu0 0
    %2748 = vperm.xlu0 %2747, %v2730
    %v2749 = vpop.permute.xlu0 %2748
    %v2752 = vsel %vm785, %v2723, 0
    %v2755 = vsel %vm785, %v2724, 0
    %v2758 = vsel %vm785, %v2725, 0
    %v2761 = vsel %vm785, %v2726, 0
    %2763 = vmatprep.subr.mxu0 0.0
    %2764 = vmatpush1.msra.mxu0 %v2721
    %2765 = vmatprep.subr.mxu0 0.0
    %2766 = vmatpush1.msra.mxu0 %v2722
    %2767 = vmatprep.subr.mxu0 0.0
    %2768 = vmatpush1.msra.mxu0 0.0
    %2769 = vmatprep.subr.mxu0 0.0
    %2770 = vmatpush1.msra.mxu0 0.0
    %2771 = vmatprep.subr.mxu0 0.0
    %2772 = vmatpush1.msra.mxu0 0.0
    %2773 = vmatprep.subr.mxu0 0.0
    %2774 = vmatpush1.msra.mxu0 0.0
    %2775 = vmatprep.subr.mxu0 0.0
    %2776 = vmatpush1.msra.mxu0 0.0
    %2777 = vmatprep.subr.mxu0 0.0
    %2778 = vmatpush1.msra.mxu0 0.0
    %2779 = vmatprep.subr.mxu0 0.0
    %2780 = vmatpush1.msra.mxu0 0.0
    %2781 = vmatprep.subr.mxu0 0.0
    %2782 = vmatpush1.msra.mxu0 0.0
    %2783 = vmatprep.subr.mxu0 0.0
    %2784 = vmatpush1.msra.mxu0 0.0
    %2785 = vmatprep.subr.mxu0 0.0
    %2786 = vmatpush1.msra.mxu0 0.0
    %2787 = vmatprep.subr.mxu0 0.0
    %2788 = vmatpush1.msra.mxu0 0.0
    %2789 = vmatprep.subr.mxu0 0.0
    %2790 = vmatpush1.msra.mxu0 0.0
    %2791 = vmatprep.subr.mxu0 0.0
    %2792 = vmatpush1.msra.mxu0 0.0
    %2793 = vmatprep.subr.mxu0 0.0
    %2794 = vmatpush1.msra.mxu0 0.0
    %2795 = vmatprep.subr.mxu0 0.0
    %2796 = vmatpush1.msra.mxu0 0.0
    %2797 = vmatprep.subr.mxu0 0.0
    %2798 = vmatpush1.msra.mxu0 0.0
    %2799 = vmatprep.subr.mxu0 0.0
    %2800 = vmatpush1.msra.mxu0 0.0
    %2801 = vmatprep.subr.mxu0 0.0
    %2802 = vmatpush1.msra.mxu0 0.0
    %2803 = vmatprep.subr.mxu0 0.0
    %2804 = vmatpush1.msra.mxu0 0.0
    %2805 = vmatprep.subr.mxu0 0.0
    %2806 = vmatpush1.msra.mxu0 0.0
    %2807 = vmatprep.subr.mxu0 0.0
    %2808 = vmatpush1.msra.mxu0 0.0
    %2809 = vmatprep.subr.mxu0 0.0
    %2810 = vmatpush1.msra.mxu0 0.0
    %2811 = vmatprep.subr.mxu0 0.0
    %2812 = vmatpush1.msra.mxu0 0.0
    %2813 = vmatprep.subr.mxu0 0.0
    %2814 = vmatpush1.msra.mxu0 0.0
    %2815 = vmatprep.subr.mxu0 0.0
    %2816 = vmatpush1.msra.mxu0 0.0
    %2817 = vmatprep.subr.mxu0 0.0
    %2818 = vmatpush1.msra.mxu0 0.0
    %2819 = vmatprep.subr.mxu0 0.0
    %2820 = vmatpush1.msra.mxu0 0.0
    %2821 = vmatprep.subr.mxu0 0.0
    %2822 = vmatpush1.msra.mxu0 0.0
    %2823 = vmatprep.subr.mxu0 0.0
    %2824 = vmatpush1.msra.mxu0 0.0
    %2825 = vmatprep.subr.mxu0 0.0
    %2826 = vmatpush1.msra.mxu0 0.0
    %2827 = vmatprep.mubr.f32.mxu0 0.0
    %2828 = vmatmul.mubr.f32.gmra.mrb[0].mxu0 %v2752
    %v2829 = vpop.f32.mrb[0].mxu0
    %v2830 = vadd.f32 %v2734, %v2829
    %v2831 = vpop.f32.mrb[0].mxu0
    %2832 = vmatprep.mubr.f32.mxu0 0.0
    %2833 = vmatmul.mubr.f32.gmra.mrb[0].mxu0 %v2755
    %v2834 = vpop.f32.mrb[0].mxu0
    %v2835 = vadd.f32 %v2739, %v2834
    %v2836 = vpop.f32.mrb[0].mxu0
    %2837 = vmatprep.mubr.f32.mxu0 0.0
    %2838 = vmatmul.mubr.f32.gmra.mrb[0].mxu0 %v2758
    %v2839 = vpop.f32.mrb[0].mxu0
    %v2840 = vadd.f32 %v2744, %v2839
    %v2841 = vpop.f32.mrb[0].mxu0
    %2842 = vmatprep.mubr.f32.mxu0 0.0
    %2843 = vmatmul.mubr.f32.gmra.mrb[0].mxu0 %v2761
    %v2844 = vpop.f32.mrb[0].mxu0
    %v2845 = vadd.f32 %v2749, %v2844
    %v2846 = vpop.f32.mrb[0].mxu0
    %2847 = vdwg.mxu0
    %v2848 = vadd.f32 %v2522, %v2830
    %v2849 = vadd.f32 %v2523, %v2835
    %v2850 = vadd.f32 %v2524, %v2840
    %v2851 = vadd.f32 %v2525, %v2845
    %v2852 = vld [vmem:[%s7] sm:$0xff]
    %v2853 = vld [vmem:[%s7 + $0x8] sm:$0xff]
    %v2854 = vld [vmem:[%s7 + $0x10] sm:$0xff]
    %v2855 = vld [vmem:[%s7 + $0x18] sm:$0xff]
    %v2857 = vsel %vm1526, %v2848, 0
    %v2860 = vsel %vm1526, %v2849, 0
    %v2863 = vsel %vm1526, %v2850, 0
    %v2866 = vsel %vm1526, %v2851, 0
    %2868 = vmatprep.subr.mxu0 0.0
    %2869 = vmatpush1.msra.mxu0 %v2852
    %2870 = vmatprep.subr.mxu0 0.0
    %2871 = vmatpush1.msra.mxu0 %v2853
    %2872 = vmatprep.subr.mxu0 0.0
    %2873 = vmatpush1.msra.mxu0 %v2854
    %2874 = vmatprep.subr.mxu0 0.0
    %2875 = vmatpush1.msra.mxu0 %v2855
    %2876 = vmatprep.subr.mxu0 0.0
    %2877 = vmatpush1.msra.mxu0 0.0
    %2878 = vmatprep.subr.mxu0 0.0
    %2879 = vmatpush1.msra.mxu0 0.0
    %2880 = vmatprep.subr.mxu0 0.0
    %2881 = vmatpush1.msra.mxu0 0.0
    %2882 = vmatprep.subr.mxu0 0.0
    %2883 = vmatpush1.msra.mxu0 0.0
    %2884 = vmatprep.subr.mxu0 0.0
    %2885 = vmatpush1.msra.mxu0 0.0
    %2886 = vmatprep.subr.mxu0 0.0
    %2887 = vmatpush1.msra.mxu0 0.0
    %2888 = vmatprep.subr.mxu0 0.0
    %2889 = vmatpush1.msra.mxu0 0.0
    %2890 = vmatprep.subr.mxu0 0.0
    %2891 = vmatpush1.msra.mxu0 0.0
    %2892 = vmatprep.subr.mxu0 0.0
    %2893 = vmatpush1.msra.mxu0 0.0
    %2894 = vmatprep.subr.mxu0 0.0
    %2895 = vmatpush1.msra.mxu0 0.0
    %2896 = vmatprep.subr.mxu0 0.0
    %2897 = vmatpush1.msra.mxu0 0.0
    %2898 = vmatprep.subr.mxu0 0.0
    %2899 = vmatpush1.msra.mxu0 0.0
    %2900 = vmatprep.subr.mxu0 0.0
    %2901 = vmatpush1.msra.mxu0 0.0
    %2902 = vmatprep.subr.mxu0 0.0
    %2903 = vmatpush1.msra.mxu0 0.0
    %2904 = vmatprep.subr.mxu0 0.0
    %2905 = vmatpush1.msra.mxu0 0.0
    %2906 = vmatprep.subr.mxu0 0.0
    %2907 = vmatpush1.msra.mxu0 0.0
    %2908 = vmatprep.subr.mxu0 0.0
    %2909 = vmatpush1.msra.mxu0 0.0
    %2910 = vmatprep.subr.mxu0 0.0
    %2911 = vmatpush1.msra.mxu0 0.0
    %2912 = vmatprep.subr.mxu0 0.0
    %2913 = vmatpush1.msra.mxu0 0.0
    %2914 = vmatprep.subr.mxu0 0.0
    %2915 = vmatpush1.msra.mxu0 0.0
    %2916 = vmatprep.subr.mxu0 0.0
    %2917 = vmatpush1.msra.mxu0 0.0
    %2918 = vmatprep.subr.mxu0 0.0
    %2919 = vmatpush1.msra.mxu0 0.0
    %2920 = vmatprep.subr.mxu0 0.0
    %2921 = vmatpush1.msra.mxu0 0.0
    %2922 = vmatprep.subr.mxu0 0.0
    %2923 = vmatpush1.msra.mxu0 0.0
    %2924 = vmatprep.subr.mxu0 0.0
    %2925 = vmatpush1.msra.mxu0 0.0
    %2926 = vmatprep.subr.mxu0 0.0
    %2927 = vmatpush1.msra.mxu0 0.0
    %2928 = vmatprep.subr.mxu0 0.0
    %2929 = vmatpush1.msra.mxu0 0.0
    %2930 = vmatprep.subr.mxu0 0.0
    %2931 = vmatpush1.msra.mxu0 0.0
    %2932 = vmatprep.mubr.f32.mxu0 0.0
    %2933 = vmatmul.mubr.f32.gmra.mrb[0].mxu0 %v2857
    %v2934 = vpop.f32.mrb[0].mxu0
    %v2935 = vadd.f32 0.0, %v2934
    %v2936 = vpop.f32.mrb[0].mxu0
    %2937 = vmatprep.mubr.f32.mxu0 0.0
    %2938 = vmatmul.mubr.f32.gmra.mrb[0].mxu0 %v2860
    %v2939 = vpop.f32.mrb[0].mxu0
    %v2940 = vadd.f32 0.0, %v2939
    %v2941 = vpop.f32.mrb[0].mxu0
    %2942 = vmatprep.mubr.f32.mxu0 0.0
    %2943 = vmatmul.mubr.f32.gmra.mrb[0].mxu0 %v2863
    %v2944 = vpop.f32.mrb[0].mxu0
    %v2945 = vadd.f32 0.0, %v2944
    %v2946 = vpop.f32.mrb[0].mxu0
    %2947 = vmatprep.mubr.f32.mxu0 0.0
    %2948 = vmatmul.mubr.f32.gmra.mrb[0].mxu0 %v2866
    %v2949 = vpop.f32.mrb[0].mxu0
    %v2950 = vadd.f32 0.0, %v2949
    %v2951 = vpop.f32.mrb[0].mxu0
    %2952 = vdwg.mxu0
    %v2953 = vld [vmem:[#allocation2] sm:$0xff]
    %v2954 = vld [vmem:[%s33] sm:$0xff]
    %v2955 = vld [vmem:[%s33 + $0x8] sm:$0xff]
    %v2956 = vld [vmem:[%s33 + $0x10] sm:$0xff]
    %v2957 = vld [vmem:[%s33 + $0x18] sm:$0xff]
    %v2958 = vld [vmem:[%s33 + $0x20] sm:$0xff]
    %v2959 = vld [vmem:[%s33 + $0x28] sm:$0xff]
    %v2960 = vld [vmem:[%s33 + $0x30] sm:$0xff]
    %v2961 = vld [vmem:[%s33 + $0x38] sm:$0xff]
    %vm2962 = vcmask 1048064
    %2963 = vrot.lane.b32.xlu0 %v2953, 64
    %v2964 = vpop.permute.xlu0 %2963
    %v2965 = vsel %vm2962, %v2964, %v2953
    %2966 = vrot.lane.b32.xlu0 %v2935, 64
    %v2967 = vpop.permute.xlu0 %2966
    %v2968 = vsel %vm2962, %v2967, %v2935
    %2969 = vrot.lane.b32.xlu0 %v2940, 64
    %v2970 = vpop.permute.xlu0 %2969
    %v2971 = vsel %vm2962, %v2970, %v2940
    %2972 = vrot.lane.b32.xlu0 %v2945, 64
    %v2973 = vpop.permute.xlu0 %2972
    %v2974 = vsel %vm2962, %v2973, %v2945
    %2975 = vrot.lane.b32.xlu0 %v2950, 64
    %v2976 = vpop.permute.xlu0 %2975
    %v2977 = vsel %vm2962, %v2976, %v2950
    %2978 = vrot.lane.b32.xlu0 %v2032, 64
    %v2979 = vpop.permute.xlu0 %2978
    %v2980 = vsel %vm2962, %v2979, %v2032
    %2981 = vrot.lane.b32.xlu0 %v2037, 64
    %v2982 = vpop.permute.xlu0 %2981
    %v2983 = vsel %vm2962, %v2982, %v2037
    %2984 = vrot.lane.b32.xlu0 %v2042, 64
    %v2985 = vpop.permute.xlu0 %2984
    %v2986 = vsel %vm2962, %v2985, %v2042
    %2987 = vrot.lane.b32.xlu0 %v2047, 64
    %v2988 = vpop.permute.xlu0 %2987
    %v2989 = vsel %vm2962, %v2988, %v2047
    %2990 = vrot.lane.b32.xlu0 %v2965, 64
    %v2991 = vpop.permute.xlu0 %2990
    %2992 = vrot.lane.b32.xlu0 %v2968, 64
    %v2993 = vpop.permute.xlu0 %2992
    %2994 = vrot.lane.b32.xlu0 %v2971, 64
    %v2995 = vpop.permute.xlu0 %2994
    %2996 = vrot.lane.b32.xlu0 %v2974, 64
    %v2997 = vpop.permute.xlu0 %2996
    %2998 = vrot.lane.b32.xlu0 %v2977, 64
    %v2999 = vpop.permute.xlu0 %2998
    %3000 = vrot.lane.b32.xlu0 %v2980, 64
    %v3001 = vpop.permute.xlu0 %3000
    %3002 = vrot.lane.b32.xlu0 %v2983, 64
    %v3003 = vpop.permute.xlu0 %3002
    %3004 = vrot.lane.b32.xlu0 %v2986, 64
    %v3005 = vpop.permute.xlu0 %3004
    %3006 = vrot.lane.b32.xlu0 %v2989, 64
    %v3007 = vpop.permute.xlu0 %3006
    %v3008 = vsel %vm2962, %v2991, %v2953
    %v3009 = vsel %vm2962, %v2993, %v2935
    %v3010 = vsel %vm2962, %v2995, %v2940
    %v3011 = vsel %vm2962, %v2997, %v2945
    %v3012 = vsel %vm2962, %v2999, %v2950
    %v3013 = vsel %vm2962, %v3001, %v2032
    %v3014 = vsel %vm2962, %v3003, %v2037
    %v3015 = vsel %vm2962, %v3005, %v2042
    %v3016 = vsel %vm2962, %v3007, %v2047
    %v3017 = vld [vmem:[#allocation14] sm:$0x1]
    %v3019 = vlaneseq
    %v3020 = vshrl.u32 %v3019, 7
    %v3021 = vsub.s32 0, %v3020
    %v3022 = vrot.slane %v3017, %v3021
    %3023 = vrot.lane.b32.xlu0 %v3022, 63
    %v3024 = vpop.permute.xlu0 %3023
    %v3026 = vmul.f32 %v3008, %v3024
    %v3027 = vmul.f32 %v3009, %v3024
    %v3028 = vmul.f32 %v3010, %v3024
    %v3029 = vmul.f32 %v3011, %v3024
    %v3030 = vmul.f32 %v3012, %v3024
    %v3031 = vmul.f32 %v3013, %v3024
    %v3032 = vmul.f32 %v3014, %v3024
    %v3033 = vmul.f32 %v3015, %v3024
    %v3034 = vmul.f32 %v3016, %v3024
    %v3035 = vld [vmem:[#allocation16] sm:$0x1]
    %v3037 = vlaneseq
    %v3038 = vshrl.u32 %v3037, 7
    %v3039 = vsub.s32 0, %v3038
    %v3040 = vrot.slane %v3035, %v3039
    %3041 = vrot.lane.b32.xlu0 %v3040, 1
    %v3042 = vpop.permute.xlu0 %3041
    %v3044 = vmul.f32 %v3008, %v3042
    %v3045 = vmul.f32 %v3009, %v3042
    %v3046 = vmul.f32 %v3010, %v3042
    %v3047 = vmul.f32 %v3011, %v3042
    %v3048 = vmul.f32 %v3012, %v3042
    %v3049 = vmul.f32 %v3013, %v3042
    %v3050 = vmul.f32 %v3014, %v3042
    %v3051 = vmul.f32 %v3015, %v3042
    %v3052 = vmul.f32 %v3016, %v3042
    %3062 = vrot.lane.b32.xlu0 %v2953, 63
    %v3063 = vpop.permute.xlu0 %3062
    %3064 = vrot.lane.b32.xlu0 %v2935, 63
    %v3065 = vpop.permute.xlu0 %3064
    %3066 = vrot.lane.b32.xlu0 %v2940, 63
    %v3067 = vpop.permute.xlu0 %3066
    %3068 = vrot.lane.b32.xlu0 %v2945, 63
    %v3069 = vpop.permute.xlu0 %3068
    %3070 = vrot.lane.b32.xlu0 %v2950, 63
    %v3071 = vpop.permute.xlu0 %3070
    %3072 = vrot.lane.b32.xlu0 %v2032, 63
    %v3073 = vpop.permute.xlu0 %3072
    %3074 = vrot.lane.b32.xlu0 %v2037, 63
    %v3075 = vpop.permute.xlu0 %3074
    %3076 = vrot.lane.b32.xlu0 %v2042, 63
    %v3077 = vpop.permute.xlu0 %3076
    %3078 = vrot.lane.b32.xlu0 %v2047, 63
    %v3079 = vpop.permute.xlu0 %3078
    %3089 = vrot.lane.b32.xlu0 %v3044, 62
    %v3090 = vpop.permute.xlu0 %3089
    %3091 = vrot.lane.b32.xlu0 %v3045, 62
    %v3092 = vpop.permute.xlu0 %3091
    %3093 = vrot.lane.b32.xlu0 %v3046, 62
    %v3094 = vpop.permute.xlu0 %3093
    %3095 = vrot.lane.b32.xlu0 %v3047, 62
    %v3096 = vpop.permute.xlu0 %3095
    %3097 = vrot.lane.b32.xlu0 %v3048, 62
    %v3098 = vpop.permute.xlu0 %3097
    %3099 = vrot.lane.b32.xlu0 %v3049, 62
    %v3100 = vpop.permute.xlu0 %3099
    %3101 = vrot.lane.b32.xlu0 %v3050, 62
    %v3102 = vpop.permute.xlu0 %3101
    %3103 = vrot.lane.b32.xlu0 %v3051, 62
    %v3104 = vpop.permute.xlu0 %3103
    %3105 = vrot.lane.b32.xlu0 %v3052, 62
    %v3106 = vpop.permute.xlu0 %3105
    %v3107 = vld [vmem:[%s35] sm:$0xff]
    %v3108 = vld [vmem:[%s35 + $0x8] sm:$0xff]
    %v3109 = vld [vmem:[%s35 + $0x10] sm:$0xff]
    %v3110 = vld [vmem:[%s35 + $0x18] sm:$0xff]
    %3112 = vset.pattern.permute.xlu0 0
    %3113 = vperm.xlu0 %3112, %v3107
    %v3114 = vpop.permute.xlu0 %3113
    %3117 = vset.pattern.permute.xlu0 0
    %3118 = vperm.xlu0 %3117, %v3108
    %v3119 = vpop.permute.xlu0 %3118
    %3122 = vset.pattern.permute.xlu0 0
    %3123 = vperm.xlu0 %3122, %v3109
    %v3124 = vpop.permute.xlu0 %3123
    %3127 = vset.pattern.permute.xlu0 0
    %3128 = vperm.xlu0 %3127, %v3110
    %v3129 = vpop.permute.xlu0 %3128
    %3140 = vrot.lane.b32.xlu0 %v3026, 65
    %v3141 = vpop.permute.xlu0 %3140
    %3142 = vrot.lane.b32.xlu0 %v3027, 65
    %v3143 = vpop.permute.xlu0 %3142
    %3144 = vrot.lane.b32.xlu0 %v3028, 65
    %v3145 = vpop.permute.xlu0 %3144
    %3146 = vrot.lane.b32.xlu0 %v3029, 65
    %v3147 = vpop.permute.xlu0 %3146
    %3148 = vrot.lane.b32.xlu0 %v3030, 65
    %v3149 = vpop.permute.xlu0 %3148
    %3150 = vrot.lane.b32.xlu0 %v3031, 65
    %v3151 = vpop.permute.xlu0 %3150
    %3152 = vrot.lane.b32.xlu0 %v3032, 65
    %v3153 = vpop.permute.xlu0 %3152
    %3154 = vrot.lane.b32.xlu0 %v3033, 65
    %v3155 = vpop.permute.xlu0 %3154
    %3156 = vrot.lane.b32.xlu0 %v3034, 65
    %v3157 = vpop.permute.xlu0 %3156
    %3158 = vrot.lane.b32.xlu0 %v3063, 65
    %v3159 = vpop.permute.xlu0 %3158
    %3160 = vrot.lane.b32.xlu0 %v3065, 65
    %v3161 = vpop.permute.xlu0 %3160
    %3162 = vrot.lane.b32.xlu0 %v3067, 65
    %v3163 = vpop.permute.xlu0 %3162
    %3164 = vrot.lane.b32.xlu0 %v3069, 65
    %v3165 = vpop.permute.xlu0 %3164
    %3166 = vrot.lane.b32.xlu0 %v3071, 65
    %v3167 = vpop.permute.xlu0 %3166
    %3168 = vrot.lane.b32.xlu0 %v3073, 65
    %v3169 = vpop.permute.xlu0 %3168
    %3170 = vrot.lane.b32.xlu0 %v3075, 65
    %v3171 = vpop.permute.xlu0 %3170
    %3172 = vrot.lane.b32.xlu0 %v3077, 65
    %v3173 = vpop.permute.xlu0 %3172
    %3174 = vrot.lane.b32.xlu0 %v3079, 65
    %v3175 = vpop.permute.xlu0 %3174
    %3176 = vrot.lane.b32.xlu0 %v3090, 65
    %v3177 = vpop.permute.xlu0 %3176
    %3178 = vrot.lane.b32.xlu0 %v3092, 65
    %v3179 = vpop.permute.xlu0 %3178
    %3180 = vrot.lane.b32.xlu0 %v3094, 65
    %v3181 = vpop.permute.xlu0 %3180
    %3182 = vrot.lane.b32.xlu0 %v3096, 65
    %v3183 = vpop.permute.xlu0 %3182
    %3184 = vrot.lane.b32.xlu0 %v3098, 65
    %v3185 = vpop.permute.xlu0 %3184
    %3186 = vrot.lane.b32.xlu0 %v3100, 65
    %v3187 = vpop.permute.xlu0 %3186
    %3188 = vrot.lane.b32.xlu0 %v3102, 65
    %v3189 = vpop.permute.xlu0 %3188
    %3190 = vrot.lane.b32.xlu0 %v3104, 65
    %v3191 = vpop.permute.xlu0 %3190
    %3192 = vrot.lane.b32.xlu0 %v3106, 65
    %v3193 = vpop.permute.xlu0 %3192
    %vm3221 = vcmask 719872
    %v3223 = vsel %vm3221, %v2955, 0
    %v3226 = vsel %vm3221, %v2957, 0
    %v3229 = vsel %vm3221, %v2959, 0
    %v3232 = vsel %vm3221, %v2961, 0
    %3234 = vmatprep.subr.mxu0 0.0
    %3235 = vmatpush1.msra.mxu0 %v3141
    %3236 = vmatprep.subr.mxu0 0.0
    %3237 = vmatpush1.msra.mxu0 %v3143
    %3238 = vmatprep.subr.mxu0 0.0
    %3239 = vmatpush1.msra.mxu0 %v3145
    %3240 = vmatprep.subr.mxu0 0.0
    %3241 = vmatpush1.msra.mxu0 %v3147
    %3242 = vmatprep.subr.mxu0 0.0
    %3243 = vmatpush1.msra.mxu0 %v3149
    %3244 = vmatprep.subr.mxu0 0.0
    %3245 = vmatpush1.msra.mxu0 %v3151
    %3246 = vmatprep.subr.mxu0 0.0
    %3247 = vmatpush1.msra.mxu0 %v3153
    %3248 = vmatprep.subr.mxu0 0.0
    %3249 = vmatpush1.msra.mxu0 %v3155
    %3250 = vmatprep.subr.mxu0 0.0
    %3251 = vmatpush1.msra.mxu0 %v3157
    %3252 = vmatprep.subr.mxu0 0.0
    %3253 = vmatpush1.msra.mxu0 %v3159
    %3254 = vmatprep.subr.mxu0 0.0
    %3255 = vmatpush1.msra.mxu0 %v3161
    %3256 = vmatprep.subr.mxu0 0.0
    %3257 = vmatpush1.msra.mxu0 %v3163
    %3258 = vmatprep.subr.mxu0 0.0
    %3259 = vmatpush1.msra.mxu0 %v3165
    %3260 = vmatprep.subr.mxu0 0.0
    %3261 = vmatpush1.msra.mxu0 %v3167
    %3262 = vmatprep.subr.mxu0 0.0
    %3263 = vmatpush1.msra.mxu0 %v3169
    %3264 = vmatprep.subr.mxu0 0.0
    %3265 = vmatpush1.msra.mxu0 %v3171
    %3266 = vmatprep.subr.mxu0 0.0
    %3267 = vmatpush1.msra.mxu0 %v3173
    %3268 = vmatprep.subr.mxu0 0.0
    %3269 = vmatpush1.msra.mxu0 %v3175
    %3270 = vmatprep.subr.mxu0 0.0
    %3271 = vmatpush1.msra.mxu0 %v3177
    %3272 = vmatprep.subr.mxu0 0.0
    %3273 = vmatpush1.msra.mxu0 %v3179
    %3274 = vmatprep.subr.mxu0 0.0
    %3275 = vmatpush1.msra.mxu0 %v3181
    %3276 = vmatprep.subr.mxu0 0.0
    %3277 = vmatpush1.msra.mxu0 %v3183
    %3278 = vmatprep.subr.mxu0 0.0
    %3279 = vmatpush1.msra.mxu0 %v3185
    %3280 = vmatprep.subr.mxu0 0.0
    %3281 = vmatpush1.msra.mxu0 %v3187
    %3282 = vmatprep.subr.mxu0 0.0
    %3283 = vmatpush1.msra.mxu0 %v3189
    %3284 = vmatprep.subr.mxu0 0.0
    %3285 = vmatpush1.msra.mxu0 %v3191
    %3286 = vmatprep.subr.mxu0 0.0
    %3287 = vmatpush1.msra.mxu0 %v3193
    %3288 = vmatprep.subr.mxu0 0.0
    %3289 = vmatpush1.msra.mxu0 0.0
    %3290 = vmatprep.subr.mxu0 0.0
    %3291 = vmatpush1.msra.mxu0 0.0
    %3292 = vmatprep.subr.mxu0 0.0
    %3293 = vmatpush1.msra.mxu0 0.0
    %3294 = vmatprep.subr.mxu0 0.0
    %3295 = vmatpush1.msra.mxu0 0.0
    %3296 = vmatprep.subr.mxu0 0.0
    %3297 = vmatpush1.msra.mxu0 0.0
    %3298 = vmatprep.mubr.f32.mxu0 %v3223
    %3299 = vmatmul.mubr.f32.gmra.mrb[0].mxu0 %v2954
    %v3300 = vpop.f32.mrb[0].mxu0
    %v3301 = vadd.f32 %v3114, %v3300
    %v3302 = vpop.f32.mrb[0].mxu0
    %3303 = vmatprep.mubr.f32.mxu0 %v3226
    %3304 = vmatmul.mubr.f32.gmra.mrb[0].mxu0 %v2956
    %v3305 = vpop.f32.mrb[0].mxu0
    %v3306 = vadd.f32 %v3119, %v3305
    %v3307 = vpop.f32.mrb[0].mxu0
    %3308 = vmatprep.mubr.f32.mxu0 %v3229
    %3309 = vmatmul.mubr.f32.gmra.mrb[0].mxu0 %v2958
    %v3310 = vpop.f32.mrb[0].mxu0
    %v3311 = vadd.f32 %v3124, %v3310
    %v3312 = vpop.f32.mrb[0].mxu0
    %3313 = vmatprep.mubr.f32.mxu0 %v3232
    %3314 = vmatmul.mubr.f32.gmra.mrb[0].mxu0 %v2960
    %v3315 = vpop.f32.mrb[0].mxu0
    %v3316 = vadd.f32 %v3129, %v3315
    %v3317 = vpop.f32.mrb[0].mxu0
    %3318 = vdwg.mxu0
    %v3319 = vmax.f32 %v3301, 0.0
    %v3320 = vmax.f32 %v3306, 0.0
    %v3321 = vmax.f32 %v3311, 0.0
    %v3322 = vmax.f32 %v3316, 0.0
    %v3323 = vld [vmem:[#allocation20] sm:$0xff]
    %v3324 = vld [vmem:[#allocation20 + $0x8] sm:$0xff]
    %3325 = vrot.lane.b32.xlu0 %v3319, 64
    %v3326 = vpop.permute.xlu0 %3325
    %v3327 = vsel %vm2962, %v3326, %v3319
    %3328 = vrot.lane.b32.xlu0 %v3320, 64
    %v3329 = vpop.permute.xlu0 %3328
    %v3330 = vsel %vm2962, %v3329, %v3320
    %3331 = vrot.lane.b32.xlu0 %v3321, 64
    %v3332 = vpop.permute.xlu0 %3331
    %v3333 = vsel %vm2962, %v3332, %v3321
    %3334 = vrot.lane.b32.xlu0 %v3322, 64
    %v3335 = vpop.permute.xlu0 %3334
    %v3336 = vsel %vm2962, %v3335, %v3322
    %3337 = vrot.lane.b32.xlu0 %v3327, 64
    %v3338 = vpop.permute.xlu0 %3337
    %3339 = vrot.lane.b32.xlu0 %v3330, 64
    %v3340 = vpop.permute.xlu0 %3339
    %3341 = vrot.lane.b32.xlu0 %v3333, 64
    %v3342 = vpop.permute.xlu0 %3341
    %3343 = vrot.lane.b32.xlu0 %v3336, 64
    %v3344 = vpop.permute.xlu0 %3343
    %v3345 = vsel %vm2962, %v3338, %v3319
    %v3346 = vsel %vm2962, %v3340, %v3320
    %v3347 = vsel %vm2962, %v3342, %v3321
    %v3348 = vsel %vm2962, %v3344, %v3322
    %v3349 = vmul.f32 %v3345, %v3024
    %v3350 = vmul.f32 %v3346, %v3024
    %v3351 = vmul.f32 %v3347, %v3024
    %v3352 = vmul.f32 %v3348, %v3024
    %v3353 = vmul.f32 %v3345, %v3042
    %v3354 = vmul.f32 %v3346, %v3042
    %v3355 = vmul.f32 %v3347, %v3042
    %v3356 = vmul.f32 %v3348, %v3042
    %3361 = vrot.lane.b32.xlu0 %v3319, 63
    %v3362 = vpop.permute.xlu0 %3361
    %3363 = vrot.lane.b32.xlu0 %v3320, 63
    %v3364 = vpop.permute.xlu0 %3363
    %3365 = vrot.lane.b32.xlu0 %v3321, 63
    %v3366 = vpop.permute.xlu0 %3365
    %3367 = vrot.lane.b32.xlu0 %v3322, 63
    %v3368 = vpop.permute.xlu0 %3367
    %3373 = vrot.lane.b32.xlu0 %v3353, 62
    %v3374 = vpop.permute.xlu0 %3373
    %3375 = vrot.lane.b32.xlu0 %v3354, 62
    %v3376 = vpop.permute.xlu0 %3375
    %3377 = vrot.lane.b32.xlu0 %v3355, 62
    %v3378 = vpop.permute.xlu0 %3377
    %3379 = vrot.lane.b32.xlu0 %v3356, 62
    %v3380 = vpop.permute.xlu0 %3379
    %v3381 = vld [vmem:[%s39] sm:$0xff]
    %v3382 = vld [vmem:[%s39 + $0x8] sm:$0xff]
    %3384 = vset.pattern.permute.xlu0 0
    %3385 = vperm.xlu0 %3384, %v3381
    %v3386 = vpop.permute.xlu0 %3385
    %3389 = vset.pattern.permute.xlu0 0
    %3390 = vperm.xlu0 %3389, %v3382
    %v3391 = vpop.permute.xlu0 %3390
    %3397 = vrot.lane.b32.xlu0 %v3349, 65
    %v3398 = vpop.permute.xlu0 %3397
    %3399 = vrot.lane.b32.xlu0 %v3350, 65
    %v3400 = vpop.permute.xlu0 %3399
    %3401 = vrot.lane.b32.xlu0 %v3351, 65
    %v3402 = vpop.permute.xlu0 %3401
    %3403 = vrot.lane.b32.xlu0 %v3352, 65
    %v3404 = vpop.permute.xlu0 %3403
    %3405 = vrot.lane.b32.xlu0 %v3362, 65
    %v3406 = vpop.permute.xlu0 %3405
    %3407 = vrot.lane.b32.xlu0 %v3364, 65
    %v3408 = vpop.permute.xlu0 %3407
    %3409 = vrot.lane.b32.xlu0 %v3366, 65
    %v3410 = vpop.permute.xlu0 %3409
    %3411 = vrot.lane.b32.xlu0 %v3368, 65
    %v3412 = vpop.permute.xlu0 %3411
    %3413 = vrot.lane.b32.xlu0 %v3374, 65
    %v3414 = vpop.permute.xlu0 %3413
    %3415 = vrot.lane.b32.xlu0 %v3376, 65
    %v3416 = vpop.permute.xlu0 %3415
    %3417 = vrot.lane.b32.xlu0 %v3378, 65
    %v3418 = vpop.permute.xlu0 %3417
    %3419 = vrot.lane.b32.xlu0 %v3380, 65
    %v3420 = vpop.permute.xlu0 %3419
    %v3434 = vsel %vm673, %v3323, 0
    %v3437 = vsel %vm673, %v3324, 0
    %3439 = vmatprep.subr.mxu0 0.0
    %3440 = vmatpush1.msra.mxu0 %v3398
    %3441 = vmatprep.subr.mxu0 0.0
    %3442 = vmatpush1.msra.mxu0 %v3400
    %3443 = vmatprep.subr.mxu0 0.0
    %3444 = vmatpush1.msra.mxu0 %v3402
    %3445 = vmatprep.subr.mxu0 0.0
    %3446 = vmatpush1.msra.mxu0 %v3404
    %3447 = vmatprep.subr.mxu0 0.0
    %3448 = vmatpush1.msra.mxu0 %v3406
    %3449 = vmatprep.subr.mxu0 0.0
    %3450 = vmatpush1.msra.mxu0 %v3408
    %3451 = vmatprep.subr.mxu0 0.0
    %3452 = vmatpush1.msra.mxu0 %v3410
    %3453 = vmatprep.subr.mxu0 0.0
    %3454 = vmatpush1.msra.mxu0 %v3412
    %3455 = vmatprep.subr.mxu0 0.0
    %3456 = vmatpush1.msra.mxu0 %v3414
    %3457 = vmatprep.subr.mxu0 0.0
    %3458 = vmatpush1.msra.mxu0 %v3416
    %3459 = vmatprep.subr.mxu0 0.0
    %3460 = vmatpush1.msra.mxu0 %v3418
    %3461 = vmatprep.subr.mxu0 0.0
    %3462 = vmatpush1.msra.mxu0 %v3420
    %3463 = vmatprep.subr.mxu0 0.0
    %3464 = vmatpush1.msra.mxu0 0.0
    %3465 = vmatprep.subr.mxu0 0.0
    %3466 = vmatpush1.msra.mxu0 0.0
    %3467 = vmatprep.subr.mxu0 0.0
    %3468 = vmatpush1.msra.mxu0 0.0
    %3469 = vmatprep.subr.mxu0 0.0
    %3470 = vmatpush1.msra.mxu0 0.0
    %3471 = vmatprep.subr.mxu0 0.0
    %3472 = vmatpush1.msra.mxu0 0.0
    %3473 = vmatprep.subr.mxu0 0.0
    %3474 = vmatpush1.msra.mxu0 0.0
    %3475 = vmatprep.subr.mxu0 0.0
    %3476 = vmatpush1.msra.mxu0 0.0
    %3477 = vmatprep.subr.mxu0 0.0
    %3478 = vmatpush1.msra.mxu0 0.0
    %3479 = vmatprep.subr.mxu0 0.0
    %3480 = vmatpush1.msra.mxu0 0.0
    %3481 = vmatprep.subr.mxu0 0.0
    %3482 = vmatpush1.msra.mxu0 0.0
    %3483 = vmatprep.subr.mxu0 0.0
    %3484 = vmatpush1.msra.mxu0 0.0
    %3485 = vmatprep.subr.mxu0 0.0
    %3486 = vmatpush1.msra.mxu0 0.0
    %3487 = vmatprep.subr.mxu0 0.0
    %3488 = vmatpush1.msra.mxu0 0.0
    %3489 = vmatprep.subr.mxu0 0.0
    %3490 = vmatpush1.msra.mxu0 0.0
    %3491 = vmatprep.subr.mxu0 0.0
    %3492 = vmatpush1.msra.mxu0 0.0
    %3493 = vmatprep.subr.mxu0 0.0
    %3494 = vmatpush1.msra.mxu0 0.0
    %3495 = vmatprep.subr.mxu0 0.0
    %3496 = vmatpush1.msra.mxu0 0.0
    %3497 = vmatprep.subr.mxu0 0.0
    %3498 = vmatpush1.msra.mxu0 0.0
    %3499 = vmatprep.subr.mxu0 0.0
    %3500 = vmatpush1.msra.mxu0 0.0
    %3501 = vmatprep.subr.mxu0 0.0
    %3502 = vmatpush1.msra.mxu0 0.0
    %3503 = vmatprep.mubr.f32.mxu0 0.0
    %3504 = vmatmul.mubr.f32.gmra.mrb[0].mxu0 %v3434
    %v3505 = vpop.f32.mrb[0].mxu0
    %v3506 = vadd.f32 %v3386, %v3505
    %v3507 = vpop.f32.mrb[0].mxu0
    %3508 = vmatprep.mubr.f32.mxu0 0.0
    %3509 = vmatmul.mubr.f32.gmra.mrb[0].mxu0 %v3437
    %v3510 = vpop.f32.mrb[0].mxu0
    %v3511 = vadd.f32 %v3391, %v3510
    %v3512 = vpop.f32.mrb[0].mxu0
    %3513 = vdwg.mxu0
    %v3514 = vmax.f32 %v3506, 0.0
    %v3515 = vmax.f32 %v3511, 0.0
    %v3516 = vld [vmem:[%s41] sm:$0xff]
    %v3517 = vld [vmem:[%s41 + $0x8] sm:$0xff]
    %v3518 = vld [vmem:[%s41 + $0x10] sm:$0xff]
    %v3519 = vld [vmem:[%s41 + $0x18] sm:$0xff]
    %v3520 = vld [vmem:[%s43] sm:$0xff]
    %v3521 = vld [vmem:[%s43 + $0x8] sm:$0xff]
    %v3522 = vld [vmem:[%s43 + $0x10] sm:$0xff]
    %v3523 = vld [vmem:[%s43 + $0x18] sm:$0xff]
    %3525 = vset.pattern.permute.xlu0 0
    %3526 = vperm.xlu0 %3525, %v3520
    %v3527 = vpop.permute.xlu0 %3526
    %3530 = vset.pattern.permute.xlu0 0
    %3531 = vperm.xlu0 %3530, %v3521
    %v3532 = vpop.permute.xlu0 %3531
    %3535 = vset.pattern.permute.xlu0 0
    %3536 = vperm.xlu0 %3535, %v3522
    %v3537 = vpop.permute.xlu0 %3536
    %3540 = vset.pattern.permute.xlu0 0
    %3541 = vperm.xlu0 %3540, %v3523
    %v3542 = vpop.permute.xlu0 %3541
    %v3545 = vsel %vm785, %v3516, 0
    %v3548 = vsel %vm785, %v3517, 0
    %v3551 = vsel %vm785, %v3518, 0
    %v3554 = vsel %vm785, %v3519, 0
    %3556 = vmatprep.subr.mxu0 0.0
    %3557 = vmatpush1.msra.mxu0 %v3514
    %3558 = vmatprep.subr.mxu0 0.0
    %3559 = vmatpush1.msra.mxu0 %v3515
    %3560 = vmatprep.subr.mxu0 0.0
    %3561 = vmatpush1.msra.mxu0 0.0
    %3562 = vmatprep.subr.mxu0 0.0
    %3563 = vmatpush1.msra.mxu0 0.0
    %3564 = vmatprep.subr.mxu0 0.0
    %3565 = vmatpush1.msra.mxu0 0.0
    %3566 = vmatprep.subr.mxu0 0.0
    %3567 = vmatpush1.msra.mxu0 0.0
    %3568 = vmatprep.subr.mxu0 0.0
    %3569 = vmatpush1.msra.mxu0 0.0
    %3570 = vmatprep.subr.mxu0 0.0
    %3571 = vmatpush1.msra.mxu0 0.0
    %3572 = vmatprep.subr.mxu0 0.0
    %3573 = vmatpush1.msra.mxu0 0.0
    %3574 = vmatprep.subr.mxu0 0.0
    %3575 = vmatpush1.msra.mxu0 0.0
    %3576 = vmatprep.subr.mxu0 0.0
    %3577 = vmatpush1.msra.mxu0 0.0
    %3578 = vmatprep.subr.mxu0 0.0
    %3579 = vmatpush1.msra.mxu0 0.0
    %3580 = vmatprep.subr.mxu0 0.0
    %3581 = vmatpush1.msra.mxu0 0.0
    %3582 = vmatprep.subr.mxu0 0.0
    %3583 = vmatpush1.msra.mxu0 0.0
    %3584 = vmatprep.subr.mxu0 0.0
    %3585 = vmatpush1.msra.mxu0 0.0
    %3586 = vmatprep.subr.mxu0 0.0
    %3587 = vmatpush1.msra.mxu0 0.0
    %3588 = vmatprep.subr.mxu0 0.0
    %3589 = vmatpush1.msra.mxu0 0.0
    %3590 = vmatprep.subr.mxu0 0.0
    %3591 = vmatpush1.msra.mxu0 0.0
    %3592 = vmatprep.subr.mxu0 0.0
    %3593 = vmatpush1.msra.mxu0 0.0
    %3594 = vmatprep.subr.mxu0 0.0
    %3595 = vmatpush1.msra.mxu0 0.0
    %3596 = vmatprep.subr.mxu0 0.0
    %3597 = vmatpush1.msra.mxu0 0.0
    %3598 = vmatprep.subr.mxu0 0.0
    %3599 = vmatpush1.msra.mxu0 0.0
    %3600 = vmatprep.subr.mxu0 0.0
    %3601 = vmatpush1.msra.mxu0 0.0
    %3602 = vmatprep.subr.mxu0 0.0
    %3603 = vmatpush1.msra.mxu0 0.0
    %3604 = vmatprep.subr.mxu0 0.0
    %3605 = vmatpush1.msra.mxu0 0.0
    %3606 = vmatprep.subr.mxu0 0.0
    %3607 = vmatpush1.msra.mxu0 0.0
    %3608 = vmatprep.subr.mxu0 0.0
    %3609 = vmatpush1.msra.mxu0 0.0
    %3610 = vmatprep.subr.mxu0 0.0
    %3611 = vmatpush1.msra.mxu0 0.0
    %3612 = vmatprep.subr.mxu0 0.0
    %3613 = vmatpush1.msra.mxu0 0.0
    %3614 = vmatprep.subr.mxu0 0.0
    %3615 = vmatpush1.msra.mxu0 0.0
    %3616 = vmatprep.subr.mxu0 0.0
    %3617 = vmatpush1.msra.mxu0 0.0
    %3618 = vmatprep.subr.mxu0 0.0
    %3619 = vmatpush1.msra.mxu0 0.0
    %3620 = vmatprep.mubr.f32.mxu0 0.0
    %3621 = vmatmul.mubr.f32.gmra.mrb[0].mxu0 %v3545
    %v3622 = vpop.f32.mrb[0].mxu0
    %v3623 = vadd.f32 %v3527, %v3622
    %v3624 = vpop.f32.mrb[0].mxu0
    %3625 = vmatprep.mubr.f32.mxu0 0.0
    %3626 = vmatmul.mubr.f32.gmra.mrb[0].mxu0 %v3548
    %v3627 = vpop.f32.mrb[0].mxu0
    %v3628 = vadd.f32 %v3532, %v3627
    %v3629 = vpop.f32.mrb[0].mxu0
    %3630 = vmatprep.mubr.f32.mxu0 0.0
    %3631 = vmatmul.mubr.f32.gmra.mrb[0].mxu0 %v3551
    %v3632 = vpop.f32.mrb[0].mxu0
    %v3633 = vadd.f32 %v3537, %v3632
    %v3634 = vpop.f32.mrb[0].mxu0
    %3635 = vmatprep.mubr.f32.mxu0 0.0
    %3636 = vmatmul.mubr.f32.gmra.mrb[0].mxu0 %v3554
    %v3637 = vpop.f32.mrb[0].mxu0
    %v3638 = vadd.f32 %v3542, %v3637
    %v3639 = vpop.f32.mrb[0].mxu0
    %3640 = vdwg.mxu0
    %v3641 = vadd.f32 %v3301, %v3623
    %v3642 = vadd.f32 %v3306, %v3628
    %v3643 = vadd.f32 %v3311, %v3633
    %v3644 = vadd.f32 %v3316, %v3638
    %v3645 = vmax.f32 %v3641, 0.0
    %v3646 = vmax.f32 %v3642, 0.0
    %v3647 = vmax.f32 %v3643, 0.0
    %v3648 = vmax.f32 %v3644, 0.0
    %v3649 = vld [vmem:[#allocation22] sm:$0xff]
    %v3650 = vld [vmem:[#allocation22 + $0x8] sm:$0xff]
    %3651 = vrot.lane.b32.xlu0 %v3645, 64
    %v3652 = vpop.permute.xlu0 %3651
    %v3653 = vsel %vm2962, %v3652, %v3645
    %3654 = vrot.lane.b32.xlu0 %v3646, 64
    %v3655 = vpop.permute.xlu0 %3654
    %v3656 = vsel %vm2962, %v3655, %v3646
    %3657 = vrot.lane.b32.xlu0 %v3647, 64
    %v3658 = vpop.permute.xlu0 %3657
    %v3659 = vsel %vm2962, %v3658, %v3647
    %3660 = vrot.lane.b32.xlu0 %v3648, 64
    %v3661 = vpop.permute.xlu0 %3660
    %v3662 = vsel %vm2962, %v3661, %v3648
    %3663 = vrot.lane.b32.xlu0 %v3653, 64
    %v3664 = vpop.permute.xlu0 %3663
    %3665 = vrot.lane.b32.xlu0 %v3656, 64
    %v3666 = vpop.permute.xlu0 %3665
    %3667 = vrot.lane.b32.xlu0 %v3659, 64
    %v3668 = vpop.permute.xlu0 %3667
    %3669 = vrot.lane.b32.xlu0 %v3662, 64
    %v3670 = vpop.permute.xlu0 %3669
    %v3671 = vsel %vm2962, %v3664, %v3645
    %v3672 = vsel %vm2962, %v3666, %v3646
    %v3673 = vsel %vm2962, %v3668, %v3647
    %v3674 = vsel %vm2962, %v3670, %v3648
    %v3675 = vmul.f32 %v3671, %v3024
    %v3676 = vmul.f32 %v3672, %v3024
    %v3677 = vmul.f32 %v3673, %v3024
    %v3678 = vmul.f32 %v3674, %v3024
    %v3679 = vmul.f32 %v3671, %v3042
    %v3680 = vmul.f32 %v3672, %v3042
    %v3681 = vmul.f32 %v3673, %v3042
    %v3682 = vmul.f32 %v3674, %v3042
    %3687 = vrot.lane.b32.xlu0 %v3645, 63
    %v3688 = vpop.permute.xlu0 %3687
    %3689 = vrot.lane.b32.xlu0 %v3646, 63
    %v3690 = vpop.permute.xlu0 %3689
    %3691 = vrot.lane.b32.xlu0 %v3647, 63
    %v3692 = vpop.permute.xlu0 %3691
    %3693 = vrot.lane.b32.xlu0 %v3648, 63
    %v3694 = vpop.permute.xlu0 %3693
    %3699 = vrot.lane.b32.xlu0 %v3679, 62
    %v3700 = vpop.permute.xlu0 %3699
    %3701 = vrot.lane.b32.xlu0 %v3680, 62
    %v3702 = vpop.permute.xlu0 %3701
    %3703 = vrot.lane.b32.xlu0 %v3681, 62
    %v3704 = vpop.permute.xlu0 %3703
    %3705 = vrot.lane.b32.xlu0 %v3682, 62
    %v3706 = vpop.permute.xlu0 %3705
    %v3707 = vld [vmem:[%s47] sm:$0xff]
    %v3708 = vld [vmem:[%s47 + $0x8] sm:$0xff]
    %3710 = vset.pattern.permute.xlu0 0
    %3711 = vperm.xlu0 %3710, %v3707
    %v3712 = vpop.permute.xlu0 %3711
    %3715 = vset.pattern.permute.xlu0 0
    %3716 = vperm.xlu0 %3715, %v3708
    %v3717 = vpop.permute.xlu0 %3716
    %3723 = vrot.lane.b32.xlu0 %v3675, 65
    %v3724 = vpop.permute.xlu0 %3723
    %3725 = vrot.lane.b32.xlu0 %v3676, 65
    %v3726 = vpop.permute.xlu0 %3725
    %3727 = vrot.lane.b32.xlu0 %v3677, 65
    %v3728 = vpop.permute.xlu0 %3727
    %3729 = vrot.lane.b32.xlu0 %v3678, 65
    %v3730 = vpop.permute.xlu0 %3729
    %3731 = vrot.lane.b32.xlu0 %v3688, 65
    %v3732 = vpop.permute.xlu0 %3731
    %3733 = vrot.lane.b32.xlu0 %v3690, 65
    %v3734 = vpop.permute.xlu0 %3733
    %3735 = vrot.lane.b32.xlu0 %v3692, 65
    %v3736 = vpop.permute.xlu0 %3735
    %3737 = vrot.lane.b32.xlu0 %v3694, 65
    %v3738 = vpop.permute.xlu0 %3737
    %3739 = vrot.lane.b32.xlu0 %v3700, 65
    %v3740 = vpop.permute.xlu0 %3739
    %3741 = vrot.lane.b32.xlu0 %v3702, 65
    %v3742 = vpop.permute.xlu0 %3741
    %3743 = vrot.lane.b32.xlu0 %v3704, 65
    %v3744 = vpop.permute.xlu0 %3743
    %3745 = vrot.lane.b32.xlu0 %v3706, 65
    %v3746 = vpop.permute.xlu0 %3745
    %v3760 = vsel %vm673, %v3649, 0
    %v3763 = vsel %vm673, %v3650, 0
    %3765 = vmatprep.subr.mxu0 0.0
    %3766 = vmatpush1.msra.mxu0 %v3724
    %3767 = vmatprep.subr.mxu0 0.0
    %3768 = vmatpush1.msra.mxu0 %v3726
    %3769 = vmatprep.subr.mxu0 0.0
    %3770 = vmatpush1.msra.mxu0 %v3728
    %3771 = vmatprep.subr.mxu0 0.0
    %3772 = vmatpush1.msra.mxu0 %v3730
    %3773 = vmatprep.subr.mxu0 0.0
    %3774 = vmatpush1.msra.mxu0 %v3732
    %3775 = vmatprep.subr.mxu0 0.0
    %3776 = vmatpush1.msra.mxu0 %v3734
    %3777 = vmatprep.subr.mxu0 0.0
    %3778 = vmatpush1.msra.mxu0 %v3736
    %3779 = vmatprep.subr.mxu0 0.0
    %3780 = vmatpush1.msra.mxu0 %v3738
    %3781 = vmatprep.subr.mxu0 0.0
    %3782 = vmatpush1.msra.mxu0 %v3740
    %3783 = vmatprep.subr.mxu0 0.0
    %3784 = vmatpush1.msra.mxu0 %v3742
    %3785 = vmatprep.subr.mxu0 0.0
    %3786 = vmatpush1.msra.mxu0 %v3744
    %3787 = vmatprep.subr.mxu0 0.0
    %3788 = vmatpush1.msra.mxu0 %v3746
    %3789 = vmatprep.subr.mxu0 0.0
    %3790 = vmatpush1.msra.mxu0 0.0
    %3791 = vmatprep.subr.mxu0 0.0
    %3792 = vmatpush1.msra.mxu0 0.0
    %3793 = vmatprep.subr.mxu0 0.0
    %3794 = vmatpush1.msra.mxu0 0.0
    %3795 = vmatprep.subr.mxu0 0.0
    %3796 = vmatpush1.msra.mxu0 0.0
    %3797 = vmatprep.subr.mxu0 0.0
    %3798 = vmatpush1.msra.mxu0 0.0
    %3799 = vmatprep.subr.mxu0 0.0
    %3800 = vmatpush1.msra.mxu0 0.0
    %3801 = vmatprep.subr.mxu0 0.0
    %3802 = vmatpush1.msra.mxu0 0.0
    %3803 = vmatprep.subr.mxu0 0.0
    %3804 = vmatpush1.msra.mxu0 0.0
    %3805 = vmatprep.subr.mxu0 0.0
    %3806 = vmatpush1.msra.mxu0 0.0
    %3807 = vmatprep.subr.mxu0 0.0
    %3808 = vmatpush1.msra.mxu0 0.0
    %3809 = vmatprep.subr.mxu0 0.0
    %3810 = vmatpush1.msra.mxu0 0.0
    %3811 = vmatprep.subr.mxu0 0.0
    %3812 = vmatpush1.msra.mxu0 0.0
    %3813 = vmatprep.subr.mxu0 0.0
    %3814 = vmatpush1.msra.mxu0 0.0
    %3815 = vmatprep.subr.mxu0 0.0
    %3816 = vmatpush1.msra.mxu0 0.0
    %3817 = vmatprep.subr.mxu0 0.0
    %3818 = vmatpush1.msra.mxu0 0.0
    %3819 = vmatprep.subr.mxu0 0.0
    %3820 = vmatpush1.msra.mxu0 0.0
    %3821 = vmatprep.subr.mxu0 0.0
    %3822 = vmatpush1.msra.mxu0 0.0
    %3823 = vmatprep.subr.mxu0 0.0
    %3824 = vmatpush1.msra.mxu0 0.0
    %3825 = vmatprep.subr.mxu0 0.0
    %3826 = vmatpush1.msra.mxu0 0.0
    %3827 = vmatprep.subr.mxu0 0.0
    %3828 = vmatpush1.msra.mxu0 0.0
    %3829 = vmatprep.mubr.f32.mxu0 0.0
    %3830 = vmatmul.mubr.f32.gmra.mrb[0].mxu0 %v3760
    %v3831 = vpop.f32.mrb[0].mxu0
    %v3832 = vadd.f32 %v3712, %v3831
    %v3833 = vpop.f32.mrb[0].mxu0
    %3834 = vmatprep.mubr.f32.mxu0 0.0
    %3835 = vmatmul.mubr.f32.gmra.mrb[0].mxu0 %v3763
    %v3836 = vpop.f32.mrb[0].mxu0
    %v3837 = vadd.f32 %v3717, %v3836
    %v3838 = vpop.f32.mrb[0].mxu0
    %3839 = vdwg.mxu0
    %v3840 = vmax.f32 %v3832, 0.0
    %v3841 = vmax.f32 %v3837, 0.0
    %v3842 = vld [vmem:[%s49] sm:$0xff]
    %v3843 = vld [vmem:[%s49 + $0x8] sm:$0xff]
    %v3844 = vld [vmem:[%s49 + $0x10] sm:$0xff]
    %v3845 = vld [vmem:[%s49 + $0x18] sm:$0xff]
    %v3846 = vld [vmem:[%s51] sm:$0xff]
    %v3847 = vld [vmem:[%s51 + $0x8] sm:$0xff]
    %v3848 = vld [vmem:[%s51 + $0x10] sm:$0xff]
    %v3849 = vld [vmem:[%s51 + $0x18] sm:$0xff]
    %3851 = vset.pattern.permute.xlu0 0
    %3852 = vperm.xlu0 %3851, %v3846
    %v3853 = vpop.permute.xlu0 %3852
    %3856 = vset.pattern.permute.xlu0 0
    %3857 = vperm.xlu0 %3856, %v3847
    %v3858 = vpop.permute.xlu0 %3857
    %3861 = vset.pattern.permute.xlu0 0
    %3862 = vperm.xlu0 %3861, %v3848
    %v3863 = vpop.permute.xlu0 %3862
    %3866 = vset.pattern.permute.xlu0 0
    %3867 = vperm.xlu0 %3866, %v3849
    %v3868 = vpop.permute.xlu0 %3867
    %v3871 = vsel %vm785, %v3842, 0
    %v3874 = vsel %vm785, %v3843, 0
    %v3877 = vsel %vm785, %v3844, 0
    %v3880 = vsel %vm785, %v3845, 0
    %3882 = vmatprep.subr.mxu0 0.0
    %3883 = vmatpush1.msra.mxu0 %v3840
    %3884 = vmatprep.subr.mxu0 0.0
    %3885 = vmatpush1.msra.mxu0 %v3841
    %3886 = vmatprep.subr.mxu0 0.0
    %3887 = vmatpush1.msra.mxu0 0.0
    %3888 = vmatprep.subr.mxu0 0.0
    %3889 = vmatpush1.msra.mxu0 0.0
    %3890 = vmatprep.subr.mxu0 0.0
    %3891 = vmatpush1.msra.mxu0 0.0
    %3892 = vmatprep.subr.mxu0 0.0
    %3893 = vmatpush1.msra.mxu0 0.0
    %3894 = vmatprep.subr.mxu0 0.0
    %3895 = vmatpush1.msra.mxu0 0.0
    %3896 = vmatprep.subr.mxu0 0.0
    %3897 = vmatpush1.msra.mxu0 0.0
    %3898 = vmatprep.subr.mxu0 0.0
    %3899 = vmatpush1.msra.mxu0 0.0
    %3900 = vmatprep.subr.mxu0 0.0
    %3901 = vmatpush1.msra.mxu0 0.0
    %3902 = vmatprep.subr.mxu0 0.0
    %3903 = vmatpush1.msra.mxu0 0.0
    %3904 = vmatprep.subr.mxu0 0.0
    %3905 = vmatpush1.msra.mxu0 0.0
    %3906 = vmatprep.subr.mxu0 0.0
    %3907 = vmatpush1.msra.mxu0 0.0
    %3908 = vmatprep.subr.mxu0 0.0
    %3909 = vmatpush1.msra.mxu0 0.0
    %3910 = vmatprep.subr.mxu0 0.0
    %3911 = vmatpush1.msra.mxu0 0.0
    %3912 = vmatprep.subr.mxu0 0.0
    %3913 = vmatpush1.msra.mxu0 0.0
    %3914 = vmatprep.subr.mxu0 0.0
    %3915 = vmatpush1.msra.mxu0 0.0
    %3916 = vmatprep.subr.mxu0 0.0
    %3917 = vmatpush1.msra.mxu0 0.0
    %3918 = vmatprep.subr.mxu0 0.0
    %3919 = vmatpush1.msra.mxu0 0.0
    %3920 = vmatprep.subr.mxu0 0.0
    %3921 = vmatpush1.msra.mxu0 0.0
    %3922 = vmatprep.subr.mxu0 0.0
    %3923 = vmatpush1.msra.mxu0 0.0
    %3924 = vmatprep.subr.mxu0 0.0
    %3925 = vmatpush1.msra.mxu0 0.0
    %3926 = vmatprep.subr.mxu0 0.0
    %3927 = vmatpush1.msra.mxu0 0.0
    %3928 = vmatprep.subr.mxu0 0.0
    %3929 = vmatpush1.msra.mxu0 0.0
    %3930 = vmatprep.subr.mxu0 0.0
    %3931 = vmatpush1.msra.mxu0 0.0
    %3932 = vmatprep.subr.mxu0 0.0
    %3933 = vmatpush1.msra.mxu0 0.0
    %3934 = vmatprep.subr.mxu0 0.0
    %3935 = vmatpush1.msra.mxu0 0.0
    %3936 = vmatprep.subr.mxu0 0.0
    %3937 = vmatpush1.msra.mxu0 0.0
    %3938 = vmatprep.subr.mxu0 0.0
    %3939 = vmatpush1.msra.mxu0 0.0
    %3940 = vmatprep.subr.mxu0 0.0
    %3941 = vmatpush1.msra.mxu0 0.0
    %3942 = vmatprep.subr.mxu0 0.0
    %3943 = vmatpush1.msra.mxu0 0.0
    %3944 = vmatprep.subr.mxu0 0.0
    %3945 = vmatpush1.msra.mxu0 0.0
    %3946 = vmatprep.mubr.f32.mxu0 0.0
    %3947 = vmatmul.mubr.f32.gmra.mrb[0].mxu0 %v3871
    %v3948 = vpop.f32.mrb[0].mxu0
    %v3949 = vadd.f32 %v3853, %v3948
    %v3950 = vpop.f32.mrb[0].mxu0
    %3951 = vmatprep.mubr.f32.mxu0 0.0
    %3952 = vmatmul.mubr.f32.gmra.mrb[0].mxu0 %v3874
    %v3953 = vpop.f32.mrb[0].mxu0
    %v3954 = vadd.f32 %v3858, %v3953
    %v3955 = vpop.f32.mrb[0].mxu0
    %3956 = vmatprep.mubr.f32.mxu0 0.0
    %3957 = vmatmul.mubr.f32.gmra.mrb[0].mxu0 %v3877
    %v3958 = vpop.f32.mrb[0].mxu0
    %v3959 = vadd.f32 %v3863, %v3958
    %v3960 = vpop.f32.mrb[0].mxu0
    %3961 = vmatprep.mubr.f32.mxu0 0.0
    %3962 = vmatmul.mubr.f32.gmra.mrb[0].mxu0 %v3880
    %v3963 = vpop.f32.mrb[0].mxu0
    %v3964 = vadd.f32 %v3868, %v3963
    %v3965 = vpop.f32.mrb[0].mxu0
    %3966 = vdwg.mxu0
    %v3967 = vadd.f32 %v3641, %v3949
    %v3968 = vadd.f32 %v3642, %v3954
    %v3969 = vadd.f32 %v3643, %v3959
    %v3970 = vadd.f32 %v3644, %v3964
    %v3971 = vld [vmem:[%s53] sm:$0xff]
    %v3972 = vld [vmem:[%s53 + $0x8] sm:$0xff]
    %v3973 = vld [vmem:[%s53 + $0x10] sm:$0xff]
    %v3974 = vld [vmem:[%s53 + $0x18] sm:$0xff]
    %3975 = vrot.lane.b32.xlu0 %v3967, 64
    %v3976 = vpop.permute.xlu0 %3975
    %v3977 = vsel %vm2962, %v3976, %v3967
    %3978 = vrot.lane.b32.xlu0 %v3968, 64
    %v3979 = vpop.permute.xlu0 %3978
    %v3980 = vsel %vm2962, %v3979, %v3968
    %3981 = vrot.lane.b32.xlu0 %v3969, 64
    %v3982 = vpop.permute.xlu0 %3981
    %v3983 = vsel %vm2962, %v3982, %v3969
    %3984 = vrot.lane.b32.xlu0 %v3970, 64
    %v3985 = vpop.permute.xlu0 %3984
    %v3986 = vsel %vm2962, %v3985, %v3970
    %3987 = vrot.lane.b32.xlu0 %v3977, 64
    %v3988 = vpop.permute.xlu0 %3987
    %3989 = vrot.lane.b32.xlu0 %v3980, 64
    %v3990 = vpop.permute.xlu0 %3989
    %3991 = vrot.lane.b32.xlu0 %v3983, 64
    %v3992 = vpop.permute.xlu0 %3991
    %3993 = vrot.lane.b32.xlu0 %v3986, 64
    %v3994 = vpop.permute.xlu0 %3993
    %v3995 = vsel %vm2962, %v3988, %v3967
    %v3996 = vsel %vm2962, %v3990, %v3968
    %v3997 = vsel %vm2962, %v3992, %v3969
    %v3998 = vsel %vm2962, %v3994, %v3970
    %v3999 = vmul.f32 %v3995, %v3024
    %v4000 = vmul.f32 %v3996, %v3024
    %v4001 = vmul.f32 %v3997, %v3024
    %v4002 = vmul.f32 %v3998, %v3024
    %v4003 = vmul.f32 %v3995, %v3042
    %v4004 = vmul.f32 %v3996, %v3042
    %v4005 = vmul.f32 %v3997, %v3042
    %v4006 = vmul.f32 %v3998, %v3042
    %4011 = vrot.lane.b32.xlu0 %v3967, 63
    %v4012 = vpop.permute.xlu0 %4011
    %4013 = vrot.lane.b32.xlu0 %v3968, 63
    %v4014 = vpop.permute.xlu0 %4013
    %4015 = vrot.lane.b32.xlu0 %v3969, 63
    %v4016 = vpop.permute.xlu0 %4015
    %4017 = vrot.lane.b32.xlu0 %v3970, 63
    %v4018 = vpop.permute.xlu0 %4017
    %4023 = vrot.lane.b32.xlu0 %v4003, 62
    %v4024 = vpop.permute.xlu0 %4023
    %4025 = vrot.lane.b32.xlu0 %v4004, 62
    %v4026 = vpop.permute.xlu0 %4025
    %4027 = vrot.lane.b32.xlu0 %v4005, 62
    %v4028 = vpop.permute.xlu0 %4027
    %4029 = vrot.lane.b32.xlu0 %v4006, 62
    %v4030 = vpop.permute.xlu0 %4029
    %v4031 = vld [vmem:[%s55] sm:$0xff]
    %v4032 = vld [vmem:[%s55 + $0x8] sm:$0xff]
    %v4033 = vld [vmem:[%s55 + $0x10] sm:$0xff]
    %v4034 = vld [vmem:[%s55 + $0x18] sm:$0xff]
    %4036 = vset.pattern.permute.xlu0 0
    %4037 = vperm.xlu0 %4036, %v4031
    %v4038 = vpop.permute.xlu0 %4037
    %4041 = vset.pattern.permute.xlu0 0
    %4042 = vperm.xlu0 %4041, %v4032
    %v4043 = vpop.permute.xlu0 %4042
    %4046 = vset.pattern.permute.xlu0 0
    %4047 = vperm.xlu0 %4046, %v4033
    %v4048 = vpop.permute.xlu0 %4047
    %4051 = vset.pattern.permute.xlu0 0
    %4052 = vperm.xlu0 %4051, %v4034
    %v4053 = vpop.permute.xlu0 %4052
    %4059 = vrot.lane.b32.xlu0 %v3999, 65
    %v4060 = vpop.permute.xlu0 %4059
    %4061 = vrot.lane.b32.xlu0 %v4000, 65
    %v4062 = vpop.permute.xlu0 %4061
    %4063 = vrot.lane.b32.xlu0 %v4001, 65
    %v4064 = vpop.permute.xlu0 %4063
    %4065 = vrot.lane.b32.xlu0 %v4002, 65
    %v4066 = vpop.permute.xlu0 %4065
    %4067 = vrot.lane.b32.xlu0 %v4012, 65
    %v4068 = vpop.permute.xlu0 %4067
    %4069 = vrot.lane.b32.xlu0 %v4014, 65
    %v4070 = vpop.permute.xlu0 %4069
    %4071 = vrot.lane.b32.xlu0 %v4016, 65
    %v4072 = vpop.permute.xlu0 %4071
    %4073 = vrot.lane.b32.xlu0 %v4018, 65
    %v4074 = vpop.permute.xlu0 %4073
    %4075 = vrot.lane.b32.xlu0 %v4024, 65
    %v4076 = vpop.permute.xlu0 %4075
    %4077 = vrot.lane.b32.xlu0 %v4026, 65
    %v4078 = vpop.permute.xlu0 %4077
    %4079 = vrot.lane.b32.xlu0 %v4028, 65
    %v4080 = vpop.permute.xlu0 %4079
    %4081 = vrot.lane.b32.xlu0 %v4030, 65
    %v4082 = vpop.permute.xlu0 %4081
    %v4096 = vsel %vm673, %v3971, 0
    %v4099 = vsel %vm673, %v3972, 0
    %v4102 = vsel %vm673, %v3973, 0
    %v4105 = vsel %vm673, %v3974, 0
    %4107 = vmatprep.subr.mxu0 0.0
    %4108 = vmatpush1.msra.mxu0 %v4060
    %4109 = vmatprep.subr.mxu0 0.0
    %4110 = vmatpush1.msra.mxu0 %v4062
    %4111 = vmatprep.subr.mxu0 0.0
    %4112 = vmatpush1.msra.mxu0 %v4064
    %4113 = vmatprep.subr.mxu0 0.0
    %4114 = vmatpush1.msra.mxu0 %v4066
    %4115 = vmatprep.subr.mxu0 0.0
    %4116 = vmatpush1.msra.mxu0 %v4068
    %4117 = vmatprep.subr.mxu0 0.0
    %4118 = vmatpush1.msra.mxu0 %v4070
    %4119 = vmatprep.subr.mxu0 0.0
    %4120 = vmatpush1.msra.mxu0 %v4072
    %4121 = vmatprep.subr.mxu0 0.0
    %4122 = vmatpush1.msra.mxu0 %v4074
    %4123 = vmatprep.subr.mxu0 0.0
    %4124 = vmatpush1.msra.mxu0 %v4076
    %4125 = vmatprep.subr.mxu0 0.0
    %4126 = vmatpush1.msra.mxu0 %v4078
    %4127 = vmatprep.subr.mxu0 0.0
    %4128 = vmatpush1.msra.mxu0 %v4080
    %4129 = vmatprep.subr.mxu0 0.0
    %4130 = vmatpush1.msra.mxu0 %v4082
    %4131 = vmatprep.subr.mxu0 0.0
    %4132 = vmatpush1.msra.mxu0 0.0
    %4133 = vmatprep.subr.mxu0 0.0
    %4134 = vmatpush1.msra.mxu0 0.0
    %4135 = vmatprep.subr.mxu0 0.0
    %4136 = vmatpush1.msra.mxu0 0.0
    %4137 = vmatprep.subr.mxu0 0.0
    %4138 = vmatpush1.msra.mxu0 0.0
    %4139 = vmatprep.subr.mxu0 0.0
    %4140 = vmatpush1.msra.mxu0 0.0
    %4141 = vmatprep.subr.mxu0 0.0
    %4142 = vmatpush1.msra.mxu0 0.0
    %4143 = vmatprep.subr.mxu0 0.0
    %4144 = vmatpush1.msra.mxu0 0.0
    %4145 = vmatprep.subr.mxu0 0.0
    %4146 = vmatpush1.msra.mxu0 0.0
    %4147 = vmatprep.subr.mxu0 0.0
    %4148 = vmatpush1.msra.mxu0 0.0
    %4149 = vmatprep.subr.mxu0 0.0
    %4150 = vmatpush1.msra.mxu0 0.0
    %4151 = vmatprep.subr.mxu0 0.0
    %4152 = vmatpush1.msra.mxu0 0.0
    %4153 = vmatprep.subr.mxu0 0.0
    %4154 = vmatpush1.msra.mxu0 0.0
    %4155 = vmatprep.subr.mxu0 0.0
    %4156 = vmatpush1.msra.mxu0 0.0
    %4157 = vmatprep.subr.mxu0 0.0
    %4158 = vmatpush1.msra.mxu0 0.0
    %4159 = vmatprep.subr.mxu0 0.0
    %4160 = vmatpush1.msra.mxu0 0.0
    %4161 = vmatprep.subr.mxu0 0.0
    %4162 = vmatpush1.msra.mxu0 0.0
    %4163 = vmatprep.subr.mxu0 0.0
    %4164 = vmatpush1.msra.mxu0 0.0
    %4165 = vmatprep.subr.mxu0 0.0
    %4166 = vmatpush1.msra.mxu0 0.0
    %4167 = vmatprep.subr.mxu0 0.0
    %4168 = vmatpush1.msra.mxu0 0.0
    %4169 = vmatprep.subr.mxu0 0.0
    %4170 = vmatpush1.msra.mxu0 0.0
    %4171 = vmatprep.mubr.f32.mxu0 0.0
    %4172 = vmatmul.mubr.f32.gmra.mrb[0].mxu0 %v4096
    %v4173 = vpop.f32.mrb[0].mxu0
    %v4174 = vadd.f32 %v4038, %v4173
    %v4175 = vpop.f32.mrb[0].mxu0
    %4176 = vmatprep.mubr.f32.mxu0 0.0
    %4177 = vmatmul.mubr.f32.gmra.mrb[0].mxu0 %v4099
    %v4178 = vpop.f32.mrb[0].mxu0
    %v4179 = vadd.f32 %v4043, %v4178
    %v4180 = vpop.f32.mrb[0].mxu0
    %4181 = vmatprep.mubr.f32.mxu0 0.0
    %4182 = vmatmul.mubr.f32.gmra.mrb[0].mxu0 %v4102
    %v4183 = vpop.f32.mrb[0].mxu0
    %v4184 = vadd.f32 %v4048, %v4183
    %v4185 = vpop.f32.mrb[0].mxu0
    %4186 = vmatprep.mubr.f32.mxu0 0.0
    %4187 = vmatmul.mubr.f32.gmra.mrb[0].mxu0 %v4105
    %v4188 = vpop.f32.mrb[0].mxu0
    %v4189 = vadd.f32 %v4053, %v4188
    %v4190 = vpop.f32.mrb[0].mxu0
    %4191 = vdwg.mxu0
    %v4192 = vmax.f32 %v4174, 0.0
    %v4193 = vmax.f32 %v4179, 0.0
    %v4194 = vmax.f32 %v4184, 0.0
    %v4195 = vmax.f32 %v4189, 0.0
    %4198 = vrot.lane.b32.xlu0 %v4194, 64
    %v4199 = vpop.permute.xlu0 %4198
    %4200 = vrot.lane.b32.xlu0 %v4195, 64
    %v4201 = vpop.permute.xlu0 %4200
    %v4204 = vsel %vm1952, %v4192, %v4199
    %v4205 = vsel %vm1952, %v4193, %v4201
    %v4206 = vld [vmem:[%s25] sm:$0xff]
    %v4207 = vld [vmem:[%s25 + $0x8] sm:$0xff]
    %v4208 = vld [vmem:[%s25 + $0x10] sm:$0xff]
    %v4209 = vld [vmem:[%s25 + $0x18] sm:$0xff]
    %v4210 = vld [vmem:[%s25 + $0x20] sm:$0xff]
    %v4211 = vld [vmem:[%s25 + $0x28] sm:$0xff]
    %v4212 = vld [vmem:[%s25 + $0x30] sm:$0xff]
    %v4213 = vld [vmem:[%s25 + $0x38] sm:$0xff]
    %v4214 = vld [vmem:[%s25 + $0x40] sm:$0xff]
    %v4215 = vld [vmem:[%s25 + $0x48] sm:$0xff]
    %v4216 = vld [vmem:[%s25 + $0x50] sm:$0xff]
    %v4217 = vld [vmem:[%s25 + $0x58] sm:$0xff]
    %v4218 = vld [vmem:[%s25 + $0x60] sm:$0xff]
    %v4219 = vld [vmem:[%s25 + $0x68] sm:$0xff]
    %v4220 = vld [vmem:[%s25 + $0x70] sm:$0xff]
    %v4221 = vld [vmem:[%s25 + $0x78] sm:$0xff]
    %4222 = vmatprep.subr.mxu0 0.0
    %4223 = vmatpush1.msra.mxu0 %v4206
    %4224 = vmatprep.subr.mxu0 0.0
    %4225 = vmatpush1.msra.mxu0 %v4207
    %4226 = vmatprep.subr.mxu0 0.0
    %4227 = vmatpush1.msra.mxu0 %v4208
    %4228 = vmatprep.subr.mxu0 0.0
    %4229 = vmatpush1.msra.mxu0 %v4209
    %4230 = vmatprep.subr.mxu0 0.0
    %4231 = vmatpush1.msra.mxu0 %v4210
    %4232 = vmatprep.subr.mxu0 0.0
    %4233 = vmatpush1.msra.mxu0 %v4211
    %4234 = vmatprep.subr.mxu0 0.0
    %4235 = vmatpush1.msra.mxu0 %v4212
    %4236 = vmatprep.subr.mxu0 0.0
    %4237 = vmatpush1.msra.mxu0 %v4213
    %4238 = vmatprep.subr.mxu0 0.0
    %4239 = vmatpush1.msra.mxu0 %v4214
    %4240 = vmatprep.subr.mxu0 0.0
    %4241 = vmatpush1.msra.mxu0 %v4215
    %4242 = vmatprep.subr.mxu0 0.0
    %4243 = vmatpush1.msra.mxu0 %v4216
    %4244 = vmatprep.subr.mxu0 0.0
    %4245 = vmatpush1.msra.mxu0 %v4217
    %4246 = vmatprep.subr.mxu0 0.0
    %4247 = vmatpush1.msra.mxu0 %v4218
    %4248 = vmatprep.subr.mxu0 0.0
    %4249 = vmatpush1.msra.mxu0 %v4219
    %4250 = vmatprep.subr.mxu0 0.0
    %4251 = vmatpush1.msra.mxu0 %v4220
    %4252 = vmatprep.subr.mxu0 0.0
    %4253 = vmatpush1.msra.mxu0 %v4221
    %4254 = vmatprep.subr.mxu0 0.0
    %4255 = vmatpush1.msra.mxu0 0.0
    %4256 = vmatprep.subr.mxu0 0.0
    %4257 = vmatpush1.msra.mxu0 0.0
    %4258 = vmatprep.subr.mxu0 0.0
    %4259 = vmatpush1.msra.mxu0 0.0
    %4260 = vmatprep.subr.mxu0 0.0
    %4261 = vmatpush1.msra.mxu0 0.0
    %4262 = vmatprep.subr.mxu0 0.0
    %4263 = vmatpush1.msra.mxu0 0.0
    %4264 = vmatprep.subr.mxu0 0.0
    %4265 = vmatpush1.msra.mxu0 0.0
    %4266 = vmatprep.subr.mxu0 0.0
    %4267 = vmatpush1.msra.mxu0 0.0
    %4268 = vmatprep.subr.mxu0 0.0
    %4269 = vmatpush1.msra.mxu0 0.0
    %4270 = vmatprep.subr.mxu0 0.0
    %4271 = vmatpush1.msra.mxu0 0.0
    %4272 = vmatprep.subr.mxu0 0.0
    %4273 = vmatpush1.msra.mxu0 0.0
    %4274 = vmatprep.subr.mxu0 0.0
    %4275 = vmatpush1.msra.mxu0 0.0
    %4276 = vmatprep.subr.mxu0 0.0
    %4277 = vmatpush1.msra.mxu0 0.0
    %4278 = vmatprep.subr.mxu0 0.0
    %4279 = vmatpush1.msra.mxu0 0.0
    %4280 = vmatprep.subr.mxu0 0.0
    %4281 = vmatpush1.msra.mxu0 0.0
    %4282 = vmatprep.subr.mxu0 0.0
    %4283 = vmatpush1.msra.mxu0 0.0
    %4284 = vmatprep.subr.mxu0 0.0
    %4285 = vmatpush1.msra.mxu0 0.0
    %4286 = vmatprep.mubr.f32.mxu0 0.0
    %4287 = vmatmul.mubr.f32.gmra.mrb[0].mxu0 %v4204
    %v4288 = vpop.f32.mrb[0].mxu0
    %v4289 = vadd.f32 0.0, %v4288
    %v4290 = vpop.f32.mrb[0].mxu0
    %4291 = vmatprep.mubr.f32.mxu0 0.0
    %4292 = vmatmul.mubr.f32.gmra.mrb[0].mxu0 %v4205
    %v4293 = vpop.f32.mrb[0].mxu0
    %v4294 = vadd.f32 0.0, %v4293
    %v4295 = vpop.f32.mrb[0].mxu0
    %4296 = vdwg.mxu0
    %v4297 = vld [vmem:[#allocation23] sm:$0xff]
    %4298 = vrot.lane.b32.xlu0 %v4289, 1
    %v4299 = vpop.permute.xlu0 %4298
    %4300 = vrot.lane.b32.xlu0 %v4294, 1
    %v4301 = vpop.permute.xlu0 %4300
    %v4302 = vld [vmem:[#allocation17] sm:$0x1]
    %v4304 = vlaneseq
    %v4305 = vshrl.u32 %v4304, 7
    %v4306 = vsub.s32 0, %v4305
    %v4307 = vrot.slane %v4302, %v4306
    %v4309 = vmul.f32 %v4299, %v4307
    %v4310 = vmul.f32 %v4301, %v4307
    %4311 = vrot.lane.b32.xlu0 %v4289, 127
    %v4312 = vpop.permute.xlu0 %4311
    %4313 = vrot.lane.b32.xlu0 %v4294, 127
    %v4314 = vpop.permute.xlu0 %4313
    %v4315 = vld [vmem:[#allocation19] sm:$0x1]
    %v4317 = vlaneseq
    %v4318 = vshrl.u32 %v4317, 7
    %v4319 = vsub.s32 0, %v4318
    %v4320 = vrot.slane %v4315, %v4319
    %v4322 = vmul.f32 %v4312, %v4320
    %v4323 = vmul.f32 %v4314, %v4320
    %v4324 = vld [vmem:[%s59] sm:$0xff]
    %4326 = vset.pattern.permute.xlu0 0
    %4327 = vperm.xlu0 %4326, %v4324
    %v4328 = vpop.permute.xlu0 %4327
    %vm4330 = vcmask 392192
    %v4332 = vsel %vm4330, %v4297, 0
    %4334 = vmatprep.subr.mxu0 0.0
    %4335 = vmatpush1.msra.mxu0 %v4309
    %4336 = vmatprep.subr.mxu0 0.0
    %4337 = vmatpush1.msra.mxu0 %v4310
    %4338 = vmatprep.subr.mxu0 0.0
    %4339 = vmatpush1.msra.mxu0 %v4289
    %4340 = vmatprep.subr.mxu0 0.0
    %4341 = vmatpush1.msra.mxu0 %v4294
    %4342 = vmatprep.subr.mxu0 0.0
    %4343 = vmatpush1.msra.mxu0 %v4322
    %4344 = vmatprep.subr.mxu0 0.0
    %4345 = vmatpush1.msra.mxu0 %v4323
    %4346 = vmatprep.subr.mxu0 0.0
    %4347 = vmatpush1.msra.mxu0 0.0
    %4348 = vmatprep.subr.mxu0 0.0
    %4349 = vmatpush1.msra.mxu0 0.0
    %4350 = vmatprep.subr.mxu0 0.0
    %4351 = vmatpush1.msra.mxu0 0.0
    %4352 = vmatprep.subr.mxu0 0.0
    %4353 = vmatpush1.msra.mxu0 0.0
    %4354 = vmatprep.subr.mxu0 0.0
    %4355 = vmatpush1.msra.mxu0 0.0
    %4356 = vmatprep.subr.mxu0 0.0
    %4357 = vmatpush1.msra.mxu0 0.0
    %4358 = vmatprep.subr.mxu0 0.0
    %4359 = vmatpush1.msra.mxu0 0.0
    %4360 = vmatprep.subr.mxu0 0.0
    %4361 = vmatpush1.msra.mxu0 0.0
    %4362 = vmatprep.subr.mxu0 0.0
    %4363 = vmatpush1.msra.mxu0 0.0
    %4364 = vmatprep.subr.mxu0 0.0
    %4365 = vmatpush1.msra.mxu0 0.0
    %4366 = vmatprep.subr.mxu0 0.0
    %4367 = vmatpush1.msra.mxu0 0.0
    %4368 = vmatprep.subr.mxu0 0.0
    %4369 = vmatpush1.msra.mxu0 0.0
    %4370 = vmatprep.subr.mxu0 0.0
    %4371 = vmatpush1.msra.mxu0 0.0
    %4372 = vmatprep.subr.mxu0 0.0
    %4373 = vmatpush1.msra.mxu0 0.0
    %4374 = vmatprep.subr.mxu0 0.0
    %4375 = vmatpush1.msra.mxu0 0.0
    %4376 = vmatprep.subr.mxu0 0.0
    %4377 = vmatpush1.msra.mxu0 0.0
    %4378 = vmatprep.subr.mxu0 0.0
    %4379 = vmatpush1.msra.mxu0 0.0
    %4380 = vmatprep.subr.mxu0 0.0
    %4381 = vmatpush1.msra.mxu0 0.0
    %4382 = vmatprep.subr.mxu0 0.0
    %4383 = vmatpush1.msra.mxu0 0.0
    %4384 = vmatprep.subr.mxu0 0.0
    %4385 = vmatpush1.msra.mxu0 0.0
    %4386 = vmatprep.subr.mxu0 0.0
    %4387 = vmatpush1.msra.mxu0 0.0
    %4388 = vmatprep.subr.mxu0 0.0
    %4389 = vmatpush1.msra.mxu0 0.0
    %4390 = vmatprep.subr.mxu0 0.0
    %4391 = vmatpush1.msra.mxu0 0.0
    %4392 = vmatprep.subr.mxu0 0.0
    %4393 = vmatpush1.msra.mxu0 0.0
    %4394 = vmatprep.subr.mxu0 0.0
    %4395 = vmatpush1.msra.mxu0 0.0
    %4396 = vmatprep.subr.mxu0 0.0
    %4397 = vmatpush1.msra.mxu0 0.0
    %4398 = vmatprep.mubr.f32.mxu0 0.0
    %4399 = vmatmul.mubr.f32.gmra.mrb[0].mxu0 %v4332
    %v4400 = vpop.f32.mrb[0].mxu0
    %v4401 = vadd.f32 %v4328, %v4400
    %v4402 = vpop.f32.mrb[0].mxu0
    %4403 = vdwg.mxu0
    %v4405 = vrot.slane %v4401, 4
    %v4407 = vld [vmem:[%s27] sm:$0xff]
    %v4408 = vld [vmem:[%s27 + $0x8] sm:$0xff]
    %v4409 = vld [vmem:[%s27 + $0x10] sm:$0xff]
    %v4410 = vld [vmem:[%s27 + $0x18] sm:$0xff]
    %v4411 = vld [vmem:[%s27 + $0x20] sm:$0xff]
    %v4412 = vld [vmem:[%s27 + $0x28] sm:$0xff]
    %v4413 = vld [vmem:[%s27 + $0x30] sm:$0xff]
    %v4414 = vld [vmem:[%s27 + $0x38] sm:$0xff]
    %v4415 = vld [vmem:[%s27 + $0x40] sm:$0xff]
    %v4416 = vld [vmem:[%s27 + $0x48] sm:$0xff]
    %v4417 = vld [vmem:[%s27 + $0x50] sm:$0xff]
    %v4418 = vld [vmem:[%s27 + $0x58] sm:$0xff]
    %v4419 = vld [vmem:[%s27 + $0x60] sm:$0xff]
    %v4420 = vld [vmem:[%s27 + $0x68] sm:$0xff]
    %v4421 = vld [vmem:[%s27 + $0x70] sm:$0xff]
    %v4422 = vld [vmem:[%s27 + $0x78] sm:$0xff]
    %v4423 = vld [vmem:[%s27 + $0x80] sm:$0xff]
    %v4424 = vld [vmem:[%s27 + $0x88] sm:$0xff]
    %v4425 = vld [vmem:[%s27 + $0x90] sm:$0xff]
    %v4426 = vld [vmem:[%s27 + $0x98] sm:$0xff]
    %v4427 = vld [vmem:[%s27 + $0xa0] sm:$0xff]
    %v4428 = vld [vmem:[%s27 + $0xa8] sm:$0xff]
    %v4429 = vld [vmem:[%s27 + $0xb0] sm:$0xff]
    %v4430 = vld [vmem:[%s27 + $0xb8] sm:$0xff]
    %v4431 = vld [vmem:[%s27 + $0xc0] sm:$0xff]
    %v4432 = vld [vmem:[%s27 + $0xc8] sm:$0xff]
    %v4433 = vld [vmem:[%s27 + $0xd0] sm:$0xff]
    %v4434 = vld [vmem:[%s27 + $0xd8] sm:$0xff]
    %v4435 = vld [vmem:[%s27 + $0xe0] sm:$0xff]
    %v4436 = vld [vmem:[%s27 + $0xe8] sm:$0xff]
    %v4437 = vld [vmem:[%s27 + $0xf0] sm:$0xff]
    %v4438 = vld [vmem:[%s27 + $0xf8] sm:$0xff]
    %v4439 = vld [vmem:[%s27 + $0x100] sm:$0xff]
    %v4440 = vld [vmem:[%s27 + $0x108] sm:$0xff]
    %v4441 = vld [vmem:[%s27 + $0x110] sm:$0xff]
    %v4442 = vld [vmem:[%s27 + $0x118] sm:$0xff]
    %v4443 = vld [vmem:[%s27 + $0x120] sm:$0xff]
    %v4444 = vld [vmem:[%s27 + $0x128] sm:$0xff]
    %v4445 = vld [vmem:[%s27 + $0x130] sm:$0xff]
    %v4446 = vld [vmem:[%s27 + $0x138] sm:$0xff]
    %v4447 = vld [vmem:[%s27 + $0x140] sm:$0xff]
    %v4448 = vld [vmem:[%s27 + $0x148] sm:$0xff]
    %v4449 = vld [vmem:[%s27 + $0x150] sm:$0xff]
    %v4450 = vld [vmem:[%s27 + $0x158] sm:$0xff]
    %v4451 = vld [vmem:[%s27 + $0x160] sm:$0xff]
    %v4452 = vld [vmem:[%s27 + $0x168] sm:$0xff]
    %v4453 = vld [vmem:[%s27 + $0x170] sm:$0xff]
    %v4454 = vld [vmem:[%s27 + $0x178] sm:$0xff]
    %v4455 = vld [vmem:[%s27 + $0x180] sm:$0xff]
    %v4456 = vld [vmem:[%s27 + $0x188] sm:$0xff]
    %v4457 = vld [vmem:[%s27 + $0x190] sm:$0xff]
    %v4458 = vld [vmem:[%s27 + $0x198] sm:$0xff]
    %v4459 = vld [vmem:[%s27 + $0x1a0] sm:$0xff]
    %v4460 = vld [vmem:[%s27 + $0x1a8] sm:$0xff]
    %v4461 = vld [vmem:[%s27 + $0x1b0] sm:$0xff]
    %v4462 = vld [vmem:[%s27 + $0x1b8] sm:$0xff]
    %v4463 = vld [vmem:[%s27 + $0x1c0] sm:$0xff]
    %v4464 = vld [vmem:[%s27 + $0x1c8] sm:$0xff]
    %v4465 = vld [vmem:[%s27 + $0x1d0] sm:$0xff]
    %v4466 = vld [vmem:[%s27 + $0x1d8] sm:$0xff]
    %v4467 = vld [vmem:[%s27 + $0x1e0] sm:$0xff]
    %v4468 = vld [vmem:[%s27 + $0x1e8] sm:$0xff]
    %v4469 = vld [vmem:[%s27 + $0x1f0] sm:$0xff]
    %v4470 = vld [vmem:[%s27 + $0x1f8] sm:$0xff]
    %4471 = vmatprep.subr.mxu0 %v4408
    %4472 = vmatpush1.msra.mxu0 %v4407
    %4473 = vmatprep.subr.mxu0 %v4410
    %4474 = vmatpush1.msra.mxu0 %v4409
    %4475 = vmatprep.subr.mxu0 %v4412
    %4476 = vmatpush1.msra.mxu0 %v4411
    %4477 = vmatprep.subr.mxu0 %v4414
    %4478 = vmatpush1.msra.mxu0 %v4413
    %4479 = vmatprep.subr.mxu0 %v4416
    %4480 = vmatpush1.msra.mxu0 %v4415
    %4481 = vmatprep.subr.mxu0 %v4418
    %4482 = vmatpush1.msra.mxu0 %v4417
    %4483 = vmatprep.subr.mxu0 %v4420
    %4484 = vmatpush1.msra.mxu0 %v4419
    %4485 = vmatprep.subr.mxu0 %v4422
    %4486 = vmatpush1.msra.mxu0 %v4421
    %4487 = vmatprep.subr.mxu0 %v4424
    %4488 = vmatpush1.msra.mxu0 %v4423
    %4489 = vmatprep.subr.mxu0 %v4426
    %4490 = vmatpush1.msra.mxu0 %v4425
    %4491 = vmatprep.subr.mxu0 %v4428
    %4492 = vmatpush1.msra.mxu0 %v4427
    %4493 = vmatprep.subr.mxu0 %v4430
    %4494 = vmatpush1.msra.mxu0 %v4429
    %4495 = vmatprep.subr.mxu0 %v4432
    %4496 = vmatpush1.msra.mxu0 %v4431
    %4497 = vmatprep.subr.mxu0 %v4434
    %4498 = vmatpush1.msra.mxu0 %v4433
    %4499 = vmatprep.subr.mxu0 %v4436
    %4500 = vmatpush1.msra.mxu0 %v4435
    %4501 = vmatprep.subr.mxu0 %v4438
    %4502 = vmatpush1.msra.mxu0 %v4437
    %4503 = vmatprep.subr.mxu0 %v4440
    %4504 = vmatpush1.msra.mxu0 %v4439
    %4505 = vmatprep.subr.mxu0 %v4442
    %4506 = vmatpush1.msra.mxu0 %v4441
    %4507 = vmatprep.subr.mxu0 %v4444
    %4508 = vmatpush1.msra.mxu0 %v4443
    %4509 = vmatprep.subr.mxu0 %v4446
    %4510 = vmatpush1.msra.mxu0 %v4445
    %4511 = vmatprep.subr.mxu0 %v4448
    %4512 = vmatpush1.msra.mxu0 %v4447
    %4513 = vmatprep.subr.mxu0 %v4450
    %4514 = vmatpush1.msra.mxu0 %v4449
    %4515 = vmatprep.subr.mxu0 %v4452
    %4516 = vmatpush1.msra.mxu0 %v4451
    %4517 = vmatprep.subr.mxu0 %v4454
    %4518 = vmatpush1.msra.mxu0 %v4453
    %4519 = vmatprep.subr.mxu0 %v4456
    %4520 = vmatpush1.msra.mxu0 %v4455
    %4521 = vmatprep.subr.mxu0 %v4458
    %4522 = vmatpush1.msra.mxu0 %v4457
    %4523 = vmatprep.subr.mxu0 %v4460
    %4524 = vmatpush1.msra.mxu0 %v4459
    %4525 = vmatprep.subr.mxu0 %v4462
    %4526 = vmatpush1.msra.mxu0 %v4461
    %4527 = vmatprep.subr.mxu0 %v4464
    %4528 = vmatpush1.msra.mxu0 %v4463
    %4529 = vmatprep.subr.mxu0 %v4466
    %4530 = vmatpush1.msra.mxu0 %v4465
    %4531 = vmatprep.subr.mxu0 %v4468
    %4532 = vmatpush1.msra.mxu0 %v4467
    %4533 = vmatprep.subr.mxu0 %v4470
    %4534 = vmatpush1.msra.mxu0 %v4469
    %4535 = vmatprep.mubr.f32.mxu0 %v4405
    %4536 = vmatmul.mubr.f32.gmra.mrb[0].mxu0 %v4401
    %v4537 = vpop.f32.mrb[0].mxu0
    %v4538 = vadd.f32 0.0, %v4537
    %v4539 = vpop.f32.mrb[0].mxu0
    %v4540 = vadd.f32 0.0, %v4539
    %4541 = vdwg.mxu0
    %4542 = vst [vmem:[#allocation25] sm:$0xf] %v4538
    %s4543 = scalar_lea.vmem [#allocation25], 4
    %4544 = vst [vmem:[%s4543] sm:$0xf] %v4540
    // Predicated region
    $region274: #{tpu_custom_call.1} parent=1 // pred_check
      _
    $region275: #{tpu_custom_call.1} parent=1 // pred_check_branch
      %4546 = sbr.rel (0) target = $region277
    $region276: #{tpu_custom_call.1} parent=1 // pred_region
      %s4548 = ssub.s32 128, 128
      %4549 = vsyncadd [#allocation4], %s4548
      %s4550 = sshll.u32 [#allocation25], 4
      %s4551 = int_to_ptr.vmem [resolvable:$true] %s4550
      %4556 = dma.vmem_to_hbm [thread:$0]  %s4551, 128, %s109, [#allocation4], 64, 64, 4
    $region277: #{tpu_custom_call.1} parent=1 // pred_fallthru
      _
    // Predicated region
    $region278: #{tpu_custom_call.1} parent=1 // pred_check
      _
    $region279: #{tpu_custom_call.1} parent=1 // pred_check_branch
      %4558 = sbr.rel (0) target = $region281
    $region280: #{tpu_custom_call.1} parent=1 // pred_region
      %4559 = dma.done [#allocation4], 128
    $region281: #{tpu_custom_call.1} parent=1 // pred_fallthru
      _
    %4560 = vsyncpa [#allocation3], 1
    %4561 = vsyncpa [#allocation6], 1
    %4562 = vsyncpa [#allocation9], 1
    %4563 = vsyncpa [#allocation12], 1
    %4564 = vsyncpa [#allocation15], 1
    %4565 = vsyncpa [#allocation18], 1
    %4566 = vsyncpa [#allocation21], 1
    %4567 = vsyncpa [#allocation24], 1
    %4568 = vsyncpa [#allocation4], 1

</llo_original>
